<compile_context>
chip_gen: v6e
topology: v6e:2x2x1
jax: 0.10.0
libtpu: 0.0.40
codegen_flags: <defaults>
</compile_context>

<pallas_src>
import functools

import jax
import jax.numpy as jnp
from jax.experimental import pallas as pl
from jax.experimental.pallas import tpu as pltpu


# ------------------------------ fused kernel --------------------------------
def _fused_kernel(x1_ref, x2_ref, wq_ref, bq_ref, wk_ref, bk_ref,
                  wv_ref, bv_ref, u_ref, o_ref, *, cin):
    # Per grid step: one sample.
    x1 = x1_ref[0]          # (Cin, Hp, Wp)  (already zero-padded)
    x2 = x2_ref[0]          # (Cin, Hp, Wp)

    def conv1x1(w_ref, b_ref, x):
        # 1x1 conv on an already zero-padded map, as Cin broadcast-FMAs.
        # (Cin == 3, so an MXU matmul would be almost all pipeline fill.)
        w = w_ref[...]                                      # (Cout, Cin)
        b = b_ref[...]                                      # (Cout, 1)
        out = w[:, 0:1, None] * x[0:1] + b[:, :, None]      # (Cout, Hp, Wp)
        for c in range(1, cin):
            out = out + w[:, c:c + 1, None] * x[c:c + 1]
        return out

    q = conv1x1(wq_ref, bq_ref, x1)                         # (Cout, Hp, Wp)
    k = conv1x1(wk_ref, bk_ref, x2)                         # (Cout, Hp, Wp)
    v = conv1x1(wv_ref, bv_ref, x2)                         # (Cout, Hp, Wp)

    # scores: per head c, q[c] @ k[c].T, scaled by 1/10 (no explicit transpose)
    s = jax.lax.dot_general(
        q, k, dimension_numbers=(((2,), (2,)), ((0,), (0,))),
        preferred_element_type=jnp.float32) * 0.1           # (Cout, Hp, Hp)

    # softmax over the last axis
    m = jnp.max(s, axis=-1, keepdims=True)
    e = jnp.exp(s - m)
    p = e / jnp.sum(e, axis=-1, keepdims=True)

    # dropout(p=0.5), training semantics: keep w.p. 0.5, scale kept by 2.
    keep = u_ref[0] < 0.5                                   # (Cout, Hp, Hp)
    p = jnp.where(keep, p * 2.0, 0.0)

    # @ V
    o_ref[0] = jax.lax.dot_general(
        p, v, dimension_numbers=(((2,), (1,)), ((0,), (0,))),
        preferred_element_type=jnp.float32)                 # (Cout, Hp, Wp)


def _fused_forward(x1p, x2p, wq, bq, wk, bk, wv, bv, u):
    N, Cin, Hp, Wp = x1p.shape
    Cout = wq.shape[0]

    kernel = functools.partial(_fused_kernel, cin=Cin)
    return pl.pallas_call(
        kernel,
        out_shape=jax.ShapeDtypeStruct((N, Cout, Hp, Wp), jnp.float32),
        grid=(N,),
        in_specs=[
            pl.BlockSpec((1, Cin, Hp, Wp), lambda n: (n, 0, 0, 0)),   # x1 (padded)
            pl.BlockSpec((1, Cin, Hp, Wp), lambda n: (n, 0, 0, 0)),   # x2 (padded)
            pl.BlockSpec((Cout, Cin), lambda n: (0, 0)),              # wq
            pl.BlockSpec((Cout, 1), lambda n: (0, 0)),                # bq
            pl.BlockSpec((Cout, Cin), lambda n: (0, 0)),              # wk
            pl.BlockSpec((Cout, 1), lambda n: (0, 0)),                # bk
            pl.BlockSpec((Cout, Cin), lambda n: (0, 0)),              # wv
            pl.BlockSpec((Cout, 1), lambda n: (0, 0)),                # bv
            pl.BlockSpec((1, Cout, Hp, Hp), lambda n: (n, 0, 0, 0)),  # dropout uniforms
        ],
        out_specs=pl.BlockSpec((1, Cout, Hp, Wp), lambda n: (n, 0, 0, 0)),
        compiler_params=pltpu.CompilerParams(
            dimension_semantics=("parallel",),
        ),
    )(x1p, x2p, wq, bq, wk, bk, wv, bv, u)


# --------------------------------- model ------------------------------------
def init_params(key):
    kq_w, kq_b, kk_w, kk_b, kv_w, kv_b = jax.random.split(key, 6)
    params = {
        "w_qs_w": jax.random.normal(kq_w, (8, 3, 1, 1), jnp.float32) * 0.3,
        "w_qs_b": jax.random.normal(kq_b, (8,), jnp.float32) * 0.1,
        "w_ks_w": jax.random.normal(kk_w, (8, 3, 1, 1), jnp.float32) * 0.3,
        "w_ks_b": jax.random.normal(kk_b, (8,), jnp.float32) * 0.1,
        # TODO(synk): original declares Conv2d(8, 8, 1) but feeds a 3-channel
        # tensor; use in_channels=3 so the forward is runnable.
        "v_w": jax.random.normal(kv_w, (8, 3, 1, 1), jnp.float32) * 0.3,
        "v_b": jax.random.normal(kv_b, (8,), jnp.float32) * 0.1,
    }
    return params


@functools.partial(jax.jit, static_argnames=("seed",))
def model_forward(params, x1, x2, seed=0):
    N, Cin, H, W = x1.shape
    Cout = params["w_qs_w"].shape[0]
    Hp, Wp = H + 2, W + 2

    # Spatial zero-padding (padding=1 of the 1x1 convs); border output = bias.
    x1p = jnp.pad(x1, ((0, 0), (0, 0), (1, 1), (1, 1)))
    x2p = jnp.pad(x2, ((0, 0), (0, 0), (1, 1), (1, 1)))

    wq = params["w_qs_w"].reshape(Cout, Cin)
    wk = params["w_ks_w"].reshape(Cout, Cin)
    wv = params["v_w"].reshape(Cout, Cin)
    bq = params["w_qs_b"].reshape(Cout, 1)
    bk = params["w_ks_b"].reshape(Cout, 1)
    bv = params["v_b"].reshape(Cout, 1)

    # Dropout uniforms for the whole (N, heads, Hp, Hp) attention map in one draw.
    u = jax.random.uniform(jax.random.PRNGKey(seed), (N, Cout, Hp, Hp), jnp.float32)

    return _fused_forward(x1p, x2p, wq, bq, wk, bk, wv, bv, u)


if __name__ == "__main__":
    key = jax.random.PRNGKey(0)
    k_params, k_x1, k_x2 = jax.random.split(key, 3)

    N, Cin, H, W = 2, 3, 16, 16  # small shapes consistent with the module
    x1 = jax.random.normal(k_x1, (N, Cin, H, W), jnp.float32)
    x2 = jax.random.normal(k_x2, (N, Cin, H, W), jnp.float32)

    params = init_params(k_params)
    out = model_forward(params, x1, x2, seed=0)
    jax.block_until_ready(out)

    assert out.shape == (N, 8, H + 2, W + 2), out.shape
    assert out.dtype == jnp.float32
    print("KERNEL_OK")
</pallas_src>

<mosaic_0001>
module attributes {stable_mosaic.version = 11 : i64} {
  func.func @_fused_kernel(%arg0: i32, %arg1: memref<1x3x18x18xf32, #tpu.memory_space<vmem>>, %arg2: memref<1x3x18x18xf32, #tpu.memory_space<vmem>>, %arg3: memref<8x3xf32, #tpu.memory_space<vmem>>, %arg4: memref<8x1xf32, #tpu.memory_space<vmem>>, %arg5: memref<8x3xf32, #tpu.memory_space<vmem>>, %arg6: memref<8x1xf32, #tpu.memory_space<vmem>>, %arg7: memref<8x3xf32, #tpu.memory_space<vmem>>, %arg8: memref<8x1xf32, #tpu.memory_space<vmem>>, %arg9: memref<1x8x18x18xf32, #tpu.memory_space<vmem>>, %arg10: memref<1x8x18x18xf32, #tpu.memory_space<vmem>>) attributes {dimension_semantics = [#tpu.dimension_semantics<parallel>], iteration_bounds = array<i64: 2>, scalar_prefetch = 0 : i64, scratch_operands = 0 : i64, tpu.core_type = #tpu.core_type<tc>, window_params = [{transform_indices = @transform_0, window_bounds = array<i64: 1, 3, 18, 18>}, {transform_indices = @transform_1, window_bounds = array<i64: 1, 3, 18, 18>}, {pipeline_mode = #tpu.pipeline_mode<synchronous>, transform_indices = @transform_2, window_bounds = array<i64: 8, 3>}, {pipeline_mode = #tpu.pipeline_mode<synchronous>, transform_indices = @transform_3, window_bounds = array<i64: 8, 1>}, {pipeline_mode = #tpu.pipeline_mode<synchronous>, transform_indices = @transform_4, window_bounds = array<i64: 8, 3>}, {pipeline_mode = #tpu.pipeline_mode<synchronous>, transform_indices = @transform_5, window_bounds = array<i64: 8, 1>}, {pipeline_mode = #tpu.pipeline_mode<synchronous>, transform_indices = @transform_6, window_bounds = array<i64: 8, 3>}, {pipeline_mode = #tpu.pipeline_mode<synchronous>, transform_indices = @transform_7, window_bounds = array<i64: 8, 1>}, {transform_indices = @transform_8, window_bounds = array<i64: 1, 8, 18, 18>}, {transform_indices = @transform_9, window_bounds = array<i64: 1, 8, 18, 18>}]} {
    %c0 = arith.constant 0 : index
    %c0_0 = arith.constant 0 : index
    %c0_1 = arith.constant 0 : index
    %c0_2 = arith.constant 0 : index
    %0 = vector.load %arg1[%c0, %c0_0, %c0_1, %c0_2] : memref<1x3x18x18xf32, #tpu.memory_space<vmem>>, vector<1x3x18x18xf32>
    %1 = vector.shape_cast %0 : vector<1x3x18x18xf32> to vector<3x18x18xf32>
    %c0_3 = arith.constant 0 : index
    %c0_4 = arith.constant 0 : index
    %c0_5 = arith.constant 0 : index
    %c0_6 = arith.constant 0 : index
    %2 = vector.load %arg2[%c0_3, %c0_4, %c0_5, %c0_6] : memref<1x3x18x18xf32, #tpu.memory_space<vmem>>, vector<1x3x18x18xf32>
    %3 = vector.shape_cast %2 : vector<1x3x18x18xf32> to vector<3x18x18xf32>
    %c0_7 = arith.constant 0 : index
    %c0_8 = arith.constant 0 : index
    %4 = vector.load %arg3[%c0_7, %c0_8] : memref<8x3xf32, #tpu.memory_space<vmem>>, vector<8x3xf32>
    %c0_9 = arith.constant 0 : index
    %c0_10 = arith.constant 0 : index
    %5 = vector.load %arg4[%c0_9, %c0_10] : memref<8x1xf32, #tpu.memory_space<vmem>>, vector<8x1xf32>
    %6 = vector.extract_strided_slice %4 {offsets = [0, 0], sizes = [8, 1], strides = [1, 1]} : vector<8x3xf32> to vector<8x1xf32>
    %7 = vector.shape_cast %6 : vector<8x1xf32> to vector<8x1x1xf32>
    %8 = vector.extract_strided_slice %1 {offsets = [0, 0, 0], sizes = [1, 18, 18], strides = [1, 1, 1]} : vector<3x18x18xf32> to vector<1x18x18xf32>
    %9 = vector.broadcast %7 : vector<8x1x1xf32> to vector<8x18x18xf32>
    %10 = vector.broadcast %8 : vector<1x18x18xf32> to vector<8x18x18xf32>
    %11 = arith.mulf %9, %10 : vector<8x18x18xf32>
    %12 = vector.shape_cast %5 : vector<8x1xf32> to vector<8x1x1xf32>
    %13 = vector.broadcast %12 : vector<8x1x1xf32> to vector<8x18x18xf32>
    %14 = arith.addf %11, %13 : vector<8x18x18xf32>
    %15 = vector.extract_strided_slice %4 {offsets = [0, 1], sizes = [8, 1], strides = [1, 1]} : vector<8x3xf32> to vector<8x1xf32>
    %16 = vector.shape_cast %15 : vector<8x1xf32> to vector<8x1x1xf32>
    %17 = vector.extract_strided_slice %1 {offsets = [1, 0, 0], sizes = [1, 18, 18], strides = [1, 1, 1]} : vector<3x18x18xf32> to vector<1x18x18xf32>
    %18 = vector.broadcast %16 : vector<8x1x1xf32> to vector<8x18x18xf32>
    %19 = vector.broadcast %17 : vector<1x18x18xf32> to vector<8x18x18xf32>
    %20 = arith.mulf %18, %19 : vector<8x18x18xf32>
    %21 = arith.addf %14, %20 : vector<8x18x18xf32>
    %22 = vector.extract_strided_slice %4 {offsets = [0, 2], sizes = [8, 1], strides = [1, 1]} : vector<8x3xf32> to vector<8x1xf32>
    %23 = vector.shape_cast %22 : vector<8x1xf32> to vector<8x1x1xf32>
    %24 = vector.extract_strided_slice %1 {offsets = [2, 0, 0], sizes = [1, 18, 18], strides = [1, 1, 1]} : vector<3x18x18xf32> to vector<1x18x18xf32>
    %25 = vector.broadcast %23 : vector<8x1x1xf32> to vector<8x18x18xf32>
    %26 = vector.broadcast %24 : vector<1x18x18xf32> to vector<8x18x18xf32>
    %27 = arith.mulf %25, %26 : vector<8x18x18xf32>
    %28 = arith.addf %21, %27 : vector<8x18x18xf32>
    %c0_11 = arith.constant 0 : index
    %c0_12 = arith.constant 0 : index
    %29 = vector.load %arg5[%c0_11, %c0_12] : memref<8x3xf32, #tpu.memory_space<vmem>>, vector<8x3xf32>
    %c0_13 = arith.constant 0 : index
    %c0_14 = arith.constant 0 : index
    %30 = vector.load %arg6[%c0_13, %c0_14] : memref<8x1xf32, #tpu.memory_space<vmem>>, vector<8x1xf32>
    %31 = vector.extract_strided_slice %29 {offsets = [0, 0], sizes = [8, 1], strides = [1, 1]} : vector<8x3xf32> to vector<8x1xf32>
    %32 = vector.shape_cast %31 : vector<8x1xf32> to vector<8x1x1xf32>
    %33 = vector.extract_strided_slice %3 {offsets = [0, 0, 0], sizes = [1, 18, 18], strides = [1, 1, 1]} : vector<3x18x18xf32> to vector<1x18x18xf32>
    %34 = vector.broadcast %32 : vector<8x1x1xf32> to vector<8x18x18xf32>
    %35 = vector.broadcast %33 : vector<1x18x18xf32> to vector<8x18x18xf32>
    %36 = arith.mulf %34, %35 : vector<8x18x18xf32>
    %37 = vector.shape_cast %30 : vector<8x1xf32> to vector<8x1x1xf32>
    %38 = vector.broadcast %37 : vector<8x1x1xf32> to vector<8x18x18xf32>
    %39 = arith.addf %36, %38 : vector<8x18x18xf32>
    %40 = vector.extract_strided_slice %29 {offsets = [0, 1], sizes = [8, 1], strides = [1, 1]} : vector<8x3xf32> to vector<8x1xf32>
    %41 = vector.shape_cast %40 : vector<8x1xf32> to vector<8x1x1xf32>
    %42 = vector.extract_strided_slice %3 {offsets = [1, 0, 0], sizes = [1, 18, 18], strides = [1, 1, 1]} : vector<3x18x18xf32> to vector<1x18x18xf32>
    %43 = vector.broadcast %41 : vector<8x1x1xf32> to vector<8x18x18xf32>
    %44 = vector.broadcast %42 : vector<1x18x18xf32> to vector<8x18x18xf32>
    %45 = arith.mulf %43, %44 : vector<8x18x18xf32>
    %46 = arith.addf %39, %45 : vector<8x18x18xf32>
    %47 = vector.extract_strided_slice %29 {offsets = [0, 2], sizes = [8, 1], strides = [1, 1]} : vector<8x3xf32> to vector<8x1xf32>
    %48 = vector.shape_cast %47 : vector<8x1xf32> to vector<8x1x1xf32>
    %49 = vector.extract_strided_slice %3 {offsets = [2, 0, 0], sizes = [1, 18, 18], strides = [1, 1, 1]} : vector<3x18x18xf32> to vector<1x18x18xf32>
    %50 = vector.broadcast %48 : vector<8x1x1xf32> to vector<8x18x18xf32>
    %51 = vector.broadcast %49 : vector<1x18x18xf32> to vector<8x18x18xf32>
    %52 = arith.mulf %50, %51 : vector<8x18x18xf32>
    %53 = arith.addf %46, %52 : vector<8x18x18xf32>
    %c0_15 = arith.constant 0 : index
    %c0_16 = arith.constant 0 : index
    %54 = vector.load %arg7[%c0_15, %c0_16] : memref<8x3xf32, #tpu.memory_space<vmem>>, vector<8x3xf32>
    %c0_17 = arith.constant 0 : index
    %c0_18 = arith.constant 0 : index
    %55 = vector.load %arg8[%c0_17, %c0_18] : memref<8x1xf32, #tpu.memory_space<vmem>>, vector<8x1xf32>
    %56 = vector.extract_strided_slice %54 {offsets = [0, 0], sizes = [8, 1], strides = [1, 1]} : vector<8x3xf32> to vector<8x1xf32>
    %57 = vector.shape_cast %56 : vector<8x1xf32> to vector<8x1x1xf32>
    %58 = vector.extract_strided_slice %3 {offsets = [0, 0, 0], sizes = [1, 18, 18], strides = [1, 1, 1]} : vector<3x18x18xf32> to vector<1x18x18xf32>
    %59 = vector.broadcast %57 : vector<8x1x1xf32> to vector<8x18x18xf32>
    %60 = vector.broadcast %58 : vector<1x18x18xf32> to vector<8x18x18xf32>
    %61 = arith.mulf %59, %60 : vector<8x18x18xf32>
    %62 = vector.shape_cast %55 : vector<8x1xf32> to vector<8x1x1xf32>
    %63 = vector.broadcast %62 : vector<8x1x1xf32> to vector<8x18x18xf32>
    %64 = arith.addf %61, %63 : vector<8x18x18xf32>
    %65 = vector.extract_strided_slice %54 {offsets = [0, 1], sizes = [8, 1], strides = [1, 1]} : vector<8x3xf32> to vector<8x1xf32>
    %66 = vector.shape_cast %65 : vector<8x1xf32> to vector<8x1x1xf32>
    %67 = vector.extract_strided_slice %3 {offsets = [1, 0, 0], sizes = [1, 18, 18], strides = [1, 1, 1]} : vector<3x18x18xf32> to vector<1x18x18xf32>
    %68 = vector.broadcast %66 : vector<8x1x1xf32> to vector<8x18x18xf32>
    %69 = vector.broadcast %67 : vector<1x18x18xf32> to vector<8x18x18xf32>
    %70 = arith.mulf %68, %69 : vector<8x18x18xf32>
    %71 = arith.addf %64, %70 : vector<8x18x18xf32>
    %72 = vector.extract_strided_slice %54 {offsets = [0, 2], sizes = [8, 1], strides = [1, 1]} : vector<8x3xf32> to vector<8x1xf32>
    %73 = vector.shape_cast %72 : vector<8x1xf32> to vector<8x1x1xf32>
    %74 = vector.extract_strided_slice %3 {offsets = [2, 0, 0], sizes = [1, 18, 18], strides = [1, 1, 1]} : vector<3x18x18xf32> to vector<1x18x18xf32>
    %75 = vector.broadcast %73 : vector<8x1x1xf32> to vector<8x18x18xf32>
    %76 = vector.broadcast %74 : vector<1x18x18xf32> to vector<8x18x18xf32>
    %77 = arith.mulf %75, %76 : vector<8x18x18xf32>
    %78 = arith.addf %71, %77 : vector<8x18x18xf32>
    %cst = arith.constant dense<0.000000e+00> : vector<8x18x18xf32>
    %79 = tpu.matmul %28, %53, %cst {dimension_numbers = #tpu.dot_dimension_numbers<[2], [2], [1], [1], [0, 0, 0, 1, 1, 1], [0], [0]>} : vector<8x18x18xf32>, vector<8x18x18xf32>, vector<8x18x18xf32> -> vector<8x18x18xf32>
    %cst_19 = arith.constant 1.000000e-01 : f32
    %80 = vector.broadcast %cst_19 : f32 to vector<8x18x18xf32>
    %81 = arith.mulf %79, %80 : vector<8x18x18xf32>
    %cst_20 = arith.constant dense<0xFF800000> : vector<8x18xf32>
    %82 = vector.multi_reduction <maximumf>, %81, %cst_20 [2] : vector<8x18x18xf32> to vector<8x18xf32>
    %83 = vector.shape_cast %82 : vector<8x18xf32> to vector<8x18x1xf32>
    %84 = vector.broadcast %83 : vector<8x18x1xf32> to vector<8x18x18xf32>
    %85 = arith.subf %81, %84 : vector<8x18x18xf32>
    %86 = math.exp %85 : vector<8x18x18xf32>
    %cst_21 = arith.constant dense<0.000000e+00> : vector<8x18xf32>
    %87 = vector.multi_reduction <add>, %86, %cst_21 [2] : vector<8x18x18xf32> to vector<8x18xf32>
    %88 = vector.shape_cast %87 : vector<8x18xf32> to vector<8x18x1xf32>
    %89 = vector.broadcast %88 : vector<8x18x1xf32> to vector<8x18x18xf32>
    %90 = arith.divf %86, %89 : vector<8x18x18xf32>
    %c0_22 = arith.constant 0 : index
    %c0_23 = arith.constant 0 : index
    %c0_24 = arith.constant 0 : index
    %c0_25 = arith.constant 0 : index
    %91 = vector.load %arg9[%c0_22, %c0_23, %c0_24, %c0_25] : memref<1x8x18x18xf32, #tpu.memory_space<vmem>>, vector<1x8x18x18xf32>
    %92 = vector.shape_cast %91 : vector<1x8x18x18xf32> to vector<8x18x18xf32>
    %cst_26 = arith.constant 5.000000e-01 : f32
    %93 = vector.broadcast %cst_26 : f32 to vector<8x18x18xf32>
    %94 = arith.cmpf olt, %92, %93 : vector<8x18x18xf32>
    %cst_27 = arith.constant 2.000000e+00 : f32
    %95 = vector.broadcast %cst_27 : f32 to vector<8x18x18xf32>
    %96 = arith.mulf %90, %95 : vector<8x18x18xf32>
    %cst_28 = arith.constant 0.000000e+00 : f32
    %97 = vector.broadcast %cst_28 : f32 to vector<8x18x18xf32>
    %98 = arith.select %94, %96, %97 : vector<8x18x18xi1>, vector<8x18x18xf32>
    %cst_29 = arith.constant dense<0.000000e+00> : vector<8x18x18xf32>
    %99 = tpu.matmul %98, %78, %cst_29 {dimension_numbers = #tpu.dot_dimension_numbers<[2], [1], [1], [2], [0, 0, 0, 1, 1, 2], [0], [0]>} : vector<8x18x18xf32>, vector<8x18x18xf32>, vector<8x18x18xf32> -> vector<8x18x18xf32>
    %c0_30 = arith.constant 0 : index
    %c0_31 = arith.constant 0 : index
    %c0_32 = arith.constant 0 : index
    %c0_33 = arith.constant 0 : index
    %100 = vector.load %arg10[%c0_30, %c0_31, %c0_32, %c0_33] : memref<1x8x18x18xf32, #tpu.memory_space<vmem>>, vector<1x8x18x18xf32>
    %101 = vector.shape_cast %100 : vector<1x8x18x18xf32> to vector<8x18x18xf32>
    %102 = vector.shape_cast %99 : vector<8x18x18xf32> to vector<1x8x18x18xf32>
    tpu.vector_store %arg10[%c0_30, %c0_31, %c0_32, %c0_33], %102 {strides = array<i32>} : memref<1x8x18x18xf32, #tpu.memory_space<vmem>>, vector<1x8x18x18xf32>,
    return
  }
  func.func @transform_0(%arg0: i32) -> (i32, i32, i32, i32) {
    %c0_i32 = arith.constant 0 : i32
    %c0_i32_0 = arith.constant 0 : i32
    %c0_i32_1 = arith.constant 0 : i32
    %c0_i32_2 = arith.constant 0 : i32
    return %arg0, %c0_i32, %c0_i32_0, %c0_i32_1 : i32, i32, i32, i32
  }
  func.func @transform_1(%arg0: i32) -> (i32, i32, i32, i32) {
    %c0_i32 = arith.constant 0 : i32
    %c0_i32_0 = arith.constant 0 : i32
    %c0_i32_1 = arith.constant 0 : i32
    %c0_i32_2 = arith.constant 0 : i32
    return %arg0, %c0_i32, %c0_i32_0, %c0_i32_1 : i32, i32, i32, i32
  }
  func.func @transform_2(%arg0: i32) -> (i32, i32) {
    %c0_i32 = arith.constant 0 : i32
    %c0_i32_0 = arith.constant 0 : i32
    %c0_i32_1 = arith.constant 0 : i32
    return %c0_i32, %c0_i32_0 : i32, i32
  }
  func.func @transform_3(%arg0: i32) -> (i32, i32) {
    %c0_i32 = arith.constant 0 : i32
    %c0_i32_0 = arith.constant 0 : i32
    %c0_i32_1 = arith.constant 0 : i32
    return %c0_i32, %c0_i32_0 : i32, i32
  }
  func.func @transform_4(%arg0: i32) -> (i32, i32) {
    %c0_i32 = arith.constant 0 : i32
    %c0_i32_0 = arith.constant 0 : i32
    %c0_i32_1 = arith.constant 0 : i32
    return %c0_i32, %c0_i32_0 : i32, i32
  }
  func.func @transform_5(%arg0: i32) -> (i32, i32) {
    %c0_i32 = arith.constant 0 : i32
    %c0_i32_0 = arith.constant 0 : i32
    %c0_i32_1 = arith.constant 0 : i32
    return %c0_i32, %c0_i32_0 : i32, i32
  }
  func.func @transform_6(%arg0: i32) -> (i32, i32) {
    %c0_i32 = arith.constant 0 : i32
    %c0_i32_0 = arith.constant 0 : i32
    %c0_i32_1 = arith.constant 0 : i32
    return %c0_i32, %c0_i32_0 : i32, i32
  }
  func.func @transform_7(%arg0: i32) -> (i32, i32) {
    %c0_i32 = arith.constant 0 : i32
    %c0_i32_0 = arith.constant 0 : i32
    %c0_i32_1 = arith.constant 0 : i32
    return %c0_i32, %c0_i32_0 : i32, i32
  }
  func.func @transform_8(%arg0: i32) -> (i32, i32, i32, i32) {
    %c0_i32 = arith.constant 0 : i32
    %c0_i32_0 = arith.constant 0 : i32
    %c0_i32_1 = arith.constant 0 : i32
    %c0_i32_2 = arith.constant 0 : i32
    return %arg0, %c0_i32, %c0_i32_0, %c0_i32_1 : i32, i32, i32, i32
  }
  func.func @transform_9(%arg0: i32) -> (i32, i32, i32, i32) {
    %c0_i32 = arith.constant 0 : i32
    %c0_i32_0 = arith.constant 0 : i32
    %c0_i32_1 = arith.constant 0 : i32
    %c0_i32_2 = arith.constant 0 : i32
    return %arg0, %c0_i32, %c0_i32_0, %c0_i32_1 : i32, i32, i32, i32
  }
}

</mosaic_0001>

<llo_original>
// kernel: model_forward.1
$region0: #{model_forward.1}
  #allocation0 [shape = 'u32[]', space=smem, size = 0x4, offset = 0x4, fixed_abs, tag = 'smem constant byte address 0x4 - core index']
  #allocation1 [shape = 'u32[144,128]{1,0:T(1,128)}', space=vmem, size = 0x12000, scoped, tag = 'internal scratch']
  %s0 = inlined_call_operand.vmem [shape: f32[2,3,18,18], index: 0, kind: input, shape index: {}]
  %s1 = inlined_call_operand.vmem [shape: f32[2,3,18,18], index: 1, kind: input, shape index: {}]
  %s2 = inlined_call_operand.vmem [shape: f32[8,3], index: 2, kind: input, shape index: {}]
  %s3 = inlined_call_operand.vmem [shape: f32[8,1], index: 3, kind: input, shape index: {}]
  %s4 = inlined_call_operand.vmem [shape: f32[8,3], index: 4, kind: input, shape index: {}]
  %s5 = inlined_call_operand.vmem [shape: f32[8,1], index: 5, kind: input, shape index: {}]
  %s6 = inlined_call_operand.vmem [shape: f32[8,3], index: 6, kind: input, shape index: {}]
  %s7 = inlined_call_operand.vmem [shape: f32[8,1], index: 7, kind: input, shape index: {}]
  %s8 = inlined_call_operand.vmem [shape: f32[2,8,18,18], index: 8, kind: input, shape index: {}]
  %s9 = inlined_call_operand.vmem [shape: f32[2,8,18,18], index: 9, kind: output, shape index: {}]
  %s10 = sld [smem:[#allocation0]]
  $region69: #{model_forward.1} parent=0
    _
  %s12 = ssub.s32 1, %s10
  %s13 = scalar_select 0, %s12, %s10
  loop: start=0, step=1, limit=4
  $region2: #{model_forward.1} parent=0 // loop_pre_header
    _
  $region3: #{model_forward.1} parent=0 // loop_header
    %s15 = sphi 0, %s19
    %p16 = scmp.ge.s32.totalorder %s15, 4
    %s25 = sphi 0, %s27
    %s28 = sphi 0, %s25
    %s29 = sphi 0, %s28
    %s45 = sphi 0, %s29
    %s51 = sphi 0, %s53
    %s54 = sphi 0, %s51
    %s55 = sphi 0, %s54
    %s71 = sphi 0, %s55
    %s75 = sphi 0, %s75
    %s77 = sphi 0, %s75
    %s78 = sphi 0, %s77
    %s92 = sphi 0, %s78
    %s96 = sphi 0, %s96
    %s98 = sphi 0, %s96
    %s99 = sphi 0, %s98
    %s113 = sphi 0, %s99
    %s117 = sphi 0, %s117
    %s119 = sphi 0, %s117
    %s120 = sphi 0, %s119
    %s134 = sphi 0, %s120
    %s138 = sphi 0, %s138
    %s140 = sphi 0, %s138
    %s141 = sphi 0, %s140
    %s155 = sphi 0, %s141
    %s159 = sphi 0, %s159
    %s161 = sphi 0, %s159
    %s162 = sphi 0, %s161
    %s176 = sphi 0, %s162
    %s180 = sphi 0, %s180
    %s182 = sphi 0, %s180
    %s183 = sphi 0, %s182
    %s197 = sphi 0, %s183
    %s203 = sphi 0, %s205
    %s206 = sphi 0, %s203
    %s207 = sphi 0, %s206
    %s223 = sphi 0, %s207
    %s229 = sphi 0, %s231
    %s232 = sphi 0, %s229
    %s233 = sphi 0, %s232
    %s249 = sphi 0, %s233
  $region4: #{model_forward.1} parent=0 // loop_header_branch
    %18 = sbr.rel (%p16) target = $region8
  $region5: #{model_forward.1} parent=0 // loop_body
    %s20 = ssub.s32 %s15, 1
    %s21 = ssub.s32 %s15, 2
    %s22 = sadd.s32 %s15, 1
    %s23 = ssub.s32 %s15, %s22
    %p24 = scmp.eq.s32.totalorder %s23, 0
    %s26 = sadd.s32 %s25, 1
    %s27 = scalar_select %p24, %s25, %s26
    %p30 = pneg %p24
    %p31 = scmp.eq.s32.totalorder %s15, 1
    %p32 = por %p30, %p31
    %p33 = scmp.ne.s32.totalorder %s25, %s28
    %p34 = scmp.eq.s32.totalorder %s15, 0
    %p35 = por %p33, %p34
    %p36 = scmp.ne.s32.totalorder %s25, %s28
    %p37 = scmp.eq.s32.totalorder %s20, 1
    %p38 = por %p36, %p37
    %p39 = scmp.ne.s32.totalorder %s28, %s29
    %p40 = scmp.eq.s32.totalorder %s20, 0
    %p41 = por %p39, %p40
    %p42 = scmp.ne.s32.totalorder %s28, %s29
    %p43 = scmp.eq.s32.totalorder %s21, 1
    %p44 = por %p42, %p43
    %p46 = scmp.ne.s32.totalorder %s29, %s45
    %p47 = scmp.eq.s32.totalorder %s21, 0
    %p48 = por %p46, %p47
    %s49 = ssub.s32 %s15, %s22
    %p50 = scmp.eq.s32.totalorder %s49, 0
    %s52 = sadd.s32 %s51, 1
    %s53 = scalar_select %p50, %s51, %s52
    %p56 = pneg %p50
    %p57 = scmp.eq.s32.totalorder %s15, 1
    %p58 = por %p56, %p57
    %p59 = scmp.ne.s32.totalorder %s51, %s54
    %p60 = scmp.eq.s32.totalorder %s15, 0
    %p61 = por %p59, %p60
    %p62 = scmp.ne.s32.totalorder %s51, %s54
    %p63 = scmp.eq.s32.totalorder %s20, 1
    %p64 = por %p62, %p63
    %p65 = scmp.ne.s32.totalorder %s54, %s55
    %p66 = scmp.eq.s32.totalorder %s20, 0
    %p67 = por %p65, %p66
    %p68 = scmp.ne.s32.totalorder %s54, %s55
    %p69 = scmp.eq.s32.totalorder %s21, 1
    %p70 = por %p68, %p69
    %p72 = scmp.ne.s32.totalorder %s55, %s71
    %p73 = scmp.eq.s32.totalorder %s21, 0
    %p74 = por %p72, %p73
    %s76 = sadd.s32 %s75, 1
    %p79 = scmp.eq.s32.totalorder %s15, 1
    %p80 = scmp.ne.s32.totalorder %s75, %s77
    %p81 = scmp.eq.s32.totalorder %s15, 0
    %p82 = por %p80, %p81
    %p83 = scmp.ne.s32.totalorder %s75, %s77
    %p84 = scmp.eq.s32.totalorder %s20, 1
    %p85 = por %p83, %p84
    %p86 = scmp.ne.s32.totalorder %s77, %s78
    %p87 = scmp.eq.s32.totalorder %s20, 0
    %p88 = por %p86, %p87
    %p89 = scmp.ne.s32.totalorder %s77, %s78
    %p90 = scmp.eq.s32.totalorder %s21, 1
    %p91 = por %p89, %p90
    %p93 = scmp.ne.s32.totalorder %s78, %s92
    %p94 = scmp.eq.s32.totalorder %s21, 0
    %p95 = por %p93, %p94
    %s97 = sadd.s32 %s96, 1
    %p100 = scmp.eq.s32.totalorder %s15, 1
    %p101 = scmp.ne.s32.totalorder %s96, %s98
    %p102 = scmp.eq.s32.totalorder %s15, 0
    %p103 = por %p101, %p102
    %p104 = scmp.ne.s32.totalorder %s96, %s98
    %p105 = scmp.eq.s32.totalorder %s20, 1
    %p106 = por %p104, %p105
    %p107 = scmp.ne.s32.totalorder %s98, %s99
    %p108 = scmp.eq.s32.totalorder %s20, 0
    %p109 = por %p107, %p108
    %p110 = scmp.ne.s32.totalorder %s98, %s99
    %p111 = scmp.eq.s32.totalorder %s21, 1
    %p112 = por %p110, %p111
    %p114 = scmp.ne.s32.totalorder %s99, %s113
    %p115 = scmp.eq.s32.totalorder %s21, 0
    %p116 = por %p114, %p115
    %s118 = sadd.s32 %s117, 1
    %p121 = scmp.eq.s32.totalorder %s15, 1
    %p122 = scmp.ne.s32.totalorder %s117, %s119
    %p123 = scmp.eq.s32.totalorder %s15, 0
    %p124 = por %p122, %p123
    %p125 = scmp.ne.s32.totalorder %s117, %s119
    %p126 = scmp.eq.s32.totalorder %s20, 1
    %p127 = por %p125, %p126
    %p128 = scmp.ne.s32.totalorder %s119, %s120
    %p129 = scmp.eq.s32.totalorder %s20, 0
    %p130 = por %p128, %p129
    %p131 = scmp.ne.s32.totalorder %s119, %s120
    %p132 = scmp.eq.s32.totalorder %s21, 1
    %p133 = por %p131, %p132
    %p135 = scmp.ne.s32.totalorder %s120, %s134
    %p136 = scmp.eq.s32.totalorder %s21, 0
    %p137 = por %p135, %p136
    %s139 = sadd.s32 %s138, 1
    %p142 = scmp.eq.s32.totalorder %s15, 1
    %p143 = scmp.ne.s32.totalorder %s138, %s140
    %p144 = scmp.eq.s32.totalorder %s15, 0
    %p145 = por %p143, %p144
    %p146 = scmp.ne.s32.totalorder %s138, %s140
    %p147 = scmp.eq.s32.totalorder %s20, 1
    %p148 = por %p146, %p147
    %p149 = scmp.ne.s32.totalorder %s140, %s141
    %p150 = scmp.eq.s32.totalorder %s20, 0
    %p151 = por %p149, %p150
    %p152 = scmp.ne.s32.totalorder %s140, %s141
    %p153 = scmp.eq.s32.totalorder %s21, 1
    %p154 = por %p152, %p153
    %p156 = scmp.ne.s32.totalorder %s141, %s155
    %p157 = scmp.eq.s32.totalorder %s21, 0
    %p158 = por %p156, %p157
    %s160 = sadd.s32 %s159, 1
    %p163 = scmp.eq.s32.totalorder %s15, 1
    %p164 = scmp.ne.s32.totalorder %s159, %s161
    %p165 = scmp.eq.s32.totalorder %s15, 0
    %p166 = por %p164, %p165
    %p167 = scmp.ne.s32.totalorder %s159, %s161
    %p168 = scmp.eq.s32.totalorder %s20, 1
    %p169 = por %p167, %p168
    %p170 = scmp.ne.s32.totalorder %s161, %s162
    %p171 = scmp.eq.s32.totalorder %s20, 0
    %p172 = por %p170, %p171
    %p173 = scmp.ne.s32.totalorder %s161, %s162
    %p174 = scmp.eq.s32.totalorder %s21, 1
    %p175 = por %p173, %p174
    %p177 = scmp.ne.s32.totalorder %s162, %s176
    %p178 = scmp.eq.s32.totalorder %s21, 0
    %p179 = por %p177, %p178
    %s181 = sadd.s32 %s180, 1
    %p184 = scmp.eq.s32.totalorder %s15, 1
    %p185 = scmp.ne.s32.totalorder %s180, %s182
    %p186 = scmp.eq.s32.totalorder %s15, 0
    %p187 = por %p185, %p186
    %p188 = scmp.ne.s32.totalorder %s180, %s182
    %p189 = scmp.eq.s32.totalorder %s20, 1
    %p190 = por %p188, %p189
    %p191 = scmp.ne.s32.totalorder %s182, %s183
    %p192 = scmp.eq.s32.totalorder %s20, 0
    %p193 = por %p191, %p192
    %p194 = scmp.ne.s32.totalorder %s182, %s183
    %p195 = scmp.eq.s32.totalorder %s21, 1
    %p196 = por %p194, %p195
    %p198 = scmp.ne.s32.totalorder %s183, %s197
    %p199 = scmp.eq.s32.totalorder %s21, 0
    %p200 = por %p198, %p199
    %s201 = ssub.s32 %s15, %s22
    %p202 = scmp.eq.s32.totalorder %s201, 0
    %s204 = sadd.s32 %s203, 1
    %s205 = scalar_select %p202, %s203, %s204
    %p208 = pneg %p202
    %p209 = scmp.eq.s32.totalorder %s15, 1
    %p210 = por %p208, %p209
    %p211 = scmp.ne.s32.totalorder %s203, %s206
    %p212 = scmp.eq.s32.totalorder %s15, 0
    %p213 = por %p211, %p212
    %p214 = scmp.ne.s32.totalorder %s203, %s206
    %p215 = scmp.eq.s32.totalorder %s20, 1
    %p216 = por %p214, %p215
    %p217 = scmp.ne.s32.totalorder %s206, %s207
    %p218 = scmp.eq.s32.totalorder %s20, 0
    %p219 = por %p217, %p218
    %p220 = scmp.ne.s32.totalorder %s206, %s207
    %p221 = scmp.eq.s32.totalorder %s21, 1
    %p222 = por %p220, %p221
    %p224 = scmp.ne.s32.totalorder %s207, %s223
    %p225 = scmp.eq.s32.totalorder %s21, 0
    %p226 = por %p224, %p225
    %s227 = ssub.s32 %s15, %s22
    %p228 = scmp.eq.s32.totalorder %s227, 0
    %s230 = sadd.s32 %s229, 1
    %s231 = scalar_select %p228, %s229, %s230
    %p234 = pneg %p228
    %p235 = scmp.eq.s32.totalorder %s15, 1
    %p236 = por %p234, %p235
    %p237 = scmp.ne.s32.totalorder %s229, %s232
    %p238 = scmp.eq.s32.totalorder %s15, 0
    %p239 = por %p237, %p238
    %p240 = scmp.ne.s32.totalorder %s229, %s232
    %p241 = scmp.eq.s32.totalorder %s20, 1
    %p242 = por %p240, %p241
    %p243 = scmp.ne.s32.totalorder %s232, %s233
    %p244 = scmp.eq.s32.totalorder %s20, 0
    %p245 = por %p243, %p244
    %p246 = scmp.ne.s32.totalorder %s232, %s233
    %p247 = scmp.eq.s32.totalorder %s21, 1
    %p248 = por %p246, %p247
    %p250 = scmp.ne.s32.totalorder %s233, %s249
    %p251 = scmp.eq.s32.totalorder %s21, 0
    %p252 = por %p250, %p251
    %p253 = scmp.le.s32.totalorder 1, %s15
    %p254 = scmp.lt.s32.totalorder %s15, 3
    %p255 = pnand %p253, %p254
    %p256 = pneg %p255
    // Predicated region
    $region9: #{model_forward.1} parent=5 // pred_check
      _
    $region10: #{model_forward.1} parent=5 // pred_check_branch
      %258 = sbr.rel (%p255) target = $region12
    $region11: #{model_forward.1} parent=5 // pred_region
      %s259 = ssub.s32 %s15, 1
      // Predicated region
      $region13: #{model_forward.1} parent=11 // pred_check
        %p260 = pneg %p88
      $region14: #{model_forward.1} parent=11 // pred_check_branch
        %262 = sbr.rel (%p260) target = $region16
      $region15: #{model_forward.1} parent=11 // pred_region
        _
      $region16: #{model_forward.1} parent=11 // pred_fallthru
        _
      // Predicated region
      $region17: #{model_forward.1} parent=11 // pred_check
        %p263 = pneg %p109
      $region18: #{model_forward.1} parent=11 // pred_check_branch
        %265 = sbr.rel (%p263) target = $region20
      $region19: #{model_forward.1} parent=11 // pred_region
        _
      $region20: #{model_forward.1} parent=11 // pred_fallthru
        _
      // Predicated region
      $region21: #{model_forward.1} parent=11 // pred_check
        %p266 = pneg %p130
      $region22: #{model_forward.1} parent=11 // pred_check_branch
        %268 = sbr.rel (%p266) target = $region24
      $region23: #{model_forward.1} parent=11 // pred_region
        _
      $region24: #{model_forward.1} parent=11 // pred_fallthru
        _
      // Predicated region
      $region25: #{model_forward.1} parent=11 // pred_check
        %p269 = pneg %p151
      $region26: #{model_forward.1} parent=11 // pred_check_branch
        %271 = sbr.rel (%p269) target = $region28
      $region27: #{model_forward.1} parent=11 // pred_region
        _
      $region28: #{model_forward.1} parent=11 // pred_fallthru
        _
      // Predicated region
      $region29: #{model_forward.1} parent=11 // pred_check
        %p272 = pneg %p172
      $region30: #{model_forward.1} parent=11 // pred_check_branch
        %274 = sbr.rel (%p272) target = $region32
      $region31: #{model_forward.1} parent=11 // pred_region
        _
      $region32: #{model_forward.1} parent=11 // pred_fallthru
        _
      // Predicated region
      $region33: #{model_forward.1} parent=11 // pred_check
        %p275 = pneg %p193
      $region34: #{model_forward.1} parent=11 // pred_check_branch
        %277 = sbr.rel (%p275) target = $region36
      $region35: #{model_forward.1} parent=11 // pred_region
        _
      $region36: #{model_forward.1} parent=11 // pred_fallthru
        _
    $region12: #{model_forward.1} parent=5 // pred_fallthru
      _
    %p278 = scmp.lt.s32.totalorder %s15, 2
    // Predicated region
    $region37: #{model_forward.1} parent=5 // pred_check
      %p279 = pneg %p278
    $region38: #{model_forward.1} parent=5 // pred_check_branch
      %281 = sbr.rel (%p279) target = $region40
    $region39: #{model_forward.1} parent=5 // pred_region
      // Predicated region
      $region41: #{model_forward.1} parent=39 // pred_check
        %p282 = pneg %p35
      $region42: #{model_forward.1} parent=39 // pred_check_branch
        %284 = sbr.rel (%p282) target = $region44
      $region43: #{model_forward.1} parent=39 // pred_region
        %p285 = scmp.lt.s32.totalorder %s15, 1
        %s286 = scalar_select %p285, %s15, 1
        %s287 = smul.addr %s286, 9
        %s288 = smul.addr %s287, 8
        %s289 = scalar_lea.vmem %s0, %s288
      $region44: #{model_forward.1} parent=39 // pred_fallthru
        _
      // Predicated region
      $region45: #{model_forward.1} parent=39 // pred_check
        %p290 = pneg %p61
      $region46: #{model_forward.1} parent=39 // pred_check_branch
        %292 = sbr.rel (%p290) target = $region48
      $region47: #{model_forward.1} parent=39 // pred_region
        %p293 = scmp.lt.s32.totalorder %s15, 1
        %s294 = scalar_select %p293, %s15, 1
        %s295 = smul.addr %s294, 9
        %s296 = smul.addr %s295, 8
        %s297 = scalar_lea.vmem %s1, %s296
      $region48: #{model_forward.1} parent=39 // pred_fallthru
        _
      // Predicated region
      $region49: #{model_forward.1} parent=39 // pred_check
        %p298 = pneg %p213
      $region50: #{model_forward.1} parent=39 // pred_check_branch
        %300 = sbr.rel (%p298) target = $region52
      $region51: #{model_forward.1} parent=39 // pred_region
        %p301 = scmp.lt.s32.totalorder %s15, 1
        %s302 = scalar_select %p301, %s15, 1
        %s303 = smul.addr %s302, 24
        %s304 = smul.addr %s303, 8
        %s305 = scalar_lea.vmem %s8, %s304
      $region52: #{model_forward.1} parent=39 // pred_fallthru
        _
    $region40: #{model_forward.1} parent=5 // pred_fallthru
      _
    %p306 = scmp.le.s32.totalorder 1, %s15
    %p307 = scmp.lt.s32.totalorder %s15, 3
    %p308 = pnand %p306, %p307
    %p309 = pneg %p308
    // Predicated region
    $region53: #{model_forward.1} parent=5 // pred_check
      _
    $region54: #{model_forward.1} parent=5 // pred_check_branch
      %311 = sbr.rel (%p308) target = $region56
    $region55: #{model_forward.1} parent=5 // pred_region
      %s312 = ssub.s32 %s15, 1
      %p313 = scmp.lt.s32.totalorder %s20, 1
      %s314 = scalar_select %p313, %s20, 1
      %s315 = smul.addr %s314, 9
      %s316 = smul.addr %s315, 8
      %s317 = scalar_lea.vmem %s0, %s316
      %p318 = pneg %p41
      %p319 = pneg %p38
      %p320 = scmp.lt.s32.totalorder %s20, 1
      %s321 = scalar_select %p320, %s20, 1
      %s322 = smul.addr %s321, 9
      %s323 = smul.addr %s322, 8
      %s324 = scalar_lea.vmem %s1, %s323
      %p325 = pneg %p67
      %p326 = pneg %p64
      %p327 = pneg %p88
      %p328 = pneg %p85
      %p329 = pneg %p109
      %p330 = pneg %p106
      %p331 = pneg %p130
      %p332 = pneg %p127
      %p333 = pneg %p151
      %p334 = pneg %p148
      %p335 = pneg %p172
      %p336 = pneg %p169
      %p337 = pneg %p193
      %p338 = pneg %p190
      %p339 = scmp.lt.s32.totalorder %s20, 1
      %s340 = scalar_select %p339, %s20, 1
      %s341 = smul.addr %s340, 24
      %s342 = smul.addr %s341, 8
      %s343 = scalar_lea.vmem %s8, %s342
      %p344 = pneg %p219
      %p345 = pneg %p216
      %p346 = pneg %p245
      %p347 = pneg %p242
      %p348 = scmp.lt.s32.totalorder %s20, 1
      %s349 = scalar_select %p348, %s20, 1
      %s350 = smul.addr %s349, 24
      %s351 = smul.addr %s350, 8
      %s352 = scalar_lea.vmem %s9, %s351
      %p353 = scmp.lt.s32.totalorder %s20, 1
      %s354 = scalar_select %p353, %s20, 1
      %s355 = smul.addr %s354, 9
      %s356 = smul.addr %s355, 8
      %s357 = scalar_lea.vmem %s0, %s356
      %p358 = scmp.lt.s32.totalorder %s20, 1
      %s359 = scalar_select %p358, %s20, 1
      %s360 = smul.addr %s359, 9
      %s361 = smul.addr %s360, 8
      %s362 = scalar_lea.vmem %s1, %s361
      %p363 = scmp.lt.s32.totalorder %s20, 1
      %s364 = scalar_select %p363, %s20, 1
      %s365 = smul.addr %s364, 24
      %s366 = smul.addr %s365, 8
      %s367 = scalar_lea.vmem %s8, %s366
      %p368 = scmp.lt.s32.totalorder %s20, 1
      %s369 = scalar_select %p368, %s20, 1
      %s370 = smul.addr %s369, 24
      %s371 = smul.addr %s370, 8
      %s372 = scalar_lea.vmem %s9, %s371
      %v373 = vld [vmem:[%s357] sm:$0xff]
      %v374 = vld [vmem:[%s357 + $0x8] sm:$0xff]
      %v375 = vld [vmem:[%s357 + $0x10] sm:$0x3]
      %v376 = vld [vmem:[%s357 + $0x18] sm:$0xff]
      %v377 = vld [vmem:[%s357 + $0x20] sm:$0xff]
      %v378 = vld [vmem:[%s357 + $0x28] sm:$0x3]
      %v379 = vld [vmem:[%s357 + $0x30] sm:$0xff]
      %v380 = vld [vmem:[%s357 + $0x38] sm:$0xff]
      %v381 = vld [vmem:[%s357 + $0x40] sm:$0x3]
      %v382 = vld [vmem:[%s362] sm:$0xff]
      %v383 = vld [vmem:[%s362 + $0x8] sm:$0xff]
      %v384 = vld [vmem:[%s362 + $0x10] sm:$0x3]
      %v385 = vld [vmem:[%s362 + $0x18] sm:$0xff]
      %v386 = vld [vmem:[%s362 + $0x20] sm:$0xff]
      %v387 = vld [vmem:[%s362 + $0x28] sm:$0x3]
      %v388 = vld [vmem:[%s362 + $0x30] sm:$0xff]
      %v389 = vld [vmem:[%s362 + $0x38] sm:$0xff]
      %v390 = vld [vmem:[%s362 + $0x40] sm:$0x3]
      %v391 = vld [vmem:[%s2] sm:$0xff]
      %v392 = vld [vmem:[%s3] sm:$0xff]
      %v394 = vcombine.high %v391, %v391
      %v396 = vunpack.c.l.s4 1966171168
      %v397 = vunpack.c.0.s8 %v396
      %v398 = vlaneseq
      %v399 = vshrl.u32 %v398, 7
      %v400 = vsub.s32 %v397, %v399
      %v401 = vrot.slane %v391, %v400
      %v403 = vunpack.c.l.s4 1966171168
      %v404 = vunpack.c.0.s8 %v403
      %v405 = vlaneseq
      %v406 = vshrl.u32 %v405, 7
      %v407 = vsub.s32 %v404, %v406
      %v408 = vrot.slane %v394, %v407
      %v409 = vcombine.high %v401, %v401
      %v410 = vcombine.high %v408, %v408
      %v412 = vunpack.c.l.s4 1966171168
      %v413 = vunpack.c.0.s8 %v412
      %v414 = vlaneseq
      %v415 = vshrl.u32 %v414, 7
      %v416 = vsub.s32 %v413, %v415
      %v417 = vrot.slane %v401, %v416
      %v419 = vunpack.c.l.s4 1966171168
      %v420 = vunpack.c.0.s8 %v419
      %v421 = vlaneseq
      %v422 = vshrl.u32 %v421, 7
      %v423 = vsub.s32 %v420, %v422
      %v424 = vrot.slane %v408, %v423
      %v426 = vunpack.c.l.s4 1966171168
      %v427 = vunpack.c.0.s8 %v426
      %v428 = vlaneseq
      %v429 = vshrl.u32 %v428, 7
      %v430 = vsub.s32 %v427, %v429
      %v431 = vrot.slane %v409, %v430
      %v433 = vunpack.c.l.s4 1966171168
      %v434 = vunpack.c.0.s8 %v433
      %v435 = vlaneseq
      %v436 = vshrl.u32 %v435, 7
      %v437 = vsub.s32 %v434, %v436
      %v438 = vrot.slane %v410, %v437
      %v439 = vcombine.high %v417, %v417
      %v440 = vcombine.high %v424, %v424
      %v441 = vcombine.high %v431, %v431
      %v442 = vcombine.high %v438, %v438
      %v443 = vlaneseq
      %v444 = vshrl.u32 %v443, 7
      %v445 = vsub.s32 0, %v444
      %v446 = vrot.slane %v417, %v445
      %v447 = vlaneseq
      %v448 = vshrl.u32 %v447, 7
      %v449 = vsub.s32 0, %v448
      %v450 = vrot.slane %v431, %v449
      %v451 = vlaneseq
      %v452 = vshrl.u32 %v451, 7
      %v453 = vsub.s32 0, %v452
      %v454 = vrot.slane %v439, %v453
      %v455 = vlaneseq
      %v456 = vshrl.u32 %v455, 7
      %v457 = vsub.s32 0, %v456
      %v458 = vrot.slane %v441, %v457
      %v459 = vlaneseq
      %v460 = vshrl.u32 %v459, 7
      %v461 = vsub.s32 0, %v460
      %v462 = vrot.slane %v424, %v461
      %v463 = vlaneseq
      %v464 = vshrl.u32 %v463, 7
      %v465 = vsub.s32 0, %v464
      %v466 = vrot.slane %v438, %v465
      %v467 = vlaneseq
      %v468 = vshrl.u32 %v467, 7
      %v469 = vsub.s32 0, %v468
      %v470 = vrot.slane %v440, %v469
      %v471 = vlaneseq
      %v472 = vshrl.u32 %v471, 7
      %v473 = vsub.s32 0, %v472
      %v474 = vrot.slane %v442, %v473
      %475 = vset.pattern.permute.xlu0 0
      %476 = vperm.xlu0 %475, %v446
      %v477 = vpop.permute.xlu0 %476
      %479 = vset.pattern.permute.xlu0 0
      %480 = vperm.xlu0 %479, %v450
      %v481 = vpop.permute.xlu0 %480
      %483 = vset.pattern.permute.xlu0 0
      %484 = vperm.xlu0 %483, %v454
      %v485 = vpop.permute.xlu0 %484
      %487 = vset.pattern.permute.xlu0 0
      %488 = vperm.xlu0 %487, %v458
      %v489 = vpop.permute.xlu0 %488
      %491 = vset.pattern.permute.xlu0 0
      %492 = vperm.xlu0 %491, %v462
      %v493 = vpop.permute.xlu0 %492
      %495 = vset.pattern.permute.xlu0 0
      %496 = vperm.xlu0 %495, %v466
      %v497 = vpop.permute.xlu0 %496
      %499 = vset.pattern.permute.xlu0 0
      %500 = vperm.xlu0 %499, %v470
      %v501 = vpop.permute.xlu0 %500
      %503 = vset.pattern.permute.xlu0 0
      %504 = vperm.xlu0 %503, %v474
      %v505 = vpop.permute.xlu0 %504
      %v507 = vmul.f32 %v477, %v373
      %v508 = vmul.f32 %v477, %v374
      %v509 = vmul.f32 %v477, %v375
      %v510 = vmul.f32 %v481, %v373
      %v511 = vmul.f32 %v481, %v374
      %v512 = vmul.f32 %v481, %v375
      %v513 = vmul.f32 %v485, %v373
      %v514 = vmul.f32 %v485, %v374
      %v515 = vmul.f32 %v485, %v375
      %v516 = vmul.f32 %v489, %v373
      %v517 = vmul.f32 %v489, %v374
      %v518 = vmul.f32 %v489, %v375
      %v519 = vmul.f32 %v493, %v373
      %v520 = vmul.f32 %v493, %v374
      %v521 = vmul.f32 %v493, %v375
      %v522 = vmul.f32 %v497, %v373
      %v523 = vmul.f32 %v497, %v374
      %v524 = vmul.f32 %v497, %v375
      %v525 = vmul.f32 %v501, %v373
      %v526 = vmul.f32 %v501, %v374
      %v527 = vmul.f32 %v501, %v375
      %v528 = vmul.f32 %v505, %v373
      %v529 = vmul.f32 %v505, %v374
      %v530 = vmul.f32 %v505, %v375
      %v532 = vcombine.high %v392, %v392
      %v534 = vunpack.c.l.s4 1966171168
      %v535 = vunpack.c.0.s8 %v534
      %v536 = vlaneseq
      %v537 = vshrl.u32 %v536, 7
      %v538 = vsub.s32 %v535, %v537
      %v539 = vrot.slane %v392, %v538
      %v541 = vunpack.c.l.s4 1966171168
      %v542 = vunpack.c.0.s8 %v541
      %v543 = vlaneseq
      %v544 = vshrl.u32 %v543, 7
      %v545 = vsub.s32 %v542, %v544
      %v546 = vrot.slane %v532, %v545
      %v547 = vcombine.high %v539, %v539
      %v548 = vcombine.high %v546, %v546
      %v550 = vunpack.c.l.s4 1966171168
      %v551 = vunpack.c.0.s8 %v550
      %v552 = vlaneseq
      %v553 = vshrl.u32 %v552, 7
      %v554 = vsub.s32 %v551, %v553
      %v555 = vrot.slane %v539, %v554
      %v557 = vunpack.c.l.s4 1966171168
      %v558 = vunpack.c.0.s8 %v557
      %v559 = vlaneseq
      %v560 = vshrl.u32 %v559, 7
      %v561 = vsub.s32 %v558, %v560
      %v562 = vrot.slane %v546, %v561
      %v564 = vunpack.c.l.s4 1966171168
      %v565 = vunpack.c.0.s8 %v564
      %v566 = vlaneseq
      %v567 = vshrl.u32 %v566, 7
      %v568 = vsub.s32 %v565, %v567
      %v569 = vrot.slane %v547, %v568
      %v571 = vunpack.c.l.s4 1966171168
      %v572 = vunpack.c.0.s8 %v571
      %v573 = vlaneseq
      %v574 = vshrl.u32 %v573, 7
      %v575 = vsub.s32 %v572, %v574
      %v576 = vrot.slane %v548, %v575
      %v577 = vcombine.high %v555, %v555
      %v578 = vcombine.high %v562, %v562
      %v579 = vcombine.high %v569, %v569
      %v580 = vcombine.high %v576, %v576
      %v581 = vlaneseq
      %v582 = vshrl.u32 %v581, 7
      %v583 = vsub.s32 0, %v582
      %v584 = vrot.slane %v555, %v583
      %v585 = vlaneseq
      %v586 = vshrl.u32 %v585, 7
      %v587 = vsub.s32 0, %v586
      %v588 = vrot.slane %v569, %v587
      %v589 = vlaneseq
      %v590 = vshrl.u32 %v589, 7
      %v591 = vsub.s32 0, %v590
      %v592 = vrot.slane %v577, %v591
      %v593 = vlaneseq
      %v594 = vshrl.u32 %v593, 7
      %v595 = vsub.s32 0, %v594
      %v596 = vrot.slane %v579, %v595
      %v597 = vlaneseq
      %v598 = vshrl.u32 %v597, 7
      %v599 = vsub.s32 0, %v598
      %v600 = vrot.slane %v562, %v599
      %v601 = vlaneseq
      %v602 = vshrl.u32 %v601, 7
      %v603 = vsub.s32 0, %v602
      %v604 = vrot.slane %v576, %v603
      %v605 = vlaneseq
      %v606 = vshrl.u32 %v605, 7
      %v607 = vsub.s32 0, %v606
      %v608 = vrot.slane %v578, %v607
      %v609 = vlaneseq
      %v610 = vshrl.u32 %v609, 7
      %v611 = vsub.s32 0, %v610
      %v612 = vrot.slane %v580, %v611
      %613 = vset.pattern.permute.xlu0 0
      %614 = vperm.xlu0 %613, %v584
      %v615 = vpop.permute.xlu0 %614
      %617 = vset.pattern.permute.xlu0 0
      %618 = vperm.xlu0 %617, %v588
      %v619 = vpop.permute.xlu0 %618
      %621 = vset.pattern.permute.xlu0 0
      %622 = vperm.xlu0 %621, %v592
      %v623 = vpop.permute.xlu0 %622
      %625 = vset.pattern.permute.xlu0 0
      %626 = vperm.xlu0 %625, %v596
      %v627 = vpop.permute.xlu0 %626
      %629 = vset.pattern.permute.xlu0 0
      %630 = vperm.xlu0 %629, %v600
      %v631 = vpop.permute.xlu0 %630
      %633 = vset.pattern.permute.xlu0 0
      %634 = vperm.xlu0 %633, %v604
      %v635 = vpop.permute.xlu0 %634
      %637 = vset.pattern.permute.xlu0 0
      %638 = vperm.xlu0 %637, %v608
      %v639 = vpop.permute.xlu0 %638
      %641 = vset.pattern.permute.xlu0 0
      %642 = vperm.xlu0 %641, %v612
      %v643 = vpop.permute.xlu0 %642
      %v645 = vadd.f32 %v507, %v615
      %v646 = vadd.f32 %v508, %v615
      %v647 = vadd.f32 %v509, %v615
      %v648 = vadd.f32 %v510, %v619
      %v649 = vadd.f32 %v511, %v619
      %v650 = vadd.f32 %v512, %v619
      %v651 = vadd.f32 %v513, %v623
      %v652 = vadd.f32 %v514, %v623
      %v653 = vadd.f32 %v515, %v623
      %v654 = vadd.f32 %v516, %v627
      %v655 = vadd.f32 %v517, %v627
      %v656 = vadd.f32 %v518, %v627
      %v657 = vadd.f32 %v519, %v631
      %v658 = vadd.f32 %v520, %v631
      %v659 = vadd.f32 %v521, %v631
      %v660 = vadd.f32 %v522, %v635
      %v661 = vadd.f32 %v523, %v635
      %v662 = vadd.f32 %v524, %v635
      %v663 = vadd.f32 %v525, %v639
      %v664 = vadd.f32 %v526, %v639
      %v665 = vadd.f32 %v527, %v639
      %v666 = vadd.f32 %v528, %v643
      %v667 = vadd.f32 %v529, %v643
      %v668 = vadd.f32 %v530, %v643
      %669 = vset.pattern.permute.xlu0 1
      %670 = vperm.xlu0 %669, %v446
      %v671 = vpop.permute.xlu0 %670
      %673 = vset.pattern.permute.xlu0 1
      %674 = vperm.xlu0 %673, %v450
      %v675 = vpop.permute.xlu0 %674
      %677 = vset.pattern.permute.xlu0 1
      %678 = vperm.xlu0 %677, %v454
      %v679 = vpop.permute.xlu0 %678
      %681 = vset.pattern.permute.xlu0 1
      %682 = vperm.xlu0 %681, %v458
      %v683 = vpop.permute.xlu0 %682
      %685 = vset.pattern.permute.xlu0 1
      %686 = vperm.xlu0 %685, %v462
      %v687 = vpop.permute.xlu0 %686
      %689 = vset.pattern.permute.xlu0 1
      %690 = vperm.xlu0 %689, %v466
      %v691 = vpop.permute.xlu0 %690
      %693 = vset.pattern.permute.xlu0 1
      %694 = vperm.xlu0 %693, %v470
      %v695 = vpop.permute.xlu0 %694
      %697 = vset.pattern.permute.xlu0 1
      %698 = vperm.xlu0 %697, %v474
      %v699 = vpop.permute.xlu0 %698
      %v701 = vmul.f32 %v671, %v376
      %v702 = vmul.f32 %v671, %v377
      %v703 = vmul.f32 %v671, %v378
      %v704 = vmul.f32 %v675, %v376
      %v705 = vmul.f32 %v675, %v377
      %v706 = vmul.f32 %v675, %v378
      %v707 = vmul.f32 %v679, %v376
      %v708 = vmul.f32 %v679, %v377
      %v709 = vmul.f32 %v679, %v378
      %v710 = vmul.f32 %v683, %v376
      %v711 = vmul.f32 %v683, %v377
      %v712 = vmul.f32 %v683, %v378
      %v713 = vmul.f32 %v687, %v376
      %v714 = vmul.f32 %v687, %v377
      %v715 = vmul.f32 %v687, %v378
      %v716 = vmul.f32 %v691, %v376
      %v717 = vmul.f32 %v691, %v377
      %v718 = vmul.f32 %v691, %v378
      %v719 = vmul.f32 %v695, %v376
      %v720 = vmul.f32 %v695, %v377
      %v721 = vmul.f32 %v695, %v378
      %v722 = vmul.f32 %v699, %v376
      %v723 = vmul.f32 %v699, %v377
      %v724 = vmul.f32 %v699, %v378
      %v725 = vadd.f32 %v645, %v701
      %v726 = vadd.f32 %v646, %v702
      %v727 = vadd.f32 %v647, %v703
      %v728 = vadd.f32 %v648, %v704
      %v729 = vadd.f32 %v649, %v705
      %v730 = vadd.f32 %v650, %v706
      %v731 = vadd.f32 %v651, %v707
      %v732 = vadd.f32 %v652, %v708
      %v733 = vadd.f32 %v653, %v709
      %v734 = vadd.f32 %v654, %v710
      %v735 = vadd.f32 %v655, %v711
      %v736 = vadd.f32 %v656, %v712
      %v737 = vadd.f32 %v657, %v713
      %v738 = vadd.f32 %v658, %v714
      %v739 = vadd.f32 %v659, %v715
      %v740 = vadd.f32 %v660, %v716
      %v741 = vadd.f32 %v661, %v717
      %v742 = vadd.f32 %v662, %v718
      %v743 = vadd.f32 %v663, %v719
      %v744 = vadd.f32 %v664, %v720
      %v745 = vadd.f32 %v665, %v721
      %v746 = vadd.f32 %v666, %v722
      %v747 = vadd.f32 %v667, %v723
      %v748 = vadd.f32 %v668, %v724
      %749 = vset.pattern.permute.xlu0 2
      %750 = vperm.xlu0 %749, %v446
      %v751 = vpop.permute.xlu0 %750
      %753 = vset.pattern.permute.xlu0 2
      %754 = vperm.xlu0 %753, %v450
      %v755 = vpop.permute.xlu0 %754
      %757 = vset.pattern.permute.xlu0 2
      %758 = vperm.xlu0 %757, %v454
      %v759 = vpop.permute.xlu0 %758
      %761 = vset.pattern.permute.xlu0 2
      %762 = vperm.xlu0 %761, %v458
      %v763 = vpop.permute.xlu0 %762
      %765 = vset.pattern.permute.xlu0 2
      %766 = vperm.xlu0 %765, %v462
      %v767 = vpop.permute.xlu0 %766
      %769 = vset.pattern.permute.xlu0 2
      %770 = vperm.xlu0 %769, %v466
      %v771 = vpop.permute.xlu0 %770
      %773 = vset.pattern.permute.xlu0 2
      %774 = vperm.xlu0 %773, %v470
      %v775 = vpop.permute.xlu0 %774
      %777 = vset.pattern.permute.xlu0 2
      %778 = vperm.xlu0 %777, %v474
      %v779 = vpop.permute.xlu0 %778
      %v781 = vmul.f32 %v751, %v379
      %v782 = vmul.f32 %v751, %v380
      %v783 = vmul.f32 %v751, %v381
      %v784 = vmul.f32 %v755, %v379
      %v785 = vmul.f32 %v755, %v380
      %v786 = vmul.f32 %v755, %v381
      %v787 = vmul.f32 %v759, %v379
      %v788 = vmul.f32 %v759, %v380
      %v789 = vmul.f32 %v759, %v381
      %v790 = vmul.f32 %v763, %v379
      %v791 = vmul.f32 %v763, %v380
      %v792 = vmul.f32 %v763, %v381
      %v793 = vmul.f32 %v767, %v379
      %v794 = vmul.f32 %v767, %v380
      %v795 = vmul.f32 %v767, %v381
      %v796 = vmul.f32 %v771, %v379
      %v797 = vmul.f32 %v771, %v380
      %v798 = vmul.f32 %v771, %v381
      %v799 = vmul.f32 %v775, %v379
      %v800 = vmul.f32 %v775, %v380
      %v801 = vmul.f32 %v775, %v381
      %v802 = vmul.f32 %v779, %v379
      %v803 = vmul.f32 %v779, %v380
      %v804 = vmul.f32 %v779, %v381
      %v805 = vadd.f32 %v725, %v781
      %v806 = vadd.f32 %v726, %v782
      %v807 = vadd.f32 %v727, %v783
      %v808 = vadd.f32 %v728, %v784
      %v809 = vadd.f32 %v729, %v785
      %v810 = vadd.f32 %v730, %v786
      %v811 = vadd.f32 %v731, %v787
      %v812 = vadd.f32 %v732, %v788
      %v813 = vadd.f32 %v733, %v789
      %v814 = vadd.f32 %v734, %v790
      %v815 = vadd.f32 %v735, %v791
      %v816 = vadd.f32 %v736, %v792
      %v817 = vadd.f32 %v737, %v793
      %v818 = vadd.f32 %v738, %v794
      %v819 = vadd.f32 %v739, %v795
      %v820 = vadd.f32 %v740, %v796
      %v821 = vadd.f32 %v741, %v797
      %v822 = vadd.f32 %v742, %v798
      %v823 = vadd.f32 %v743, %v799
      %v824 = vadd.f32 %v744, %v800
      %v825 = vadd.f32 %v745, %v801
      %v826 = vadd.f32 %v746, %v802
      %v827 = vadd.f32 %v747, %v803
      %v828 = vadd.f32 %v748, %v804
      %v829 = vld [vmem:[%s4] sm:$0xff]
      %v830 = vld [vmem:[%s5] sm:$0xff]
      %v832 = vcombine.high %v829, %v829
      %v834 = vunpack.c.l.s4 1966171168
      %v835 = vunpack.c.0.s8 %v834
      %v836 = vlaneseq
      %v837 = vshrl.u32 %v836, 7
      %v838 = vsub.s32 %v835, %v837
      %v839 = vrot.slane %v829, %v838
      %v841 = vunpack.c.l.s4 1966171168
      %v842 = vunpack.c.0.s8 %v841
      %v843 = vlaneseq
      %v844 = vshrl.u32 %v843, 7
      %v845 = vsub.s32 %v842, %v844
      %v846 = vrot.slane %v832, %v845
      %v847 = vcombine.high %v839, %v839
      %v848 = vcombine.high %v846, %v846
      %v850 = vunpack.c.l.s4 1966171168
      %v851 = vunpack.c.0.s8 %v850
      %v852 = vlaneseq
      %v853 = vshrl.u32 %v852, 7
      %v854 = vsub.s32 %v851, %v853
      %v855 = vrot.slane %v839, %v854
      %v857 = vunpack.c.l.s4 1966171168
      %v858 = vunpack.c.0.s8 %v857
      %v859 = vlaneseq
      %v860 = vshrl.u32 %v859, 7
      %v861 = vsub.s32 %v858, %v860
      %v862 = vrot.slane %v846, %v861
      %v864 = vunpack.c.l.s4 1966171168
      %v865 = vunpack.c.0.s8 %v864
      %v866 = vlaneseq
      %v867 = vshrl.u32 %v866, 7
      %v868 = vsub.s32 %v865, %v867
      %v869 = vrot.slane %v847, %v868
      %v871 = vunpack.c.l.s4 1966171168
      %v872 = vunpack.c.0.s8 %v871
      %v873 = vlaneseq
      %v874 = vshrl.u32 %v873, 7
      %v875 = vsub.s32 %v872, %v874
      %v876 = vrot.slane %v848, %v875
      %v877 = vcombine.high %v855, %v855
      %v878 = vcombine.high %v862, %v862
      %v879 = vcombine.high %v869, %v869
      %v880 = vcombine.high %v876, %v876
      %v881 = vlaneseq
      %v882 = vshrl.u32 %v881, 7
      %v883 = vsub.s32 0, %v882
      %v884 = vrot.slane %v855, %v883
      %v885 = vlaneseq
      %v886 = vshrl.u32 %v885, 7
      %v887 = vsub.s32 0, %v886
      %v888 = vrot.slane %v869, %v887
      %v889 = vlaneseq
      %v890 = vshrl.u32 %v889, 7
      %v891 = vsub.s32 0, %v890
      %v892 = vrot.slane %v877, %v891
      %v893 = vlaneseq
      %v894 = vshrl.u32 %v893, 7
      %v895 = vsub.s32 0, %v894
      %v896 = vrot.slane %v879, %v895
      %v897 = vlaneseq
      %v898 = vshrl.u32 %v897, 7
      %v899 = vsub.s32 0, %v898
      %v900 = vrot.slane %v862, %v899
      %v901 = vlaneseq
      %v902 = vshrl.u32 %v901, 7
      %v903 = vsub.s32 0, %v902
      %v904 = vrot.slane %v876, %v903
      %v905 = vlaneseq
      %v906 = vshrl.u32 %v905, 7
      %v907 = vsub.s32 0, %v906
      %v908 = vrot.slane %v878, %v907
      %v909 = vlaneseq
      %v910 = vshrl.u32 %v909, 7
      %v911 = vsub.s32 0, %v910
      %v912 = vrot.slane %v880, %v911
      %913 = vset.pattern.permute.xlu0 0
      %914 = vperm.xlu0 %913, %v884
      %v915 = vpop.permute.xlu0 %914
      %917 = vset.pattern.permute.xlu0 0
      %918 = vperm.xlu0 %917, %v888
      %v919 = vpop.permute.xlu0 %918
      %921 = vset.pattern.permute.xlu0 0
      %922 = vperm.xlu0 %921, %v892
      %v923 = vpop.permute.xlu0 %922
      %925 = vset.pattern.permute.xlu0 0
      %926 = vperm.xlu0 %925, %v896
      %v927 = vpop.permute.xlu0 %926
      %929 = vset.pattern.permute.xlu0 0
      %930 = vperm.xlu0 %929, %v900
      %v931 = vpop.permute.xlu0 %930
      %933 = vset.pattern.permute.xlu0 0
      %934 = vperm.xlu0 %933, %v904
      %v935 = vpop.permute.xlu0 %934
      %937 = vset.pattern.permute.xlu0 0
      %938 = vperm.xlu0 %937, %v908
      %v939 = vpop.permute.xlu0 %938
      %941 = vset.pattern.permute.xlu0 0
      %942 = vperm.xlu0 %941, %v912
      %v943 = vpop.permute.xlu0 %942
      %v945 = vmul.f32 %v915, %v382
      %v946 = vmul.f32 %v915, %v383
      %v947 = vmul.f32 %v915, %v384
      %v948 = vmul.f32 %v919, %v382
      %v949 = vmul.f32 %v919, %v383
      %v950 = vmul.f32 %v919, %v384
      %v951 = vmul.f32 %v923, %v382
      %v952 = vmul.f32 %v923, %v383
      %v953 = vmul.f32 %v923, %v384
      %v954 = vmul.f32 %v927, %v382
      %v955 = vmul.f32 %v927, %v383
      %v956 = vmul.f32 %v927, %v384
      %v957 = vmul.f32 %v931, %v382
      %v958 = vmul.f32 %v931, %v383
      %v959 = vmul.f32 %v931, %v384
      %v960 = vmul.f32 %v935, %v382
      %v961 = vmul.f32 %v935, %v383
      %v962 = vmul.f32 %v935, %v384
      %v963 = vmul.f32 %v939, %v382
      %v964 = vmul.f32 %v939, %v383
      %v965 = vmul.f32 %v939, %v384
      %v966 = vmul.f32 %v943, %v382
      %v967 = vmul.f32 %v943, %v383
      %v968 = vmul.f32 %v943, %v384
      %v970 = vcombine.high %v830, %v830
      %v972 = vunpack.c.l.s4 1966171168
      %v973 = vunpack.c.0.s8 %v972
      %v974 = vlaneseq
      %v975 = vshrl.u32 %v974, 7
      %v976 = vsub.s32 %v973, %v975
      %v977 = vrot.slane %v830, %v976
      %v979 = vunpack.c.l.s4 1966171168
      %v980 = vunpack.c.0.s8 %v979
      %v981 = vlaneseq
      %v982 = vshrl.u32 %v981, 7
      %v983 = vsub.s32 %v980, %v982
      %v984 = vrot.slane %v970, %v983
      %v985 = vcombine.high %v977, %v977
      %v986 = vcombine.high %v984, %v984
      %v988 = vunpack.c.l.s4 1966171168
      %v989 = vunpack.c.0.s8 %v988
      %v990 = vlaneseq
      %v991 = vshrl.u32 %v990, 7
      %v992 = vsub.s32 %v989, %v991
      %v993 = vrot.slane %v977, %v992
      %v995 = vunpack.c.l.s4 1966171168
      %v996 = vunpack.c.0.s8 %v995
      %v997 = vlaneseq
      %v998 = vshrl.u32 %v997, 7
      %v999 = vsub.s32 %v996, %v998
      %v1000 = vrot.slane %v984, %v999
      %v1002 = vunpack.c.l.s4 1966171168
      %v1003 = vunpack.c.0.s8 %v1002
      %v1004 = vlaneseq
      %v1005 = vshrl.u32 %v1004, 7
      %v1006 = vsub.s32 %v1003, %v1005
      %v1007 = vrot.slane %v985, %v1006
      %v1009 = vunpack.c.l.s4 1966171168
      %v1010 = vunpack.c.0.s8 %v1009
      %v1011 = vlaneseq
      %v1012 = vshrl.u32 %v1011, 7
      %v1013 = vsub.s32 %v1010, %v1012
      %v1014 = vrot.slane %v986, %v1013
      %v1015 = vcombine.high %v993, %v993
      %v1016 = vcombine.high %v1000, %v1000
      %v1017 = vcombine.high %v1007, %v1007
      %v1018 = vcombine.high %v1014, %v1014
      %v1019 = vlaneseq
      %v1020 = vshrl.u32 %v1019, 7
      %v1021 = vsub.s32 0, %v1020
      %v1022 = vrot.slane %v993, %v1021
      %v1023 = vlaneseq
      %v1024 = vshrl.u32 %v1023, 7
      %v1025 = vsub.s32 0, %v1024
      %v1026 = vrot.slane %v1007, %v1025
      %v1027 = vlaneseq
      %v1028 = vshrl.u32 %v1027, 7
      %v1029 = vsub.s32 0, %v1028
      %v1030 = vrot.slane %v1015, %v1029
      %v1031 = vlaneseq
      %v1032 = vshrl.u32 %v1031, 7
      %v1033 = vsub.s32 0, %v1032
      %v1034 = vrot.slane %v1017, %v1033
      %v1035 = vlaneseq
      %v1036 = vshrl.u32 %v1035, 7
      %v1037 = vsub.s32 0, %v1036
      %v1038 = vrot.slane %v1000, %v1037
      %v1039 = vlaneseq
      %v1040 = vshrl.u32 %v1039, 7
      %v1041 = vsub.s32 0, %v1040
      %v1042 = vrot.slane %v1014, %v1041
      %v1043 = vlaneseq
      %v1044 = vshrl.u32 %v1043, 7
      %v1045 = vsub.s32 0, %v1044
      %v1046 = vrot.slane %v1016, %v1045
      %v1047 = vlaneseq
      %v1048 = vshrl.u32 %v1047, 7
      %v1049 = vsub.s32 0, %v1048
      %v1050 = vrot.slane %v1018, %v1049
      %1051 = vset.pattern.permute.xlu0 0
      %1052 = vperm.xlu0 %1051, %v1022
      %v1053 = vpop.permute.xlu0 %1052
      %1055 = vset.pattern.permute.xlu0 0
      %1056 = vperm.xlu0 %1055, %v1026
      %v1057 = vpop.permute.xlu0 %1056
      %1059 = vset.pattern.permute.xlu0 0
      %1060 = vperm.xlu0 %1059, %v1030
      %v1061 = vpop.permute.xlu0 %1060
      %1063 = vset.pattern.permute.xlu0 0
      %1064 = vperm.xlu0 %1063, %v1034
      %v1065 = vpop.permute.xlu0 %1064
      %1067 = vset.pattern.permute.xlu0 0
      %1068 = vperm.xlu0 %1067, %v1038
      %v1069 = vpop.permute.xlu0 %1068
      %1071 = vset.pattern.permute.xlu0 0
      %1072 = vperm.xlu0 %1071, %v1042
      %v1073 = vpop.permute.xlu0 %1072
      %1075 = vset.pattern.permute.xlu0 0
      %1076 = vperm.xlu0 %1075, %v1046
      %v1077 = vpop.permute.xlu0 %1076
      %1079 = vset.pattern.permute.xlu0 0
      %1080 = vperm.xlu0 %1079, %v1050
      %v1081 = vpop.permute.xlu0 %1080
      %v1083 = vadd.f32 %v945, %v1053
      %v1084 = vadd.f32 %v946, %v1053
      %v1085 = vadd.f32 %v947, %v1053
      %v1086 = vadd.f32 %v948, %v1057
      %v1087 = vadd.f32 %v949, %v1057
      %v1088 = vadd.f32 %v950, %v1057
      %v1089 = vadd.f32 %v951, %v1061
      %v1090 = vadd.f32 %v952, %v1061
      %v1091 = vadd.f32 %v953, %v1061
      %v1092 = vadd.f32 %v954, %v1065
      %v1093 = vadd.f32 %v955, %v1065
      %v1094 = vadd.f32 %v956, %v1065
      %v1095 = vadd.f32 %v957, %v1069
      %v1096 = vadd.f32 %v958, %v1069
      %v1097 = vadd.f32 %v959, %v1069
      %v1098 = vadd.f32 %v960, %v1073
      %v1099 = vadd.f32 %v961, %v1073
      %v1100 = vadd.f32 %v962, %v1073
      %v1101 = vadd.f32 %v963, %v1077
      %v1102 = vadd.f32 %v964, %v1077
      %v1103 = vadd.f32 %v965, %v1077
      %v1104 = vadd.f32 %v966, %v1081
      %v1105 = vadd.f32 %v967, %v1081
      %v1106 = vadd.f32 %v968, %v1081
      %1107 = vset.pattern.permute.xlu0 1
      %1108 = vperm.xlu0 %1107, %v884
      %v1109 = vpop.permute.xlu0 %1108
      %1111 = vset.pattern.permute.xlu0 1
      %1112 = vperm.xlu0 %1111, %v888
      %v1113 = vpop.permute.xlu0 %1112
      %1115 = vset.pattern.permute.xlu0 1
      %1116 = vperm.xlu0 %1115, %v892
      %v1117 = vpop.permute.xlu0 %1116
      %1119 = vset.pattern.permute.xlu0 1
      %1120 = vperm.xlu0 %1119, %v896
      %v1121 = vpop.permute.xlu0 %1120
      %1123 = vset.pattern.permute.xlu0 1
      %1124 = vperm.xlu0 %1123, %v900
      %v1125 = vpop.permute.xlu0 %1124
      %1127 = vset.pattern.permute.xlu0 1
      %1128 = vperm.xlu0 %1127, %v904
      %v1129 = vpop.permute.xlu0 %1128
      %1131 = vset.pattern.permute.xlu0 1
      %1132 = vperm.xlu0 %1131, %v908
      %v1133 = vpop.permute.xlu0 %1132
      %1135 = vset.pattern.permute.xlu0 1
      %1136 = vperm.xlu0 %1135, %v912
      %v1137 = vpop.permute.xlu0 %1136
      %v1139 = vmul.f32 %v1109, %v385
      %v1140 = vmul.f32 %v1109, %v386
      %v1141 = vmul.f32 %v1109, %v387
      %v1142 = vmul.f32 %v1113, %v385
      %v1143 = vmul.f32 %v1113, %v386
      %v1144 = vmul.f32 %v1113, %v387
      %v1145 = vmul.f32 %v1117, %v385
      %v1146 = vmul.f32 %v1117, %v386
      %v1147 = vmul.f32 %v1117, %v387
      %v1148 = vmul.f32 %v1121, %v385
      %v1149 = vmul.f32 %v1121, %v386
      %v1150 = vmul.f32 %v1121, %v387
      %v1151 = vmul.f32 %v1125, %v385
      %v1152 = vmul.f32 %v1125, %v386
      %v1153 = vmul.f32 %v1125, %v387
      %v1154 = vmul.f32 %v1129, %v385
      %v1155 = vmul.f32 %v1129, %v386
      %v1156 = vmul.f32 %v1129, %v387
      %v1157 = vmul.f32 %v1133, %v385
      %v1158 = vmul.f32 %v1133, %v386
      %v1159 = vmul.f32 %v1133, %v387
      %v1160 = vmul.f32 %v1137, %v385
      %v1161 = vmul.f32 %v1137, %v386
      %v1162 = vmul.f32 %v1137, %v387
      %v1163 = vadd.f32 %v1083, %v1139
      %v1164 = vadd.f32 %v1084, %v1140
      %v1165 = vadd.f32 %v1085, %v1141
      %v1166 = vadd.f32 %v1086, %v1142
      %v1167 = vadd.f32 %v1087, %v1143
      %v1168 = vadd.f32 %v1088, %v1144
      %v1169 = vadd.f32 %v1089, %v1145
      %v1170 = vadd.f32 %v1090, %v1146
      %v1171 = vadd.f32 %v1091, %v1147
      %v1172 = vadd.f32 %v1092, %v1148
      %v1173 = vadd.f32 %v1093, %v1149
      %v1174 = vadd.f32 %v1094, %v1150
      %v1175 = vadd.f32 %v1095, %v1151
      %v1176 = vadd.f32 %v1096, %v1152
      %v1177 = vadd.f32 %v1097, %v1153
      %v1178 = vadd.f32 %v1098, %v1154
      %v1179 = vadd.f32 %v1099, %v1155
      %v1180 = vadd.f32 %v1100, %v1156
      %v1181 = vadd.f32 %v1101, %v1157
      %v1182 = vadd.f32 %v1102, %v1158
      %v1183 = vadd.f32 %v1103, %v1159
      %v1184 = vadd.f32 %v1104, %v1160
      %v1185 = vadd.f32 %v1105, %v1161
      %v1186 = vadd.f32 %v1106, %v1162
      %1187 = vset.pattern.permute.xlu0 2
      %1188 = vperm.xlu0 %1187, %v884
      %v1189 = vpop.permute.xlu0 %1188
      %1191 = vset.pattern.permute.xlu0 2
      %1192 = vperm.xlu0 %1191, %v888
      %v1193 = vpop.permute.xlu0 %1192
      %1195 = vset.pattern.permute.xlu0 2
      %1196 = vperm.xlu0 %1195, %v892
      %v1197 = vpop.permute.xlu0 %1196
      %1199 = vset.pattern.permute.xlu0 2
      %1200 = vperm.xlu0 %1199, %v896
      %v1201 = vpop.permute.xlu0 %1200
      %1203 = vset.pattern.permute.xlu0 2
      %1204 = vperm.xlu0 %1203, %v900
      %v1205 = vpop.permute.xlu0 %1204
      %1207 = vset.pattern.permute.xlu0 2
      %1208 = vperm.xlu0 %1207, %v904
      %v1209 = vpop.permute.xlu0 %1208
      %1211 = vset.pattern.permute.xlu0 2
      %1212 = vperm.xlu0 %1211, %v908
      %v1213 = vpop.permute.xlu0 %1212
      %1215 = vset.pattern.permute.xlu0 2
      %1216 = vperm.xlu0 %1215, %v912
      %v1217 = vpop.permute.xlu0 %1216
      %v1219 = vmul.f32 %v1189, %v388
      %v1220 = vmul.f32 %v1189, %v389
      %v1221 = vmul.f32 %v1189, %v390
      %v1222 = vmul.f32 %v1193, %v388
      %v1223 = vmul.f32 %v1193, %v389
      %v1224 = vmul.f32 %v1193, %v390
      %v1225 = vmul.f32 %v1197, %v388
      %v1226 = vmul.f32 %v1197, %v389
      %v1227 = vmul.f32 %v1197, %v390
      %v1228 = vmul.f32 %v1201, %v388
      %v1229 = vmul.f32 %v1201, %v389
      %v1230 = vmul.f32 %v1201, %v390
      %v1231 = vmul.f32 %v1205, %v388
      %v1232 = vmul.f32 %v1205, %v389
      %v1233 = vmul.f32 %v1205, %v390
      %v1234 = vmul.f32 %v1209, %v388
      %v1235 = vmul.f32 %v1209, %v389
      %v1236 = vmul.f32 %v1209, %v390
      %v1237 = vmul.f32 %v1213, %v388
      %v1238 = vmul.f32 %v1213, %v389
      %v1239 = vmul.f32 %v1213, %v390
      %v1240 = vmul.f32 %v1217, %v388
      %v1241 = vmul.f32 %v1217, %v389
      %v1242 = vmul.f32 %v1217, %v390
      %v1243 = vadd.f32 %v1163, %v1219
      %v1244 = vadd.f32 %v1164, %v1220
      %v1245 = vadd.f32 %v1165, %v1221
      %v1246 = vadd.f32 %v1166, %v1222
      %v1247 = vadd.f32 %v1167, %v1223
      %v1248 = vadd.f32 %v1168, %v1224
      %v1249 = vadd.f32 %v1169, %v1225
      %v1250 = vadd.f32 %v1170, %v1226
      %v1251 = vadd.f32 %v1171, %v1227
      %v1252 = vadd.f32 %v1172, %v1228
      %v1253 = vadd.f32 %v1173, %v1229
      %v1254 = vadd.f32 %v1174, %v1230
      %v1255 = vadd.f32 %v1175, %v1231
      %v1256 = vadd.f32 %v1176, %v1232
      %v1257 = vadd.f32 %v1177, %v1233
      %v1258 = vadd.f32 %v1178, %v1234
      %v1259 = vadd.f32 %v1179, %v1235
      %v1260 = vadd.f32 %v1180, %v1236
      %v1261 = vadd.f32 %v1181, %v1237
      %v1262 = vadd.f32 %v1182, %v1238
      %v1263 = vadd.f32 %v1183, %v1239
      %v1264 = vadd.f32 %v1184, %v1240
      %v1265 = vadd.f32 %v1185, %v1241
      %v1266 = vadd.f32 %v1186, %v1242
      %v1267 = vld [vmem:[%s6] sm:$0xff]
      %v1268 = vld [vmem:[%s7] sm:$0xff]
      %v1270 = vcombine.high %v1267, %v1267
      %v1272 = vunpack.c.l.s4 1966171168
      %v1273 = vunpack.c.0.s8 %v1272
      %v1274 = vlaneseq
      %v1275 = vshrl.u32 %v1274, 7
      %v1276 = vsub.s32 %v1273, %v1275
      %v1277 = vrot.slane %v1267, %v1276
      %v1279 = vunpack.c.l.s4 1966171168
      %v1280 = vunpack.c.0.s8 %v1279
      %v1281 = vlaneseq
      %v1282 = vshrl.u32 %v1281, 7
      %v1283 = vsub.s32 %v1280, %v1282
      %v1284 = vrot.slane %v1270, %v1283
      %v1285 = vcombine.high %v1277, %v1277
      %v1286 = vcombine.high %v1284, %v1284
      %v1288 = vunpack.c.l.s4 1966171168
      %v1289 = vunpack.c.0.s8 %v1288
      %v1290 = vlaneseq
      %v1291 = vshrl.u32 %v1290, 7
      %v1292 = vsub.s32 %v1289, %v1291
      %v1293 = vrot.slane %v1277, %v1292
      %v1295 = vunpack.c.l.s4 1966171168
      %v1296 = vunpack.c.0.s8 %v1295
      %v1297 = vlaneseq
      %v1298 = vshrl.u32 %v1297, 7
      %v1299 = vsub.s32 %v1296, %v1298
      %v1300 = vrot.slane %v1284, %v1299
      %v1302 = vunpack.c.l.s4 1966171168
      %v1303 = vunpack.c.0.s8 %v1302
      %v1304 = vlaneseq
      %v1305 = vshrl.u32 %v1304, 7
      %v1306 = vsub.s32 %v1303, %v1305
      %v1307 = vrot.slane %v1285, %v1306
      %v1309 = vunpack.c.l.s4 1966171168
      %v1310 = vunpack.c.0.s8 %v1309
      %v1311 = vlaneseq
      %v1312 = vshrl.u32 %v1311, 7
      %v1313 = vsub.s32 %v1310, %v1312
      %v1314 = vrot.slane %v1286, %v1313
      %v1315 = vcombine.high %v1293, %v1293
      %v1316 = vcombine.high %v1300, %v1300
      %v1317 = vcombine.high %v1307, %v1307
      %v1318 = vcombine.high %v1314, %v1314
      %v1319 = vlaneseq
      %v1320 = vshrl.u32 %v1319, 7
      %v1321 = vsub.s32 0, %v1320
      %v1322 = vrot.slane %v1293, %v1321
      %v1323 = vlaneseq
      %v1324 = vshrl.u32 %v1323, 7
      %v1325 = vsub.s32 0, %v1324
      %v1326 = vrot.slane %v1307, %v1325
      %v1327 = vlaneseq
      %v1328 = vshrl.u32 %v1327, 7
      %v1329 = vsub.s32 0, %v1328
      %v1330 = vrot.slane %v1315, %v1329
      %v1331 = vlaneseq
      %v1332 = vshrl.u32 %v1331, 7
      %v1333 = vsub.s32 0, %v1332
      %v1334 = vrot.slane %v1317, %v1333
      %v1335 = vlaneseq
      %v1336 = vshrl.u32 %v1335, 7
      %v1337 = vsub.s32 0, %v1336
      %v1338 = vrot.slane %v1300, %v1337
      %v1339 = vlaneseq
      %v1340 = vshrl.u32 %v1339, 7
      %v1341 = vsub.s32 0, %v1340
      %v1342 = vrot.slane %v1314, %v1341
      %v1343 = vlaneseq
      %v1344 = vshrl.u32 %v1343, 7
      %v1345 = vsub.s32 0, %v1344
      %v1346 = vrot.slane %v1316, %v1345
      %v1347 = vlaneseq
      %v1348 = vshrl.u32 %v1347, 7
      %v1349 = vsub.s32 0, %v1348
      %v1350 = vrot.slane %v1318, %v1349
      %1351 = vset.pattern.permute.xlu0 0
      %1352 = vperm.xlu0 %1351, %v1322
      %v1353 = vpop.permute.xlu0 %1352
      %1355 = vset.pattern.permute.xlu0 0
      %1356 = vperm.xlu0 %1355, %v1326
      %v1357 = vpop.permute.xlu0 %1356
      %1359 = vset.pattern.permute.xlu0 0
      %1360 = vperm.xlu0 %1359, %v1330
      %v1361 = vpop.permute.xlu0 %1360
      %1363 = vset.pattern.permute.xlu0 0
      %1364 = vperm.xlu0 %1363, %v1334
      %v1365 = vpop.permute.xlu0 %1364
      %1367 = vset.pattern.permute.xlu0 0
      %1368 = vperm.xlu0 %1367, %v1338
      %v1369 = vpop.permute.xlu0 %1368
      %1371 = vset.pattern.permute.xlu0 0
      %1372 = vperm.xlu0 %1371, %v1342
      %v1373 = vpop.permute.xlu0 %1372
      %1375 = vset.pattern.permute.xlu0 0
      %1376 = vperm.xlu0 %1375, %v1346
      %v1377 = vpop.permute.xlu0 %1376
      %1379 = vset.pattern.permute.xlu0 0
      %1380 = vperm.xlu0 %1379, %v1350
      %v1381 = vpop.permute.xlu0 %1380
      %v1383 = vmul.f32 %v1353, %v382
      %v1384 = vmul.f32 %v1353, %v383
      %v1385 = vmul.f32 %v1353, %v384
      %v1386 = vmul.f32 %v1357, %v382
      %v1387 = vmul.f32 %v1357, %v383
      %v1388 = vmul.f32 %v1357, %v384
      %v1389 = vmul.f32 %v1361, %v382
      %v1390 = vmul.f32 %v1361, %v383
      %v1391 = vmul.f32 %v1361, %v384
      %v1392 = vmul.f32 %v1365, %v382
      %v1393 = vmul.f32 %v1365, %v383
      %v1394 = vmul.f32 %v1365, %v384
      %v1395 = vmul.f32 %v1369, %v382
      %v1396 = vmul.f32 %v1369, %v383
      %v1397 = vmul.f32 %v1369, %v384
      %v1398 = vmul.f32 %v1373, %v382
      %v1399 = vmul.f32 %v1373, %v383
      %v1400 = vmul.f32 %v1373, %v384
      %v1401 = vmul.f32 %v1377, %v382
      %v1402 = vmul.f32 %v1377, %v383
      %v1403 = vmul.f32 %v1377, %v384
      %v1404 = vmul.f32 %v1381, %v382
      %v1405 = vmul.f32 %v1381, %v383
      %v1406 = vmul.f32 %v1381, %v384
      %v1408 = vcombine.high %v1268, %v1268
      %v1410 = vunpack.c.l.s4 1966171168
      %v1411 = vunpack.c.0.s8 %v1410
      %v1412 = vlaneseq
      %v1413 = vshrl.u32 %v1412, 7
      %v1414 = vsub.s32 %v1411, %v1413
      %v1415 = vrot.slane %v1268, %v1414
      %v1417 = vunpack.c.l.s4 1966171168
      %v1418 = vunpack.c.0.s8 %v1417
      %v1419 = vlaneseq
      %v1420 = vshrl.u32 %v1419, 7
      %v1421 = vsub.s32 %v1418, %v1420
      %v1422 = vrot.slane %v1408, %v1421
      %v1423 = vcombine.high %v1415, %v1415
      %v1424 = vcombine.high %v1422, %v1422
      %v1426 = vunpack.c.l.s4 1966171168
      %v1427 = vunpack.c.0.s8 %v1426
      %v1428 = vlaneseq
      %v1429 = vshrl.u32 %v1428, 7
      %v1430 = vsub.s32 %v1427, %v1429
      %v1431 = vrot.slane %v1415, %v1430
      %v1433 = vunpack.c.l.s4 1966171168
      %v1434 = vunpack.c.0.s8 %v1433
      %v1435 = vlaneseq
      %v1436 = vshrl.u32 %v1435, 7
      %v1437 = vsub.s32 %v1434, %v1436
      %v1438 = vrot.slane %v1422, %v1437
      %v1440 = vunpack.c.l.s4 1966171168
      %v1441 = vunpack.c.0.s8 %v1440
      %v1442 = vlaneseq
      %v1443 = vshrl.u32 %v1442, 7
      %v1444 = vsub.s32 %v1441, %v1443
      %v1445 = vrot.slane %v1423, %v1444
      %v1447 = vunpack.c.l.s4 1966171168
      %v1448 = vunpack.c.0.s8 %v1447
      %v1449 = vlaneseq
      %v1450 = vshrl.u32 %v1449, 7
      %v1451 = vsub.s32 %v1448, %v1450
      %v1452 = vrot.slane %v1424, %v1451
      %v1453 = vcombine.high %v1431, %v1431
      %v1454 = vcombine.high %v1438, %v1438
      %v1455 = vcombine.high %v1445, %v1445
      %v1456 = vcombine.high %v1452, %v1452
      %v1457 = vlaneseq
      %v1458 = vshrl.u32 %v1457, 7
      %v1459 = vsub.s32 0, %v1458
      %v1460 = vrot.slane %v1431, %v1459
      %v1461 = vlaneseq
      %v1462 = vshrl.u32 %v1461, 7
      %v1463 = vsub.s32 0, %v1462
      %v1464 = vrot.slane %v1445, %v1463
      %v1465 = vlaneseq
      %v1466 = vshrl.u32 %v1465, 7
      %v1467 = vsub.s32 0, %v1466
      %v1468 = vrot.slane %v1453, %v1467
      %v1469 = vlaneseq
      %v1470 = vshrl.u32 %v1469, 7
      %v1471 = vsub.s32 0, %v1470
      %v1472 = vrot.slane %v1455, %v1471
      %v1473 = vlaneseq
      %v1474 = vshrl.u32 %v1473, 7
      %v1475 = vsub.s32 0, %v1474
      %v1476 = vrot.slane %v1438, %v1475
      %v1477 = vlaneseq
      %v1478 = vshrl.u32 %v1477, 7
      %v1479 = vsub.s32 0, %v1478
      %v1480 = vrot.slane %v1452, %v1479
      %v1481 = vlaneseq
      %v1482 = vshrl.u32 %v1481, 7
      %v1483 = vsub.s32 0, %v1482
      %v1484 = vrot.slane %v1454, %v1483
      %v1485 = vlaneseq
      %v1486 = vshrl.u32 %v1485, 7
      %v1487 = vsub.s32 0, %v1486
      %v1488 = vrot.slane %v1456, %v1487
      %1489 = vset.pattern.permute.xlu0 0
      %1490 = vperm.xlu0 %1489, %v1460
      %v1491 = vpop.permute.xlu0 %1490
      %1493 = vset.pattern.permute.xlu0 0
      %1494 = vperm.xlu0 %1493, %v1464
      %v1495 = vpop.permute.xlu0 %1494
      %1497 = vset.pattern.permute.xlu0 0
      %1498 = vperm.xlu0 %1497, %v1468
      %v1499 = vpop.permute.xlu0 %1498
      %1501 = vset.pattern.permute.xlu0 0
      %1502 = vperm.xlu0 %1501, %v1472
      %v1503 = vpop.permute.xlu0 %1502
      %1505 = vset.pattern.permute.xlu0 0
      %1506 = vperm.xlu0 %1505, %v1476
      %v1507 = vpop.permute.xlu0 %1506
      %1509 = vset.pattern.permute.xlu0 0
      %1510 = vperm.xlu0 %1509, %v1480
      %v1511 = vpop.permute.xlu0 %1510
      %1513 = vset.pattern.permute.xlu0 0
      %1514 = vperm.xlu0 %1513, %v1484
      %v1515 = vpop.permute.xlu0 %1514
      %1517 = vset.pattern.permute.xlu0 0
      %1518 = vperm.xlu0 %1517, %v1488
      %v1519 = vpop.permute.xlu0 %1518
      %v1521 = vadd.f32 %v1383, %v1491
      %v1522 = vadd.f32 %v1384, %v1491
      %v1523 = vadd.f32 %v1385, %v1491
      %v1524 = vadd.f32 %v1386, %v1495
      %v1525 = vadd.f32 %v1387, %v1495
      %v1526 = vadd.f32 %v1388, %v1495
      %v1527 = vadd.f32 %v1389, %v1499
      %v1528 = vadd.f32 %v1390, %v1499
      %v1529 = vadd.f32 %v1391, %v1499
      %v1530 = vadd.f32 %v1392, %v1503
      %v1531 = vadd.f32 %v1393, %v1503
      %v1532 = vadd.f32 %v1394, %v1503
      %v1533 = vadd.f32 %v1395, %v1507
      %v1534 = vadd.f32 %v1396, %v1507
      %v1535 = vadd.f32 %v1397, %v1507
      %v1536 = vadd.f32 %v1398, %v1511
      %v1537 = vadd.f32 %v1399, %v1511
      %v1538 = vadd.f32 %v1400, %v1511
      %v1539 = vadd.f32 %v1401, %v1515
      %v1540 = vadd.f32 %v1402, %v1515
      %v1541 = vadd.f32 %v1403, %v1515
      %v1542 = vadd.f32 %v1404, %v1519
      %v1543 = vadd.f32 %v1405, %v1519
      %v1544 = vadd.f32 %v1406, %v1519
      %1545 = vset.pattern.permute.xlu0 1
      %1546 = vperm.xlu0 %1545, %v1322
      %v1547 = vpop.permute.xlu0 %1546
      %1549 = vset.pattern.permute.xlu0 1
      %1550 = vperm.xlu0 %1549, %v1326
      %v1551 = vpop.permute.xlu0 %1550
      %1553 = vset.pattern.permute.xlu0 1
      %1554 = vperm.xlu0 %1553, %v1330
      %v1555 = vpop.permute.xlu0 %1554
      %1557 = vset.pattern.permute.xlu0 1
      %1558 = vperm.xlu0 %1557, %v1334
      %v1559 = vpop.permute.xlu0 %1558
      %1561 = vset.pattern.permute.xlu0 1
      %1562 = vperm.xlu0 %1561, %v1338
      %v1563 = vpop.permute.xlu0 %1562
      %1565 = vset.pattern.permute.xlu0 1
      %1566 = vperm.xlu0 %1565, %v1342
      %v1567 = vpop.permute.xlu0 %1566
      %1569 = vset.pattern.permute.xlu0 1
      %1570 = vperm.xlu0 %1569, %v1346
      %v1571 = vpop.permute.xlu0 %1570
      %1573 = vset.pattern.permute.xlu0 1
      %1574 = vperm.xlu0 %1573, %v1350
      %v1575 = vpop.permute.xlu0 %1574
      %v1577 = vmul.f32 %v1547, %v385
      %v1578 = vmul.f32 %v1547, %v386
      %v1579 = vmul.f32 %v1547, %v387
      %v1580 = vmul.f32 %v1551, %v385
      %v1581 = vmul.f32 %v1551, %v386
      %v1582 = vmul.f32 %v1551, %v387
      %v1583 = vmul.f32 %v1555, %v385
      %v1584 = vmul.f32 %v1555, %v386
      %v1585 = vmul.f32 %v1555, %v387
      %v1586 = vmul.f32 %v1559, %v385
      %v1587 = vmul.f32 %v1559, %v386
      %v1588 = vmul.f32 %v1559, %v387
      %v1589 = vmul.f32 %v1563, %v385
      %v1590 = vmul.f32 %v1563, %v386
      %v1591 = vmul.f32 %v1563, %v387
      %v1592 = vmul.f32 %v1567, %v385
      %v1593 = vmul.f32 %v1567, %v386
      %v1594 = vmul.f32 %v1567, %v387
      %v1595 = vmul.f32 %v1571, %v385
      %v1596 = vmul.f32 %v1571, %v386
      %v1597 = vmul.f32 %v1571, %v387
      %v1598 = vmul.f32 %v1575, %v385
      %v1599 = vmul.f32 %v1575, %v386
      %v1600 = vmul.f32 %v1575, %v387
      %v1601 = vadd.f32 %v1521, %v1577
      %v1602 = vadd.f32 %v1522, %v1578
      %v1603 = vadd.f32 %v1523, %v1579
      %v1604 = vadd.f32 %v1524, %v1580
      %v1605 = vadd.f32 %v1525, %v1581
      %v1606 = vadd.f32 %v1526, %v1582
      %v1607 = vadd.f32 %v1527, %v1583
      %v1608 = vadd.f32 %v1528, %v1584
      %v1609 = vadd.f32 %v1529, %v1585
      %v1610 = vadd.f32 %v1530, %v1586
      %v1611 = vadd.f32 %v1531, %v1587
      %v1612 = vadd.f32 %v1532, %v1588
      %v1613 = vadd.f32 %v1533, %v1589
      %v1614 = vadd.f32 %v1534, %v1590
      %v1615 = vadd.f32 %v1535, %v1591
      %v1616 = vadd.f32 %v1536, %v1592
      %v1617 = vadd.f32 %v1537, %v1593
      %v1618 = vadd.f32 %v1538, %v1594
      %v1619 = vadd.f32 %v1539, %v1595
      %v1620 = vadd.f32 %v1540, %v1596
      %v1621 = vadd.f32 %v1541, %v1597
      %v1622 = vadd.f32 %v1542, %v1598
      %v1623 = vadd.f32 %v1543, %v1599
      %v1624 = vadd.f32 %v1544, %v1600
      %1625 = vset.pattern.permute.xlu0 2
      %1626 = vperm.xlu0 %1625, %v1322
      %v1627 = vpop.permute.xlu0 %1626
      %1629 = vset.pattern.permute.xlu0 2
      %1630 = vperm.xlu0 %1629, %v1326
      %v1631 = vpop.permute.xlu0 %1630
      %1633 = vset.pattern.permute.xlu0 2
      %1634 = vperm.xlu0 %1633, %v1330
      %v1635 = vpop.permute.xlu0 %1634
      %1637 = vset.pattern.permute.xlu0 2
      %1638 = vperm.xlu0 %1637, %v1334
      %v1639 = vpop.permute.xlu0 %1638
      %1641 = vset.pattern.permute.xlu0 2
      %1642 = vperm.xlu0 %1641, %v1338
      %v1643 = vpop.permute.xlu0 %1642
      %1645 = vset.pattern.permute.xlu0 2
      %1646 = vperm.xlu0 %1645, %v1342
      %v1647 = vpop.permute.xlu0 %1646
      %1649 = vset.pattern.permute.xlu0 2
      %1650 = vperm.xlu0 %1649, %v1346
      %v1651 = vpop.permute.xlu0 %1650
      %1653 = vset.pattern.permute.xlu0 2
      %1654 = vperm.xlu0 %1653, %v1350
      %v1655 = vpop.permute.xlu0 %1654
      %v1657 = vmul.f32 %v1627, %v388
      %v1658 = vmul.f32 %v1627, %v389
      %v1659 = vmul.f32 %v1627, %v390
      %v1660 = vmul.f32 %v1631, %v388
      %v1661 = vmul.f32 %v1631, %v389
      %v1662 = vmul.f32 %v1631, %v390
      %v1663 = vmul.f32 %v1635, %v388
      %v1664 = vmul.f32 %v1635, %v389
      %v1665 = vmul.f32 %v1635, %v390
      %v1666 = vmul.f32 %v1639, %v388
      %v1667 = vmul.f32 %v1639, %v389
      %v1668 = vmul.f32 %v1639, %v390
      %v1669 = vmul.f32 %v1643, %v388
      %v1670 = vmul.f32 %v1643, %v389
      %v1671 = vmul.f32 %v1643, %v390
      %v1672 = vmul.f32 %v1647, %v388
      %v1673 = vmul.f32 %v1647, %v389
      %v1674 = vmul.f32 %v1647, %v390
      %v1675 = vmul.f32 %v1651, %v388
      %v1676 = vmul.f32 %v1651, %v389
      %v1677 = vmul.f32 %v1651, %v390
      %v1678 = vmul.f32 %v1655, %v388
      %v1679 = vmul.f32 %v1655, %v389
      %v1680 = vmul.f32 %v1655, %v390
      %v1681 = vadd.f32 %v1601, %v1657
      %v1682 = vadd.f32 %v1602, %v1658
      %v1683 = vadd.f32 %v1603, %v1659
      %v1684 = vadd.f32 %v1604, %v1660
      %v1685 = vadd.f32 %v1605, %v1661
      %v1686 = vadd.f32 %v1606, %v1662
      %v1687 = vadd.f32 %v1607, %v1663
      %v1688 = vadd.f32 %v1608, %v1664
      %v1689 = vadd.f32 %v1609, %v1665
      %v1690 = vadd.f32 %v1610, %v1666
      %v1691 = vadd.f32 %v1611, %v1667
      %v1692 = vadd.f32 %v1612, %v1668
      %v1693 = vadd.f32 %v1613, %v1669
      %v1694 = vadd.f32 %v1614, %v1670
      %v1695 = vadd.f32 %v1615, %v1671
      %v1696 = vadd.f32 %v1616, %v1672
      %v1697 = vadd.f32 %v1617, %v1673
      %v1698 = vadd.f32 %v1618, %v1674
      %v1699 = vadd.f32 %v1619, %v1675
      %v1700 = vadd.f32 %v1620, %v1676
      %v1701 = vadd.f32 %v1621, %v1677
      %v1702 = vadd.f32 %v1622, %v1678
      %v1703 = vadd.f32 %v1623, %v1679
      %v1704 = vadd.f32 %v1624, %v1680
      %vm1705 = vcmask 146432
      %v1707 = vsel %vm1705, %v805, 0
      %v1710 = vsel %vm1705, %v806, 0
      %v1713 = vsel %vm1705, %v807, 0
      %v1716 = vsel %vm1705, %v1243, 0
      %v1719 = vsel %vm1705, %v1244, 0
      %v1722 = vsel %vm1705, %v1245, 0
      %1724 = vmatprep.subr.mxu0 0.0
      %1725 = vmatpush1.xpose.msra.mxu0 0.0
      %1726 = vmatprep.subr.mxu0 0.0
      %1727 = vmatpush1.xpose.msra.mxu0 0.0
      %1728 = vmatprep.subr.mxu0 0.0
      %1729 = vmatpush1.xpose.msra.mxu0 0.0
      %1730 = vmatprep.subr.mxu0 0.0
      %1731 = vmatpush1.xpose.msra.mxu0 0.0
      %1732 = vmatprep.subr.mxu0 0.0
      %1733 = vmatpush1.xpose.msra.mxu0 0.0
      %1734 = vmatprep.subr.mxu0 0.0
      %1735 = vmatpush1.xpose.msra.mxu0 0.0
      %1736 = vmatprep.subr.mxu0 0.0
      %1737 = vmatpush1.xpose.msra.mxu0 0.0
      %1738 = vmatprep.subr.mxu0 0.0
      %1739 = vmatpush1.xpose.msra.mxu0 0.0
      %1740 = vmatprep.subr.mxu0 0.0
      %1741 = vmatpush1.xpose.msra.mxu0 0.0
      %1742 = vmatprep.subr.mxu0 0.0
      %1743 = vmatpush1.xpose.msra.mxu0 0.0
      %1744 = vmatprep.subr.mxu0 0.0
      %1745 = vmatpush1.xpose.msra.mxu0 0.0
      %1746 = vmatprep.subr.mxu0 0.0
      %1747 = vmatpush1.xpose.msra.mxu0 0.0
      %1748 = vmatprep.subr.mxu0 0.0
      %1749 = vmatpush1.xpose.msra.mxu0 0.0
      %1750 = vmatprep.subr.mxu0 0.0
      %1751 = vmatpush1.xpose.msra.mxu0 %v1722
      %1752 = vmatprep.subr.mxu0 0.0
      %1753 = vmatpush1.xpose.msra.mxu0 %v1719
      %1754 = vmatprep.subr.mxu0 0.0
      %1755 = vmatpush1.xpose.msra.mxu0 %v1716
      %1756 = vmatprep.subr.mxu0 0.0
      %1757 = vmatpush2.xpose.msra.mxu0 0.0
      %1758 = vmatprep.subr.mxu0 0.0
      %1759 = vmatpush2.xpose.msra.mxu0 0.0
      %1760 = vmatprep.subr.mxu0 0.0
      %1761 = vmatpush2.xpose.msra.mxu0 0.0
      %1762 = vmatprep.subr.mxu0 0.0
      %1763 = vmatpush2.xpose.msra.mxu0 0.0
      %1764 = vmatprep.subr.mxu0 0.0
      %1765 = vmatpush2.xpose.msra.mxu0 0.0
      %1766 = vmatprep.subr.mxu0 0.0
      %1767 = vmatpush2.xpose.msra.mxu0 0.0
      %1768 = vmatprep.subr.mxu0 0.0
      %1769 = vmatpush2.xpose.msra.mxu0 0.0
      %1770 = vmatprep.subr.mxu0 0.0
      %1771 = vmatpush2.xpose.msra.mxu0 0.0
      %1772 = vmatprep.subr.mxu0 0.0
      %1773 = vmatpush2.xpose.msra.mxu0 0.0
      %1774 = vmatprep.subr.mxu0 0.0
      %1775 = vmatpush2.xpose.msra.mxu0 0.0
      %1776 = vmatprep.subr.mxu0 0.0
      %1777 = vmatpush2.xpose.msra.mxu0 0.0
      %1778 = vmatprep.subr.mxu0 0.0
      %1779 = vmatpush2.xpose.msra.mxu0 0.0
      %1780 = vmatprep.subr.mxu0 0.0
      %1781 = vmatpush2.xpose.msra.mxu0 0.0
      %1782 = vmatprep.subr.mxu0 0.0
      %1783 = vmatpush2.xpose.msra.mxu0 0.0
      %1784 = vmatprep.subr.mxu0 0.0
      %1785 = vmatpush2.xpose.msra.mxu0 0.0
      %1786 = vmatprep.subr.mxu0 0.0
      %1787 = vmatpush2.xpose.msra.mxu0 0.0
      %1788 = vmatprep.mubr.f32.mxu0 0.0
      %1789 = vmatmul.mubr.f32.gmra.mxu0 %v1707
      %v1790 = vpop.f32.mrf.mxu0
      %v1791 = vadd.f32 0.0, %v1790
      %v1792 = vpop.f32.mrf.mxu0
      %1793 = vmatprep.mubr.f32.mxu0 0.0
      %1794 = vmatmul.mubr.f32.gmra.mxu0 %v1710
      %v1795 = vpop.f32.mrf.mxu0
      %v1796 = vadd.f32 0.0, %v1795
      %v1797 = vpop.f32.mrf.mxu0
      %1798 = vmatprep.mubr.f32.mxu0 0.0
      %1799 = vmatmul.mubr.f32.gmra.mxu0 %v1713
      %v1800 = vpop.f32.mrf.mxu0
      %v1801 = vadd.f32 0.0, %v1800
      %v1802 = vpop.f32.mrf.mxu0
      %1803 = vdwg.mxu0
      %v1805 = vsel %vm1705, %v808, 0
      %v1808 = vsel %vm1705, %v809, 0
      %v1811 = vsel %vm1705, %v810, 0
      %v1814 = vsel %vm1705, %v1246, 0
      %v1817 = vsel %vm1705, %v1247, 0
      %v1820 = vsel %vm1705, %v1248, 0
      %1822 = vmatprep.subr.mxu0 0.0
      %1823 = vmatpush1.xpose.msra.mxu0 0.0
      %1824 = vmatprep.subr.mxu0 0.0
      %1825 = vmatpush1.xpose.msra.mxu0 0.0
      %1826 = vmatprep.subr.mxu0 0.0
      %1827 = vmatpush1.xpose.msra.mxu0 0.0
      %1828 = vmatprep.subr.mxu0 0.0
      %1829 = vmatpush1.xpose.msra.mxu0 0.0
      %1830 = vmatprep.subr.mxu0 0.0
      %1831 = vmatpush1.xpose.msra.mxu0 0.0
      %1832 = vmatprep.subr.mxu0 0.0
      %1833 = vmatpush1.xpose.msra.mxu0 0.0
      %1834 = vmatprep.subr.mxu0 0.0
      %1835 = vmatpush1.xpose.msra.mxu0 0.0
      %1836 = vmatprep.subr.mxu0 0.0
      %1837 = vmatpush1.xpose.msra.mxu0 0.0
      %1838 = vmatprep.subr.mxu0 0.0
      %1839 = vmatpush1.xpose.msra.mxu0 0.0
      %1840 = vmatprep.subr.mxu0 0.0
      %1841 = vmatpush1.xpose.msra.mxu0 0.0
      %1842 = vmatprep.subr.mxu0 0.0
      %1843 = vmatpush1.xpose.msra.mxu0 0.0
      %1844 = vmatprep.subr.mxu0 0.0
      %1845 = vmatpush1.xpose.msra.mxu0 0.0
      %1846 = vmatprep.subr.mxu0 0.0
      %1847 = vmatpush1.xpose.msra.mxu0 0.0
      %1848 = vmatprep.subr.mxu0 0.0
      %1849 = vmatpush1.xpose.msra.mxu0 %v1820
      %1850 = vmatprep.subr.mxu0 0.0
      %1851 = vmatpush1.xpose.msra.mxu0 %v1817
      %1852 = vmatprep.subr.mxu0 0.0
      %1853 = vmatpush1.xpose.msra.mxu0 %v1814
      %1854 = vmatprep.subr.mxu0 0.0
      %1855 = vmatpush2.xpose.msra.mxu0 0.0
      %1856 = vmatprep.subr.mxu0 0.0
      %1857 = vmatpush2.xpose.msra.mxu0 0.0
      %1858 = vmatprep.subr.mxu0 0.0
      %1859 = vmatpush2.xpose.msra.mxu0 0.0
      %1860 = vmatprep.subr.mxu0 0.0
      %1861 = vmatpush2.xpose.msra.mxu0 0.0
      %1862 = vmatprep.subr.mxu0 0.0
      %1863 = vmatpush2.xpose.msra.mxu0 0.0
      %1864 = vmatprep.subr.mxu0 0.0
      %1865 = vmatpush2.xpose.msra.mxu0 0.0
      %1866 = vmatprep.subr.mxu0 0.0
      %1867 = vmatpush2.xpose.msra.mxu0 0.0
      %1868 = vmatprep.subr.mxu0 0.0
      %1869 = vmatpush2.xpose.msra.mxu0 0.0
      %1870 = vmatprep.subr.mxu0 0.0
      %1871 = vmatpush2.xpose.msra.mxu0 0.0
      %1872 = vmatprep.subr.mxu0 0.0
      %1873 = vmatpush2.xpose.msra.mxu0 0.0
      %1874 = vmatprep.subr.mxu0 0.0
      %1875 = vmatpush2.xpose.msra.mxu0 0.0
      %1876 = vmatprep.subr.mxu0 0.0
      %1877 = vmatpush2.xpose.msra.mxu0 0.0
      %1878 = vmatprep.subr.mxu0 0.0
      %1879 = vmatpush2.xpose.msra.mxu0 0.0
      %1880 = vmatprep.subr.mxu0 0.0
      %1881 = vmatpush2.xpose.msra.mxu0 0.0
      %1882 = vmatprep.subr.mxu0 0.0
      %1883 = vmatpush2.xpose.msra.mxu0 0.0
      %1884 = vmatprep.subr.mxu0 0.0
      %1885 = vmatpush2.xpose.msra.mxu0 0.0
      %1886 = vmatprep.mubr.f32.mxu0 0.0
      %1887 = vmatmul.mubr.f32.gmra.mxu0 %v1805
      %v1888 = vpop.f32.mrf.mxu0
      %v1889 = vadd.f32 0.0, %v1888
      %v1890 = vpop.f32.mrf.mxu0
      %1891 = vmatprep.mubr.f32.mxu0 0.0
      %1892 = vmatmul.mubr.f32.gmra.mxu0 %v1808
      %v1893 = vpop.f32.mrf.mxu0
      %v1894 = vadd.f32 0.0, %v1893
      %v1895 = vpop.f32.mrf.mxu0
      %1896 = vmatprep.mubr.f32.mxu0 0.0
      %1897 = vmatmul.mubr.f32.gmra.mxu0 %v1811
      %v1898 = vpop.f32.mrf.mxu0
      %v1899 = vadd.f32 0.0, %v1898
      %v1900 = vpop.f32.mrf.mxu0
      %1901 = vdwg.mxu0
      %v1903 = vsel %vm1705, %v811, 0
      %v1906 = vsel %vm1705, %v812, 0
      %v1909 = vsel %vm1705, %v813, 0
      %v1912 = vsel %vm1705, %v1249, 0
      %v1915 = vsel %vm1705, %v1250, 0
      %v1918 = vsel %vm1705, %v1251, 0
      %1920 = vmatprep.subr.mxu0 0.0
      %1921 = vmatpush1.xpose.msra.mxu0 0.0
      %1922 = vmatprep.subr.mxu0 0.0
      %1923 = vmatpush1.xpose.msra.mxu0 0.0
      %1924 = vmatprep.subr.mxu0 0.0
      %1925 = vmatpush1.xpose.msra.mxu0 0.0
      %1926 = vmatprep.subr.mxu0 0.0
      %1927 = vmatpush1.xpose.msra.mxu0 0.0
      %1928 = vmatprep.subr.mxu0 0.0
      %1929 = vmatpush1.xpose.msra.mxu0 0.0
      %1930 = vmatprep.subr.mxu0 0.0
      %1931 = vmatpush1.xpose.msra.mxu0 0.0
      %1932 = vmatprep.subr.mxu0 0.0
      %1933 = vmatpush1.xpose.msra.mxu0 0.0
      %1934 = vmatprep.subr.mxu0 0.0
      %1935 = vmatpush1.xpose.msra.mxu0 0.0
      %1936 = vmatprep.subr.mxu0 0.0
      %1937 = vmatpush1.xpose.msra.mxu0 0.0
      %1938 = vmatprep.subr.mxu0 0.0
      %1939 = vmatpush1.xpose.msra.mxu0 0.0
      %1940 = vmatprep.subr.mxu0 0.0
      %1941 = vmatpush1.xpose.msra.mxu0 0.0
      %1942 = vmatprep.subr.mxu0 0.0
      %1943 = vmatpush1.xpose.msra.mxu0 0.0
      %1944 = vmatprep.subr.mxu0 0.0
      %1945 = vmatpush1.xpose.msra.mxu0 0.0
      %1946 = vmatprep.subr.mxu0 0.0
      %1947 = vmatpush1.xpose.msra.mxu0 %v1918
      %1948 = vmatprep.subr.mxu0 0.0
      %1949 = vmatpush1.xpose.msra.mxu0 %v1915
      %1950 = vmatprep.subr.mxu0 0.0
      %1951 = vmatpush1.xpose.msra.mxu0 %v1912
      %1952 = vmatprep.subr.mxu0 0.0
      %1953 = vmatpush2.xpose.msra.mxu0 0.0
      %1954 = vmatprep.subr.mxu0 0.0
      %1955 = vmatpush2.xpose.msra.mxu0 0.0
      %1956 = vmatprep.subr.mxu0 0.0
      %1957 = vmatpush2.xpose.msra.mxu0 0.0
      %1958 = vmatprep.subr.mxu0 0.0
      %1959 = vmatpush2.xpose.msra.mxu0 0.0
      %1960 = vmatprep.subr.mxu0 0.0
      %1961 = vmatpush2.xpose.msra.mxu0 0.0
      %1962 = vmatprep.subr.mxu0 0.0
      %1963 = vmatpush2.xpose.msra.mxu0 0.0
      %1964 = vmatprep.subr.mxu0 0.0
      %1965 = vmatpush2.xpose.msra.mxu0 0.0
      %1966 = vmatprep.subr.mxu0 0.0
      %1967 = vmatpush2.xpose.msra.mxu0 0.0
      %1968 = vmatprep.subr.mxu0 0.0
      %1969 = vmatpush2.xpose.msra.mxu0 0.0
      %1970 = vmatprep.subr.mxu0 0.0
      %1971 = vmatpush2.xpose.msra.mxu0 0.0
      %1972 = vmatprep.subr.mxu0 0.0
      %1973 = vmatpush2.xpose.msra.mxu0 0.0
      %1974 = vmatprep.subr.mxu0 0.0
      %1975 = vmatpush2.xpose.msra.mxu0 0.0
      %1976 = vmatprep.subr.mxu0 0.0
      %1977 = vmatpush2.xpose.msra.mxu0 0.0
      %1978 = vmatprep.subr.mxu0 0.0
      %1979 = vmatpush2.xpose.msra.mxu0 0.0
      %1980 = vmatprep.subr.mxu0 0.0
      %1981 = vmatpush2.xpose.msra.mxu0 0.0
      %1982 = vmatprep.subr.mxu0 0.0
      %1983 = vmatpush2.xpose.msra.mxu0 0.0
      %1984 = vmatprep.mubr.f32.mxu0 0.0
      %1985 = vmatmul.mubr.f32.gmra.mxu0 %v1903
      %v1986 = vpop.f32.mrf.mxu0
      %v1987 = vadd.f32 0.0, %v1986
      %v1988 = vpop.f32.mrf.mxu0
      %1989 = vmatprep.mubr.f32.mxu0 0.0
      %1990 = vmatmul.mubr.f32.gmra.mxu0 %v1906
      %v1991 = vpop.f32.mrf.mxu0
      %v1992 = vadd.f32 0.0, %v1991
      %v1993 = vpop.f32.mrf.mxu0
      %1994 = vmatprep.mubr.f32.mxu0 0.0
      %1995 = vmatmul.mubr.f32.gmra.mxu0 %v1909
      %v1996 = vpop.f32.mrf.mxu0
      %v1997 = vadd.f32 0.0, %v1996
      %v1998 = vpop.f32.mrf.mxu0
      %1999 = vdwg.mxu0
      %v2001 = vsel %vm1705, %v814, 0
      %v2004 = vsel %vm1705, %v815, 0
      %v2007 = vsel %vm1705, %v816, 0
      %v2010 = vsel %vm1705, %v1252, 0
      %v2013 = vsel %vm1705, %v1253, 0
      %v2016 = vsel %vm1705, %v1254, 0
      %2018 = vmatprep.subr.mxu0 0.0
      %2019 = vmatpush1.xpose.msra.mxu0 0.0
      %2020 = vmatprep.subr.mxu0 0.0
      %2021 = vmatpush1.xpose.msra.mxu0 0.0
      %2022 = vmatprep.subr.mxu0 0.0
      %2023 = vmatpush1.xpose.msra.mxu0 0.0
      %2024 = vmatprep.subr.mxu0 0.0
      %2025 = vmatpush1.xpose.msra.mxu0 0.0
      %2026 = vmatprep.subr.mxu0 0.0
      %2027 = vmatpush1.xpose.msra.mxu0 0.0
      %2028 = vmatprep.subr.mxu0 0.0
      %2029 = vmatpush1.xpose.msra.mxu0 0.0
      %2030 = vmatprep.subr.mxu0 0.0
      %2031 = vmatpush1.xpose.msra.mxu0 0.0
      %2032 = vmatprep.subr.mxu0 0.0
      %2033 = vmatpush1.xpose.msra.mxu0 0.0
      %2034 = vmatprep.subr.mxu0 0.0
      %2035 = vmatpush1.xpose.msra.mxu0 0.0
      %2036 = vmatprep.subr.mxu0 0.0
      %2037 = vmatpush1.xpose.msra.mxu0 0.0
      %2038 = vmatprep.subr.mxu0 0.0
      %2039 = vmatpush1.xpose.msra.mxu0 0.0
      %2040 = vmatprep.subr.mxu0 0.0
      %2041 = vmatpush1.xpose.msra.mxu0 0.0
      %2042 = vmatprep.subr.mxu0 0.0
      %2043 = vmatpush1.xpose.msra.mxu0 0.0
      %2044 = vmatprep.subr.mxu0 0.0
      %2045 = vmatpush1.xpose.msra.mxu0 %v2016
      %2046 = vmatprep.subr.mxu0 0.0
      %2047 = vmatpush1.xpose.msra.mxu0 %v2013
      %2048 = vmatprep.subr.mxu0 0.0
      %2049 = vmatpush1.xpose.msra.mxu0 %v2010
      %2050 = vmatprep.subr.mxu0 0.0
      %2051 = vmatpush2.xpose.msra.mxu0 0.0
      %2052 = vmatprep.subr.mxu0 0.0
      %2053 = vmatpush2.xpose.msra.mxu0 0.0
      %2054 = vmatprep.subr.mxu0 0.0
      %2055 = vmatpush2.xpose.msra.mxu0 0.0
      %2056 = vmatprep.subr.mxu0 0.0
      %2057 = vmatpush2.xpose.msra.mxu0 0.0
      %2058 = vmatprep.subr.mxu0 0.0
      %2059 = vmatpush2.xpose.msra.mxu0 0.0
      %2060 = vmatprep.subr.mxu0 0.0
      %2061 = vmatpush2.xpose.msra.mxu0 0.0
      %2062 = vmatprep.subr.mxu0 0.0
      %2063 = vmatpush2.xpose.msra.mxu0 0.0
      %2064 = vmatprep.subr.mxu0 0.0
      %2065 = vmatpush2.xpose.msra.mxu0 0.0
      %2066 = vmatprep.subr.mxu0 0.0
      %2067 = vmatpush2.xpose.msra.mxu0 0.0
      %2068 = vmatprep.subr.mxu0 0.0
      %2069 = vmatpush2.xpose.msra.mxu0 0.0
      %2070 = vmatprep.subr.mxu0 0.0
      %2071 = vmatpush2.xpose.msra.mxu0 0.0
      %2072 = vmatprep.subr.mxu0 0.0
      %2073 = vmatpush2.xpose.msra.mxu0 0.0
      %2074 = vmatprep.subr.mxu0 0.0
      %2075 = vmatpush2.xpose.msra.mxu0 0.0
      %2076 = vmatprep.subr.mxu0 0.0
      %2077 = vmatpush2.xpose.msra.mxu0 0.0
      %2078 = vmatprep.subr.mxu0 0.0
      %2079 = vmatpush2.xpose.msra.mxu0 0.0
      %2080 = vmatprep.subr.mxu0 0.0
      %2081 = vmatpush2.xpose.msra.mxu0 0.0
      %2082 = vmatprep.mubr.f32.mxu0 0.0
      %2083 = vmatmul.mubr.f32.gmra.mxu0 %v2001
      %v2084 = vpop.f32.mrf.mxu0
      %v2085 = vadd.f32 0.0, %v2084
      %v2086 = vpop.f32.mrf.mxu0
      %2087 = vmatprep.mubr.f32.mxu0 0.0
      %2088 = vmatmul.mubr.f32.gmra.mxu0 %v2004
      %v2089 = vpop.f32.mrf.mxu0
      %v2090 = vadd.f32 0.0, %v2089
      %v2091 = vpop.f32.mrf.mxu0
      %2092 = vmatprep.mubr.f32.mxu0 0.0
      %2093 = vmatmul.mubr.f32.gmra.mxu0 %v2007
      %v2094 = vpop.f32.mrf.mxu0
      %v2095 = vadd.f32 0.0, %v2094
      %v2096 = vpop.f32.mrf.mxu0
      %2097 = vdwg.mxu0
      %v2099 = vsel %vm1705, %v817, 0
      %v2102 = vsel %vm1705, %v818, 0
      %v2105 = vsel %vm1705, %v819, 0
      %v2108 = vsel %vm1705, %v1255, 0
      %v2111 = vsel %vm1705, %v1256, 0
      %v2114 = vsel %vm1705, %v1257, 0
      %2116 = vmatprep.subr.mxu0 0.0
      %2117 = vmatpush1.xpose.msra.mxu0 0.0
      %2118 = vmatprep.subr.mxu0 0.0
      %2119 = vmatpush1.xpose.msra.mxu0 0.0
      %2120 = vmatprep.subr.mxu0 0.0
      %2121 = vmatpush1.xpose.msra.mxu0 0.0
      %2122 = vmatprep.subr.mxu0 0.0
      %2123 = vmatpush1.xpose.msra.mxu0 0.0
      %2124 = vmatprep.subr.mxu0 0.0
      %2125 = vmatpush1.xpose.msra.mxu0 0.0
      %2126 = vmatprep.subr.mxu0 0.0
      %2127 = vmatpush1.xpose.msra.mxu0 0.0
      %2128 = vmatprep.subr.mxu0 0.0
      %2129 = vmatpush1.xpose.msra.mxu0 0.0
      %2130 = vmatprep.subr.mxu0 0.0
      %2131 = vmatpush1.xpose.msra.mxu0 0.0
      %2132 = vmatprep.subr.mxu0 0.0
      %2133 = vmatpush1.xpose.msra.mxu0 0.0
      %2134 = vmatprep.subr.mxu0 0.0
      %2135 = vmatpush1.xpose.msra.mxu0 0.0
      %2136 = vmatprep.subr.mxu0 0.0
      %2137 = vmatpush1.xpose.msra.mxu0 0.0
      %2138 = vmatprep.subr.mxu0 0.0
      %2139 = vmatpush1.xpose.msra.mxu0 0.0
      %2140 = vmatprep.subr.mxu0 0.0
      %2141 = vmatpush1.xpose.msra.mxu0 0.0
      %2142 = vmatprep.subr.mxu0 0.0
      %2143 = vmatpush1.xpose.msra.mxu0 %v2114
      %2144 = vmatprep.subr.mxu0 0.0
      %2145 = vmatpush1.xpose.msra.mxu0 %v2111
      %2146 = vmatprep.subr.mxu0 0.0
      %2147 = vmatpush1.xpose.msra.mxu0 %v2108
      %2148 = vmatprep.subr.mxu0 0.0
      %2149 = vmatpush2.xpose.msra.mxu0 0.0
      %2150 = vmatprep.subr.mxu0 0.0
      %2151 = vmatpush2.xpose.msra.mxu0 0.0
      %2152 = vmatprep.subr.mxu0 0.0
      %2153 = vmatpush2.xpose.msra.mxu0 0.0
      %2154 = vmatprep.subr.mxu0 0.0
      %2155 = vmatpush2.xpose.msra.mxu0 0.0
      %2156 = vmatprep.subr.mxu0 0.0
      %2157 = vmatpush2.xpose.msra.mxu0 0.0
      %2158 = vmatprep.subr.mxu0 0.0
      %2159 = vmatpush2.xpose.msra.mxu0 0.0
      %2160 = vmatprep.subr.mxu0 0.0
      %2161 = vmatpush2.xpose.msra.mxu0 0.0
      %2162 = vmatprep.subr.mxu0 0.0
      %2163 = vmatpush2.xpose.msra.mxu0 0.0
      %2164 = vmatprep.subr.mxu0 0.0
      %2165 = vmatpush2.xpose.msra.mxu0 0.0
      %2166 = vmatprep.subr.mxu0 0.0
      %2167 = vmatpush2.xpose.msra.mxu0 0.0
      %2168 = vmatprep.subr.mxu0 0.0
      %2169 = vmatpush2.xpose.msra.mxu0 0.0
      %2170 = vmatprep.subr.mxu0 0.0
      %2171 = vmatpush2.xpose.msra.mxu0 0.0
      %2172 = vmatprep.subr.mxu0 0.0
      %2173 = vmatpush2.xpose.msra.mxu0 0.0
      %2174 = vmatprep.subr.mxu0 0.0
      %2175 = vmatpush2.xpose.msra.mxu0 0.0
      %2176 = vmatprep.subr.mxu0 0.0
      %2177 = vmatpush2.xpose.msra.mxu0 0.0
      %2178 = vmatprep.subr.mxu0 0.0
      %2179 = vmatpush2.xpose.msra.mxu0 0.0
      %2180 = vmatprep.mubr.f32.mxu0 0.0
      %2181 = vmatmul.mubr.f32.gmra.mxu0 %v2099
      %v2182 = vpop.f32.mrf.mxu0
      %v2183 = vadd.f32 0.0, %v2182
      %v2184 = vpop.f32.mrf.mxu0
      %2185 = vmatprep.mubr.f32.mxu0 0.0
      %2186 = vmatmul.mubr.f32.gmra.mxu0 %v2102
      %v2187 = vpop.f32.mrf.mxu0
      %v2188 = vadd.f32 0.0, %v2187
      %v2189 = vpop.f32.mrf.mxu0
      %2190 = vmatprep.mubr.f32.mxu0 0.0
      %2191 = vmatmul.mubr.f32.gmra.mxu0 %v2105
      %v2192 = vpop.f32.mrf.mxu0
      %v2193 = vadd.f32 0.0, %v2192
      %v2194 = vpop.f32.mrf.mxu0
      %2195 = vdwg.mxu0
      %v2197 = vsel %vm1705, %v820, 0
      %v2200 = vsel %vm1705, %v821, 0
      %v2203 = vsel %vm1705, %v822, 0
      %v2206 = vsel %vm1705, %v1258, 0
      %v2209 = vsel %vm1705, %v1259, 0
      %v2212 = vsel %vm1705, %v1260, 0
      %2214 = vmatprep.subr.mxu0 0.0
      %2215 = vmatpush1.xpose.msra.mxu0 0.0
      %2216 = vmatprep.subr.mxu0 0.0
      %2217 = vmatpush1.xpose.msra.mxu0 0.0
      %2218 = vmatprep.subr.mxu0 0.0
      %2219 = vmatpush1.xpose.msra.mxu0 0.0
      %2220 = vmatprep.subr.mxu0 0.0
      %2221 = vmatpush1.xpose.msra.mxu0 0.0
      %2222 = vmatprep.subr.mxu0 0.0
      %2223 = vmatpush1.xpose.msra.mxu0 0.0
      %2224 = vmatprep.subr.mxu0 0.0
      %2225 = vmatpush1.xpose.msra.mxu0 0.0
      %2226 = vmatprep.subr.mxu0 0.0
      %2227 = vmatpush1.xpose.msra.mxu0 0.0
      %2228 = vmatprep.subr.mxu0 0.0
      %2229 = vmatpush1.xpose.msra.mxu0 0.0
      %2230 = vmatprep.subr.mxu0 0.0
      %2231 = vmatpush1.xpose.msra.mxu0 0.0
      %2232 = vmatprep.subr.mxu0 0.0
      %2233 = vmatpush1.xpose.msra.mxu0 0.0
      %2234 = vmatprep.subr.mxu0 0.0
      %2235 = vmatpush1.xpose.msra.mxu0 0.0
      %2236 = vmatprep.subr.mxu0 0.0
      %2237 = vmatpush1.xpose.msra.mxu0 0.0
      %2238 = vmatprep.subr.mxu0 0.0
      %2239 = vmatpush1.xpose.msra.mxu0 0.0
      %2240 = vmatprep.subr.mxu0 0.0
      %2241 = vmatpush1.xpose.msra.mxu0 %v2212
      %2242 = vmatprep.subr.mxu0 0.0
      %2243 = vmatpush1.xpose.msra.mxu0 %v2209
      %2244 = vmatprep.subr.mxu0 0.0
      %2245 = vmatpush1.xpose.msra.mxu0 %v2206
      %2246 = vmatprep.subr.mxu0 0.0
      %2247 = vmatpush2.xpose.msra.mxu0 0.0
      %2248 = vmatprep.subr.mxu0 0.0
      %2249 = vmatpush2.xpose.msra.mxu0 0.0
      %2250 = vmatprep.subr.mxu0 0.0
      %2251 = vmatpush2.xpose.msra.mxu0 0.0
      %2252 = vmatprep.subr.mxu0 0.0
      %2253 = vmatpush2.xpose.msra.mxu0 0.0
      %2254 = vmatprep.subr.mxu0 0.0
      %2255 = vmatpush2.xpose.msra.mxu0 0.0
      %2256 = vmatprep.subr.mxu0 0.0
      %2257 = vmatpush2.xpose.msra.mxu0 0.0
      %2258 = vmatprep.subr.mxu0 0.0
      %2259 = vmatpush2.xpose.msra.mxu0 0.0
      %2260 = vmatprep.subr.mxu0 0.0
      %2261 = vmatpush2.xpose.msra.mxu0 0.0
      %2262 = vmatprep.subr.mxu0 0.0
      %2263 = vmatpush2.xpose.msra.mxu0 0.0
      %2264 = vmatprep.subr.mxu0 0.0
      %2265 = vmatpush2.xpose.msra.mxu0 0.0
      %2266 = vmatprep.subr.mxu0 0.0
      %2267 = vmatpush2.xpose.msra.mxu0 0.0
      %2268 = vmatprep.subr.mxu0 0.0
      %2269 = vmatpush2.xpose.msra.mxu0 0.0
      %2270 = vmatprep.subr.mxu0 0.0
      %2271 = vmatpush2.xpose.msra.mxu0 0.0
      %2272 = vmatprep.subr.mxu0 0.0
      %2273 = vmatpush2.xpose.msra.mxu0 0.0
      %2274 = vmatprep.subr.mxu0 0.0
      %2275 = vmatpush2.xpose.msra.mxu0 0.0
      %2276 = vmatprep.subr.mxu0 0.0
      %2277 = vmatpush2.xpose.msra.mxu0 0.0
      %2278 = vmatprep.mubr.f32.mxu0 0.0
      %2279 = vmatmul.mubr.f32.gmra.mxu0 %v2197
      %v2280 = vpop.f32.mrf.mxu0
      %v2281 = vadd.f32 0.0, %v2280
      %v2282 = vpop.f32.mrf.mxu0
      %2283 = vmatprep.mubr.f32.mxu0 0.0
      %2284 = vmatmul.mubr.f32.gmra.mxu0 %v2200
      %v2285 = vpop.f32.mrf.mxu0
      %v2286 = vadd.f32 0.0, %v2285
      %v2287 = vpop.f32.mrf.mxu0
      %2288 = vmatprep.mubr.f32.mxu0 0.0
      %2289 = vmatmul.mubr.f32.gmra.mxu0 %v2203
      %v2290 = vpop.f32.mrf.mxu0
      %v2291 = vadd.f32 0.0, %v2290
      %v2292 = vpop.f32.mrf.mxu0
      %2293 = vdwg.mxu0
      %v2295 = vsel %vm1705, %v823, 0
      %v2298 = vsel %vm1705, %v824, 0
      %v2301 = vsel %vm1705, %v825, 0
      %v2304 = vsel %vm1705, %v1261, 0
      %v2307 = vsel %vm1705, %v1262, 0
      %v2310 = vsel %vm1705, %v1263, 0
      %2312 = vmatprep.subr.mxu0 0.0
      %2313 = vmatpush1.xpose.msra.mxu0 0.0
      %2314 = vmatprep.subr.mxu0 0.0
      %2315 = vmatpush1.xpose.msra.mxu0 0.0
      %2316 = vmatprep.subr.mxu0 0.0
      %2317 = vmatpush1.xpose.msra.mxu0 0.0
      %2318 = vmatprep.subr.mxu0 0.0
      %2319 = vmatpush1.xpose.msra.mxu0 0.0
      %2320 = vmatprep.subr.mxu0 0.0
      %2321 = vmatpush1.xpose.msra.mxu0 0.0
      %2322 = vmatprep.subr.mxu0 0.0
      %2323 = vmatpush1.xpose.msra.mxu0 0.0
      %2324 = vmatprep.subr.mxu0 0.0
      %2325 = vmatpush1.xpose.msra.mxu0 0.0
      %2326 = vmatprep.subr.mxu0 0.0
      %2327 = vmatpush1.xpose.msra.mxu0 0.0
      %2328 = vmatprep.subr.mxu0 0.0
      %2329 = vmatpush1.xpose.msra.mxu0 0.0
      %2330 = vmatprep.subr.mxu0 0.0
      %2331 = vmatpush1.xpose.msra.mxu0 0.0
      %2332 = vmatprep.subr.mxu0 0.0
      %2333 = vmatpush1.xpose.msra.mxu0 0.0
      %2334 = vmatprep.subr.mxu0 0.0
      %2335 = vmatpush1.xpose.msra.mxu0 0.0
      %2336 = vmatprep.subr.mxu0 0.0
      %2337 = vmatpush1.xpose.msra.mxu0 0.0
      %2338 = vmatprep.subr.mxu0 0.0
      %2339 = vmatpush1.xpose.msra.mxu0 %v2310
      %2340 = vmatprep.subr.mxu0 0.0
      %2341 = vmatpush1.xpose.msra.mxu0 %v2307
      %2342 = vmatprep.subr.mxu0 0.0
      %2343 = vmatpush1.xpose.msra.mxu0 %v2304
      %2344 = vmatprep.subr.mxu0 0.0
      %2345 = vmatpush2.xpose.msra.mxu0 0.0
      %2346 = vmatprep.subr.mxu0 0.0
      %2347 = vmatpush2.xpose.msra.mxu0 0.0
      %2348 = vmatprep.subr.mxu0 0.0
      %2349 = vmatpush2.xpose.msra.mxu0 0.0
      %2350 = vmatprep.subr.mxu0 0.0
      %2351 = vmatpush2.xpose.msra.mxu0 0.0
      %2352 = vmatprep.subr.mxu0 0.0
      %2353 = vmatpush2.xpose.msra.mxu0 0.0
      %2354 = vmatprep.subr.mxu0 0.0
      %2355 = vmatpush2.xpose.msra.mxu0 0.0
      %2356 = vmatprep.subr.mxu0 0.0
      %2357 = vmatpush2.xpose.msra.mxu0 0.0
      %2358 = vmatprep.subr.mxu0 0.0
      %2359 = vmatpush2.xpose.msra.mxu0 0.0
      %2360 = vmatprep.subr.mxu0 0.0
      %2361 = vmatpush2.xpose.msra.mxu0 0.0
      %2362 = vmatprep.subr.mxu0 0.0
      %2363 = vmatpush2.xpose.msra.mxu0 0.0
      %2364 = vmatprep.subr.mxu0 0.0
      %2365 = vmatpush2.xpose.msra.mxu0 0.0
      %2366 = vmatprep.subr.mxu0 0.0
      %2367 = vmatpush2.xpose.msra.mxu0 0.0
      %2368 = vmatprep.subr.mxu0 0.0
      %2369 = vmatpush2.xpose.msra.mxu0 0.0
      %2370 = vmatprep.subr.mxu0 0.0
      %2371 = vmatpush2.xpose.msra.mxu0 0.0
      %2372 = vmatprep.subr.mxu0 0.0
      %2373 = vmatpush2.xpose.msra.mxu0 0.0
      %2374 = vmatprep.subr.mxu0 0.0
      %2375 = vmatpush2.xpose.msra.mxu0 0.0
      %2376 = vmatprep.mubr.f32.mxu0 0.0
      %2377 = vmatmul.mubr.f32.gmra.mxu0 %v2295
      %v2378 = vpop.f32.mrf.mxu0
      %v2379 = vadd.f32 0.0, %v2378
      %v2380 = vpop.f32.mrf.mxu0
      %2381 = vmatprep.mubr.f32.mxu0 0.0
      %2382 = vmatmul.mubr.f32.gmra.mxu0 %v2298
      %v2383 = vpop.f32.mrf.mxu0
      %v2384 = vadd.f32 0.0, %v2383
      %v2385 = vpop.f32.mrf.mxu0
      %2386 = vmatprep.mubr.f32.mxu0 0.0
      %2387 = vmatmul.mubr.f32.gmra.mxu0 %v2301
      %v2388 = vpop.f32.mrf.mxu0
      %v2389 = vadd.f32 0.0, %v2388
      %v2390 = vpop.f32.mrf.mxu0
      %2391 = vdwg.mxu0
      %v2393 = vsel %vm1705, %v826, 0
      %v2396 = vsel %vm1705, %v827, 0
      %v2399 = vsel %vm1705, %v828, 0
      %v2402 = vsel %vm1705, %v1264, 0
      %v2405 = vsel %vm1705, %v1265, 0
      %v2408 = vsel %vm1705, %v1266, 0
      %2410 = vmatprep.subr.mxu0 0.0
      %2411 = vmatpush1.xpose.msra.mxu0 0.0
      %2412 = vmatprep.subr.mxu0 0.0
      %2413 = vmatpush1.xpose.msra.mxu0 0.0
      %2414 = vmatprep.subr.mxu0 0.0
      %2415 = vmatpush1.xpose.msra.mxu0 0.0
      %2416 = vmatprep.subr.mxu0 0.0
      %2417 = vmatpush1.xpose.msra.mxu0 0.0
      %2418 = vmatprep.subr.mxu0 0.0
      %2419 = vmatpush1.xpose.msra.mxu0 0.0
      %2420 = vmatprep.subr.mxu0 0.0
      %2421 = vmatpush1.xpose.msra.mxu0 0.0
      %2422 = vmatprep.subr.mxu0 0.0
      %2423 = vmatpush1.xpose.msra.mxu0 0.0
      %2424 = vmatprep.subr.mxu0 0.0
      %2425 = vmatpush1.xpose.msra.mxu0 0.0
      %2426 = vmatprep.subr.mxu0 0.0
      %2427 = vmatpush1.xpose.msra.mxu0 0.0
      %2428 = vmatprep.subr.mxu0 0.0
      %2429 = vmatpush1.xpose.msra.mxu0 0.0
      %2430 = vmatprep.subr.mxu0 0.0
      %2431 = vmatpush1.xpose.msra.mxu0 0.0
      %2432 = vmatprep.subr.mxu0 0.0
      %2433 = vmatpush1.xpose.msra.mxu0 0.0
      %2434 = vmatprep.subr.mxu0 0.0
      %2435 = vmatpush1.xpose.msra.mxu0 0.0
      %2436 = vmatprep.subr.mxu0 0.0
      %2437 = vmatpush1.xpose.msra.mxu0 %v2408
      %2438 = vmatprep.subr.mxu0 0.0
      %2439 = vmatpush1.xpose.msra.mxu0 %v2405
      %2440 = vmatprep.subr.mxu0 0.0
      %2441 = vmatpush1.xpose.msra.mxu0 %v2402
      %2442 = vmatprep.subr.mxu0 0.0
      %2443 = vmatpush2.xpose.msra.mxu0 0.0
      %2444 = vmatprep.subr.mxu0 0.0
      %2445 = vmatpush2.xpose.msra.mxu0 0.0
      %2446 = vmatprep.subr.mxu0 0.0
      %2447 = vmatpush2.xpose.msra.mxu0 0.0
      %2448 = vmatprep.subr.mxu0 0.0
      %2449 = vmatpush2.xpose.msra.mxu0 0.0
      %2450 = vmatprep.subr.mxu0 0.0
      %2451 = vmatpush2.xpose.msra.mxu0 0.0
      %2452 = vmatprep.subr.mxu0 0.0
      %2453 = vmatpush2.xpose.msra.mxu0 0.0
      %2454 = vmatprep.subr.mxu0 0.0
      %2455 = vmatpush2.xpose.msra.mxu0 0.0
      %2456 = vmatprep.subr.mxu0 0.0
      %2457 = vmatpush2.xpose.msra.mxu0 0.0
      %2458 = vmatprep.subr.mxu0 0.0
      %2459 = vmatpush2.xpose.msra.mxu0 0.0
      %2460 = vmatprep.subr.mxu0 0.0
      %2461 = vmatpush2.xpose.msra.mxu0 0.0
      %2462 = vmatprep.subr.mxu0 0.0
      %2463 = vmatpush2.xpose.msra.mxu0 0.0
      %2464 = vmatprep.subr.mxu0 0.0
      %2465 = vmatpush2.xpose.msra.mxu0 0.0
      %2466 = vmatprep.subr.mxu0 0.0
      %2467 = vmatpush2.xpose.msra.mxu0 0.0
      %2468 = vmatprep.subr.mxu0 0.0
      %2469 = vmatpush2.xpose.msra.mxu0 0.0
      %2470 = vmatprep.subr.mxu0 0.0
      %2471 = vmatpush2.xpose.msra.mxu0 0.0
      %2472 = vmatprep.subr.mxu0 0.0
      %2473 = vmatpush2.xpose.msra.mxu0 0.0
      %2474 = vmatprep.mubr.f32.mxu0 0.0
      %2475 = vmatmul.mubr.f32.gmra.mxu0 %v2393
      %v2476 = vpop.f32.mrf.mxu0
      %v2477 = vadd.f32 0.0, %v2476
      %v2478 = vpop.f32.mrf.mxu0
      %2479 = vmatprep.mubr.f32.mxu0 0.0
      %2480 = vmatmul.mubr.f32.gmra.mxu0 %v2396
      %v2481 = vpop.f32.mrf.mxu0
      %v2482 = vadd.f32 0.0, %v2481
      %v2483 = vpop.f32.mrf.mxu0
      %2484 = vmatprep.mubr.f32.mxu0 0.0
      %2485 = vmatmul.mubr.f32.gmra.mxu0 %v2399
      %v2486 = vpop.f32.mrf.mxu0
      %v2487 = vadd.f32 0.0, %v2486
      %v2488 = vpop.f32.mrf.mxu0
      %2489 = vdwg.mxu0
      %v2490 = vmul.f32 %v1791, 0.1
      %v2491 = vmul.f32 %v1796, 0.1
      %v2492 = vmul.f32 %v1801, 0.1
      %v2493 = vmul.f32 %v1889, 0.1
      %v2494 = vmul.f32 %v1894, 0.1
      %v2495 = vmul.f32 %v1899, 0.1
      %v2496 = vmul.f32 %v1987, 0.1
      %v2497 = vmul.f32 %v1992, 0.1
      %v2498 = vmul.f32 %v1997, 0.1
      %v2499 = vmul.f32 %v2085, 0.1
      %v2500 = vmul.f32 %v2090, 0.1
      %v2501 = vmul.f32 %v2095, 0.1
      %v2502 = vmul.f32 %v2183, 0.1
      %v2503 = vmul.f32 %v2188, 0.1
      %v2504 = vmul.f32 %v2193, 0.1
      %v2505 = vmul.f32 %v2281, 0.1
      %v2506 = vmul.f32 %v2286, 0.1
      %v2507 = vmul.f32 %v2291, 0.1
      %v2508 = vmul.f32 %v2379, 0.1
      %v2509 = vmul.f32 %v2384, 0.1
      %v2510 = vmul.f32 %v2389, 0.1
      %v2511 = vmul.f32 %v2477, 0.1
      %v2512 = vmul.f32 %v2482, 0.1
      %v2513 = vmul.f32 %v2487, 0.1
      %v2514 = vsel %vm1705, %v2490, -inf
      %2515 = vmax.xlane.f32.xlu0 %v2514
      %v2516 = vpop.xlane.xlu0 %2515
      %v2517 = vsel %vm1705, %v2491, -inf
      %2518 = vmax.xlane.f32.xlu0 %v2517
      %v2519 = vpop.xlane.xlu0 %2518
      %vm2520 = vcmask 140288
      %v2521 = vsel %vm2520, %v2492, -inf
      %2522 = vmax.xlane.f32.xlu0 %v2521
      %v2523 = vpop.xlane.xlu0 %2522
      %v2524 = vsel %vm1705, %v2493, -inf
      %2525 = vmax.xlane.f32.xlu0 %v2524
      %v2526 = vpop.xlane.xlu0 %2525
      %v2527 = vsel %vm1705, %v2494, -inf
      %2528 = vmax.xlane.f32.xlu0 %v2527
      %v2529 = vpop.xlane.xlu0 %2528
      %v2530 = vsel %vm2520, %v2495, -inf
      %2531 = vmax.xlane.f32.xlu0 %v2530
      %v2532 = vpop.xlane.xlu0 %2531
      %v2533 = vsel %vm1705, %v2496, -inf
      %2534 = vmax.xlane.f32.xlu0 %v2533
      %v2535 = vpop.xlane.xlu0 %2534
      %v2536 = vsel %vm1705, %v2497, -inf
      %2537 = vmax.xlane.f32.xlu0 %v2536
      %v2538 = vpop.xlane.xlu0 %2537
      %v2539 = vsel %vm2520, %v2498, -inf
      %2540 = vmax.xlane.f32.xlu0 %v2539
      %v2541 = vpop.xlane.xlu0 %2540
      %v2542 = vsel %vm1705, %v2499, -inf
      %2543 = vmax.xlane.f32.xlu0 %v2542
      %v2544 = vpop.xlane.xlu0 %2543
      %v2545 = vsel %vm1705, %v2500, -inf
      %2546 = vmax.xlane.f32.xlu0 %v2545
      %v2547 = vpop.xlane.xlu0 %2546
      %v2548 = vsel %vm2520, %v2501, -inf
      %2549 = vmax.xlane.f32.xlu0 %v2548
      %v2550 = vpop.xlane.xlu0 %2549
      %v2551 = vsel %vm1705, %v2502, -inf
      %2552 = vmax.xlane.f32.xlu0 %v2551
      %v2553 = vpop.xlane.xlu0 %2552
      %v2554 = vsel %vm1705, %v2503, -inf
      %2555 = vmax.xlane.f32.xlu0 %v2554
      %v2556 = vpop.xlane.xlu0 %2555
      %v2557 = vsel %vm2520, %v2504, -inf
      %2558 = vmax.xlane.f32.xlu0 %v2557
      %v2559 = vpop.xlane.xlu0 %2558
      %v2560 = vsel %vm1705, %v2505, -inf
      %2561 = vmax.xlane.f32.xlu0 %v2560
      %v2562 = vpop.xlane.xlu0 %2561
      %v2563 = vsel %vm1705, %v2506, -inf
      %2564 = vmax.xlane.f32.xlu0 %v2563
      %v2565 = vpop.xlane.xlu0 %2564
      %v2566 = vsel %vm2520, %v2507, -inf
      %2567 = vmax.xlane.f32.xlu0 %v2566
      %v2568 = vpop.xlane.xlu0 %2567
      %v2569 = vsel %vm1705, %v2508, -inf
      %2570 = vmax.xlane.f32.xlu0 %v2569
      %v2571 = vpop.xlane.xlu0 %2570
      %v2572 = vsel %vm1705, %v2509, -inf
      %2573 = vmax.xlane.f32.xlu0 %v2572
      %v2574 = vpop.xlane.xlu0 %2573
      %v2575 = vsel %vm2520, %v2510, -inf
      %2576 = vmax.xlane.f32.xlu0 %v2575
      %v2577 = vpop.xlane.xlu0 %2576
      %v2578 = vsel %vm1705, %v2511, -inf
      %2579 = vmax.xlane.f32.xlu0 %v2578
      %v2580 = vpop.xlane.xlu0 %2579
      %v2581 = vsel %vm1705, %v2512, -inf
      %2582 = vmax.xlane.f32.xlu0 %v2581
      %v2583 = vpop.xlane.xlu0 %2582
      %v2584 = vsel %vm2520, %v2513, -inf
      %2585 = vmax.xlane.f32.xlu0 %v2584
      %v2586 = vpop.xlane.xlu0 %2585
      %v2587 = vsub.f32 %v2490, %v2516
      %v2588 = vsub.f32 %v2491, %v2519
      %v2589 = vsub.f32 %v2492, %v2523
      %v2590 = vsub.f32 %v2493, %v2526
      %v2591 = vsub.f32 %v2494, %v2529
      %v2592 = vsub.f32 %v2495, %v2532
      %v2593 = vsub.f32 %v2496, %v2535
      %v2594 = vsub.f32 %v2497, %v2538
      %v2595 = vsub.f32 %v2498, %v2541
      %v2596 = vsub.f32 %v2499, %v2544
      %v2597 = vsub.f32 %v2500, %v2547
      %v2598 = vsub.f32 %v2501, %v2550
      %v2599 = vsub.f32 %v2502, %v2553
      %v2600 = vsub.f32 %v2503, %v2556
      %v2601 = vsub.f32 %v2504, %v2559
      %v2602 = vsub.f32 %v2505, %v2562
      %v2603 = vsub.f32 %v2506, %v2565
      %v2604 = vsub.f32 %v2507, %v2568
      %v2605 = vsub.f32 %v2508, %v2571
      %v2606 = vsub.f32 %v2509, %v2574
      %v2607 = vsub.f32 %v2510, %v2577
      %v2608 = vsub.f32 %v2511, %v2580
      %v2609 = vsub.f32 %v2512, %v2583
      %v2610 = vsub.f32 %v2513, %v2586
      %v2611 = vmul.f32 %v2587, 1.442695
      %v2612 = vpow.pop %v2611
      %v2613 = vmul.f32 %v2588, 1.442695
      %v2614 = vpow.pop %v2613
      %v2615 = vmul.f32 %v2589, 1.442695
      %v2616 = vpow.pop %v2615
      %v2617 = vmul.f32 %v2590, 1.442695
      %v2618 = vpow.pop %v2617
      %v2619 = vmul.f32 %v2591, 1.442695
      %v2620 = vpow.pop %v2619
      %v2621 = vmul.f32 %v2592, 1.442695
      %v2622 = vpow.pop %v2621
      %v2623 = vmul.f32 %v2593, 1.442695
      %v2624 = vpow.pop %v2623
      %v2625 = vmul.f32 %v2594, 1.442695
      %v2626 = vpow.pop %v2625
      %v2627 = vmul.f32 %v2595, 1.442695
      %v2628 = vpow.pop %v2627
      %v2629 = vmul.f32 %v2596, 1.442695
      %v2630 = vpow.pop %v2629
      %v2631 = vmul.f32 %v2597, 1.442695
      %v2632 = vpow.pop %v2631
      %v2633 = vmul.f32 %v2598, 1.442695
      %v2634 = vpow.pop %v2633
      %v2635 = vmul.f32 %v2599, 1.442695
      %v2636 = vpow.pop %v2635
      %v2637 = vmul.f32 %v2600, 1.442695
      %v2638 = vpow.pop %v2637
      %v2639 = vmul.f32 %v2601, 1.442695
      %v2640 = vpow.pop %v2639
      %v2641 = vmul.f32 %v2602, 1.442695
      %v2642 = vpow.pop %v2641
      %v2643 = vmul.f32 %v2603, 1.442695
      %v2644 = vpow.pop %v2643
      %v2645 = vmul.f32 %v2604, 1.442695
      %v2646 = vpow.pop %v2645
      %v2647 = vmul.f32 %v2605, 1.442695
      %v2648 = vpow.pop %v2647
      %v2649 = vmul.f32 %v2606, 1.442695
      %v2650 = vpow.pop %v2649
      %v2651 = vmul.f32 %v2607, 1.442695
      %v2652 = vpow.pop %v2651
      %v2653 = vmul.f32 %v2608, 1.442695
      %v2654 = vpow.pop %v2653
      %v2655 = vmul.f32 %v2609, 1.442695
      %v2656 = vpow.pop %v2655
      %v2657 = vmul.f32 %v2610, 1.442695
      %v2658 = vpow.pop %v2657
      %v2659 = vsel %vm1705, %v2612, 0.0
      %2660 = vadd.xlane.f32.xlu0 %v2659
      %v2661 = vpop.xlane.xlu0 %2660
      %v2662 = vsel %vm1705, %v2614, 0.0
      %2663 = vadd.xlane.f32.xlu0 %v2662
      %v2664 = vpop.xlane.xlu0 %2663
      %v2665 = vsel %vm2520, %v2616, 0.0
      %2666 = vadd.xlane.f32.xlu0 %v2665
      %v2667 = vpop.xlane.xlu0 %2666
      %v2668 = vsel %vm1705, %v2618, 0.0
      %2669 = vadd.xlane.f32.xlu0 %v2668
      %v2670 = vpop.xlane.xlu0 %2669
      %v2671 = vsel %vm1705, %v2620, 0.0
      %2672 = vadd.xlane.f32.xlu0 %v2671
      %v2673 = vpop.xlane.xlu0 %2672
      %v2674 = vsel %vm2520, %v2622, 0.0
      %2675 = vadd.xlane.f32.xlu0 %v2674
      %v2676 = vpop.xlane.xlu0 %2675
      %v2677 = vsel %vm1705, %v2624, 0.0
      %2678 = vadd.xlane.f32.xlu0 %v2677
      %v2679 = vpop.xlane.xlu0 %2678
      %v2680 = vsel %vm1705, %v2626, 0.0
      %2681 = vadd.xlane.f32.xlu0 %v2680
      %v2682 = vpop.xlane.xlu0 %2681
      %v2683 = vsel %vm2520, %v2628, 0.0
      %2684 = vadd.xlane.f32.xlu0 %v2683
      %v2685 = vpop.xlane.xlu0 %2684
      %v2686 = vsel %vm1705, %v2630, 0.0
      %2687 = vadd.xlane.f32.xlu0 %v2686
      %v2688 = vpop.xlane.xlu0 %2687
      %v2689 = vsel %vm1705, %v2632, 0.0
      %2690 = vadd.xlane.f32.xlu0 %v2689
      %v2691 = vpop.xlane.xlu0 %2690
      %v2692 = vsel %vm2520, %v2634, 0.0
      %2693 = vadd.xlane.f32.xlu0 %v2692
      %v2694 = vpop.xlane.xlu0 %2693
      %v2695 = vsel %vm1705, %v2636, 0.0
      %2696 = vadd.xlane.f32.xlu0 %v2695
      %v2697 = vpop.xlane.xlu0 %2696
      %v2698 = vsel %vm1705, %v2638, 0.0
      %2699 = vadd.xlane.f32.xlu0 %v2698
      %v2700 = vpop.xlane.xlu0 %2699
      %v2701 = vsel %vm2520, %v2640, 0.0
      %2702 = vadd.xlane.f32.xlu0 %v2701
      %v2703 = vpop.xlane.xlu0 %2702
      %v2704 = vsel %vm1705, %v2642, 0.0
      %2705 = vadd.xlane.f32.xlu0 %v2704
      %v2706 = vpop.xlane.xlu0 %2705
      %v2707 = vsel %vm1705, %v2644, 0.0
      %2708 = vadd.xlane.f32.xlu0 %v2707
      %v2709 = vpop.xlane.xlu0 %2708
      %v2710 = vsel %vm2520, %v2646, 0.0
      %2711 = vadd.xlane.f32.xlu0 %v2710
      %v2712 = vpop.xlane.xlu0 %2711
      %v2713 = vsel %vm1705, %v2648, 0.0
      %2714 = vadd.xlane.f32.xlu0 %v2713
      %v2715 = vpop.xlane.xlu0 %2714
      %v2716 = vsel %vm1705, %v2650, 0.0
      %2717 = vadd.xlane.f32.xlu0 %v2716
      %v2718 = vpop.xlane.xlu0 %2717
      %v2719 = vsel %vm2520, %v2652, 0.0
      %2720 = vadd.xlane.f32.xlu0 %v2719
      %v2721 = vpop.xlane.xlu0 %2720
      %v2722 = vsel %vm1705, %v2654, 0.0
      %2723 = vadd.xlane.f32.xlu0 %v2722
      %v2724 = vpop.xlane.xlu0 %2723
      %v2725 = vsel %vm1705, %v2656, 0.0
      %2726 = vadd.xlane.f32.xlu0 %v2725
      %v2727 = vpop.xlane.xlu0 %2726
      %v2728 = vsel %vm2520, %v2658, 0.0
      %2729 = vadd.xlane.f32.xlu0 %v2728
      %v2730 = vpop.xlane.xlu0 %2729
      %v2731 = vrcp.pop %v2661
      %v2732 = vmul.f32 %v2612, %v2731
      %v2733 = vrcp.pop %v2664
      %v2734 = vmul.f32 %v2614, %v2733
      %v2735 = vrcp.pop %v2667
      %v2736 = vmul.f32 %v2616, %v2735
      %v2737 = vrcp.pop %v2670
      %v2738 = vmul.f32 %v2618, %v2737
      %v2739 = vrcp.pop %v2673
      %v2740 = vmul.f32 %v2620, %v2739
      %v2741 = vrcp.pop %v2676
      %v2742 = vmul.f32 %v2622, %v2741
      %v2743 = vrcp.pop %v2679
      %v2744 = vmul.f32 %v2624, %v2743
      %v2745 = vrcp.pop %v2682
      %v2746 = vmul.f32 %v2626, %v2745
      %v2747 = vrcp.pop %v2685
      %v2748 = vmul.f32 %v2628, %v2747
      %v2749 = vrcp.pop %v2688
      %v2750 = vmul.f32 %v2630, %v2749
      %v2751 = vrcp.pop %v2691
      %v2752 = vmul.f32 %v2632, %v2751
      %v2753 = vrcp.pop %v2694
      %v2754 = vmul.f32 %v2634, %v2753
      %v2755 = vrcp.pop %v2697
      %v2756 = vmul.f32 %v2636, %v2755
      %v2757 = vrcp.pop %v2700
      %v2758 = vmul.f32 %v2638, %v2757
      %v2759 = vrcp.pop %v2703
      %v2760 = vmul.f32 %v2640, %v2759
      %v2761 = vrcp.pop %v2706
      %v2762 = vmul.f32 %v2642, %v2761
      %v2763 = vrcp.pop %v2709
      %v2764 = vmul.f32 %v2644, %v2763
      %v2765 = vrcp.pop %v2712
      %v2766 = vmul.f32 %v2646, %v2765
      %v2767 = vrcp.pop %v2715
      %v2768 = vmul.f32 %v2648, %v2767
      %v2769 = vrcp.pop %v2718
      %v2770 = vmul.f32 %v2650, %v2769
      %v2771 = vrcp.pop %v2721
      %v2772 = vmul.f32 %v2652, %v2771
      %v2773 = vrcp.pop %v2724
      %v2774 = vmul.f32 %v2654, %v2773
      %v2775 = vrcp.pop %v2727
      %v2776 = vmul.f32 %v2656, %v2775
      %v2777 = vrcp.pop %v2730
      %v2778 = vmul.f32 %v2658, %v2777
      %v2779 = vld [vmem:[%s367] sm:$0xff]
      %v2780 = vld [vmem:[%s367 + $0x8] sm:$0xff]
      %v2781 = vld [vmem:[%s367 + $0x10] sm:$0x3]
      %v2782 = vld [vmem:[%s367 + $0x18] sm:$0xff]
      %v2783 = vld [vmem:[%s367 + $0x20] sm:$0xff]
      %v2784 = vld [vmem:[%s367 + $0x28] sm:$0x3]
      %v2785 = vld [vmem:[%s367 + $0x30] sm:$0xff]
      %v2786 = vld [vmem:[%s367 + $0x38] sm:$0xff]
      %v2787 = vld [vmem:[%s367 + $0x40] sm:$0x3]
      %v2788 = vld [vmem:[%s367 + $0x48] sm:$0xff]
      %v2789 = vld [vmem:[%s367 + $0x50] sm:$0xff]
      %v2790 = vld [vmem:[%s367 + $0x58] sm:$0x3]
      %v2791 = vld [vmem:[%s367 + $0x60] sm:$0xff]
      %v2792 = vld [vmem:[%s367 + $0x68] sm:$0xff]
      %v2793 = vld [vmem:[%s367 + $0x70] sm:$0x3]
      %v2794 = vld [vmem:[%s367 + $0x78] sm:$0xff]
      %v2795 = vld [vmem:[%s367 + $0x80] sm:$0xff]
      %v2796 = vld [vmem:[%s367 + $0x88] sm:$0x3]
      %v2797 = vld [vmem:[%s367 + $0x90] sm:$0xff]
      %v2798 = vld [vmem:[%s367 + $0x98] sm:$0xff]
      %v2799 = vld [vmem:[%s367 + $0xa0] sm:$0x3]
      %v2800 = vld [vmem:[%s367 + $0xa8] sm:$0xff]
      %v2801 = vld [vmem:[%s367 + $0xb0] sm:$0xff]
      %v2802 = vld [vmem:[%s367 + $0xb8] sm:$0x3]
      %vm2803 = vcmp.lt.f32.partialorder %v2779, 0.5
      %vm2804 = vcmp.lt.f32.partialorder %v2780, 0.5
      %vm2805 = vcmp.lt.f32.partialorder %v2781, 0.5
      %vm2806 = vcmp.lt.f32.partialorder %v2782, 0.5
      %vm2807 = vcmp.lt.f32.partialorder %v2783, 0.5
      %vm2808 = vcmp.lt.f32.partialorder %v2784, 0.5
      %vm2809 = vcmp.lt.f32.partialorder %v2785, 0.5
      %vm2810 = vcmp.lt.f32.partialorder %v2786, 0.5
      %vm2811 = vcmp.lt.f32.partialorder %v2787, 0.5
      %vm2812 = vcmp.lt.f32.partialorder %v2788, 0.5
      %vm2813 = vcmp.lt.f32.partialorder %v2789, 0.5
      %vm2814 = vcmp.lt.f32.partialorder %v2790, 0.5
      %vm2815 = vcmp.lt.f32.partialorder %v2791, 0.5
      %vm2816 = vcmp.lt.f32.partialorder %v2792, 0.5
      %vm2817 = vcmp.lt.f32.partialorder %v2793, 0.5
      %vm2818 = vcmp.lt.f32.partialorder %v2794, 0.5
      %vm2819 = vcmp.lt.f32.partialorder %v2795, 0.5
      %vm2820 = vcmp.lt.f32.partialorder %v2796, 0.5
      %vm2821 = vcmp.lt.f32.partialorder %v2797, 0.5
      %vm2822 = vcmp.lt.f32.partialorder %v2798, 0.5
      %vm2823 = vcmp.lt.f32.partialorder %v2799, 0.5
      %vm2824 = vcmp.lt.f32.partialorder %v2800, 0.5
      %vm2825 = vcmp.lt.f32.partialorder %v2801, 0.5
      %vm2826 = vcmp.lt.f32.partialorder %v2802, 0.5
      %v2827 = vmul.f32 %v2732, 2.0
      %v2828 = vmul.f32 %v2734, 2.0
      %v2829 = vmul.f32 %v2736, 2.0
      %v2830 = vmul.f32 %v2738, 2.0
      %v2831 = vmul.f32 %v2740, 2.0
      %v2832 = vmul.f32 %v2742, 2.0
      %v2833 = vmul.f32 %v2744, 2.0
      %v2834 = vmul.f32 %v2746, 2.0
      %v2835 = vmul.f32 %v2748, 2.0
      %v2836 = vmul.f32 %v2750, 2.0
      %v2837 = vmul.f32 %v2752, 2.0
      %v2838 = vmul.f32 %v2754, 2.0
      %v2839 = vmul.f32 %v2756, 2.0
      %v2840 = vmul.f32 %v2758, 2.0
      %v2841 = vmul.f32 %v2760, 2.0
      %v2842 = vmul.f32 %v2762, 2.0
      %v2843 = vmul.f32 %v2764, 2.0
      %v2844 = vmul.f32 %v2766, 2.0
      %v2845 = vmul.f32 %v2768, 2.0
      %v2846 = vmul.f32 %v2770, 2.0
      %v2847 = vmul.f32 %v2772, 2.0
      %v2848 = vmul.f32 %v2774, 2.0
      %v2849 = vmul.f32 %v2776, 2.0
      %v2850 = vmul.f32 %v2778, 2.0
      %v2851 = vsel %vm2803, %v2827, 0.0
      %v2852 = vsel %vm2804, %v2828, 0.0
      %v2853 = vsel %vm2805, %v2829, 0.0
      %v2854 = vsel %vm2806, %v2830, 0.0
      %v2855 = vsel %vm2807, %v2831, 0.0
      %v2856 = vsel %vm2808, %v2832, 0.0
      %v2857 = vsel %vm2809, %v2833, 0.0
      %v2858 = vsel %vm2810, %v2834, 0.0
      %v2859 = vsel %vm2811, %v2835, 0.0
      %v2860 = vsel %vm2812, %v2836, 0.0
      %v2861 = vsel %vm2813, %v2837, 0.0
      %v2862 = vsel %vm2814, %v2838, 0.0
      %v2863 = vsel %vm2815, %v2839, 0.0
      %v2864 = vsel %vm2816, %v2840, 0.0
      %v2865 = vsel %vm2817, %v2841, 0.0
      %v2866 = vsel %vm2818, %v2842, 0.0
      %v2867 = vsel %vm2819, %v2843, 0.0
      %v2868 = vsel %vm2820, %v2844, 0.0
      %v2869 = vsel %vm2821, %v2845, 0.0
      %v2870 = vsel %vm2822, %v2846, 0.0
      %v2871 = vsel %vm2823, %v2847, 0.0
      %v2872 = vsel %vm2824, %v2848, 0.0
      %v2873 = vsel %vm2825, %v2849, 0.0
      %v2874 = vsel %vm2826, %v2850, 0.0
      %v2876 = vsel %vm1705, %v2851, 0
      %v2879 = vsel %vm1705, %v2852, 0
      %v2882 = vsel %vm1705, %v2853, 0
      %vm2884 = vcmask 1041408
      %v2886 = vsel %vm2884, %v1683, 0
      %2888 = vmatprep.subr.mxu0 0.0
      %2889 = vmatpush1.msra.mxu0 0.0
      %2890 = vmatprep.subr.mxu0 0.0
      %2891 = vmatpush1.msra.mxu0 0.0
      %2892 = vmatprep.subr.mxu0 0.0
      %2893 = vmatpush1.msra.mxu0 0.0
      %2894 = vmatprep.subr.mxu0 0.0
      %2895 = vmatpush1.msra.mxu0 0.0
      %2896 = vmatprep.subr.mxu0 0.0
      %2897 = vmatpush1.msra.mxu0 0.0
      %2898 = vmatprep.subr.mxu0 0.0
      %2899 = vmatpush1.msra.mxu0 0.0
      %2900 = vmatprep.subr.mxu0 0.0
      %2901 = vmatpush1.msra.mxu0 0.0
      %2902 = vmatprep.subr.mxu0 0.0
      %2903 = vmatpush1.msra.mxu0 0.0
      %2904 = vmatprep.subr.mxu0 0.0
      %2905 = vmatpush1.msra.mxu0 0.0
      %2906 = vmatprep.subr.mxu0 0.0
      %2907 = vmatpush1.msra.mxu0 0.0
      %2908 = vmatprep.subr.mxu0 0.0
      %2909 = vmatpush1.msra.mxu0 0.0
      %2910 = vmatprep.subr.mxu0 0.0
      %2911 = vmatpush1.msra.mxu0 0.0
      %2912 = vmatprep.subr.mxu0 0.0
      %2913 = vmatpush1.msra.mxu0 0.0
      %2914 = vmatprep.subr.mxu0 0.0
      %2915 = vmatpush1.msra.mxu0 %v2886
      %2916 = vmatprep.subr.mxu0 0.0
      %2917 = vmatpush1.msra.mxu0 %v1682
      %2918 = vmatprep.subr.mxu0 0.0
      %2919 = vmatpush1.msra.mxu0 %v1681
      %2920 = vmatprep.subr.mxu0 0.0
      %2921 = vmatpush2.msra.mxu0 0.0
      %2922 = vmatprep.subr.mxu0 0.0
      %2923 = vmatpush2.msra.mxu0 0.0
      %2924 = vmatprep.subr.mxu0 0.0
      %2925 = vmatpush2.msra.mxu0 0.0
      %2926 = vmatprep.subr.mxu0 0.0
      %2927 = vmatpush2.msra.mxu0 0.0
      %2928 = vmatprep.subr.mxu0 0.0
      %2929 = vmatpush2.msra.mxu0 0.0
      %2930 = vmatprep.subr.mxu0 0.0
      %2931 = vmatpush2.msra.mxu0 0.0
      %2932 = vmatprep.subr.mxu0 0.0
      %2933 = vmatpush2.msra.mxu0 0.0
      %2934 = vmatprep.subr.mxu0 0.0
      %2935 = vmatpush2.msra.mxu0 0.0
      %2936 = vmatprep.subr.mxu0 0.0
      %2937 = vmatpush2.msra.mxu0 0.0
      %2938 = vmatprep.subr.mxu0 0.0
      %2939 = vmatpush2.msra.mxu0 0.0
      %2940 = vmatprep.subr.mxu0 0.0
      %2941 = vmatpush2.msra.mxu0 0.0
      %2942 = vmatprep.subr.mxu0 0.0
      %2943 = vmatpush2.msra.mxu0 0.0
      %2944 = vmatprep.subr.mxu0 0.0
      %2945 = vmatpush2.msra.mxu0 0.0
      %2946 = vmatprep.subr.mxu0 0.0
      %2947 = vmatpush2.msra.mxu0 0.0
      %2948 = vmatprep.subr.mxu0 0.0
      %2949 = vmatpush2.msra.mxu0 0.0
      %2950 = vmatprep.subr.mxu0 0.0
      %2951 = vmatpush2.msra.mxu0 0.0
      %2952 = vmatprep.mubr.f32.mxu0 0.0
      %2953 = vmatmul.mubr.f32.gmra.mxu0 %v2876
      %v2954 = vpop.f32.mrf.mxu0
      %v2955 = vadd.f32 0.0, %v2954
      %v2956 = vpop.f32.mrf.mxu0
      %2957 = vmatprep.mubr.f32.mxu0 0.0
      %2958 = vmatmul.mubr.f32.gmra.mxu0 %v2879
      %v2959 = vpop.f32.mrf.mxu0
      %v2960 = vadd.f32 0.0, %v2959
      %v2961 = vpop.f32.mrf.mxu0
      %2962 = vmatprep.mubr.f32.mxu0 0.0
      %2963 = vmatmul.mubr.f32.gmra.mxu0 %v2882
      %v2964 = vpop.f32.mrf.mxu0
      %v2965 = vadd.f32 0.0, %v2964
      %v2966 = vpop.f32.mrf.mxu0
      %2967 = vdwg.mxu0
      %v2969 = vsel %vm1705, %v2854, 0
      %v2972 = vsel %vm1705, %v2855, 0
      %v2975 = vsel %vm1705, %v2856, 0
      %v2978 = vsel %vm2884, %v1686, 0
      %2980 = vmatprep.subr.mxu0 0.0
      %2981 = vmatpush1.msra.mxu0 0.0
      %2982 = vmatprep.subr.mxu0 0.0
      %2983 = vmatpush1.msra.mxu0 0.0
      %2984 = vmatprep.subr.mxu0 0.0
      %2985 = vmatpush1.msra.mxu0 0.0
      %2986 = vmatprep.subr.mxu0 0.0
      %2987 = vmatpush1.msra.mxu0 0.0
      %2988 = vmatprep.subr.mxu0 0.0
      %2989 = vmatpush1.msra.mxu0 0.0
      %2990 = vmatprep.subr.mxu0 0.0
      %2991 = vmatpush1.msra.mxu0 0.0
      %2992 = vmatprep.subr.mxu0 0.0
      %2993 = vmatpush1.msra.mxu0 0.0
      %2994 = vmatprep.subr.mxu0 0.0
      %2995 = vmatpush1.msra.mxu0 0.0
      %2996 = vmatprep.subr.mxu0 0.0
      %2997 = vmatpush1.msra.mxu0 0.0
      %2998 = vmatprep.subr.mxu0 0.0
      %2999 = vmatpush1.msra.mxu0 0.0
      %3000 = vmatprep.subr.mxu0 0.0
      %3001 = vmatpush1.msra.mxu0 0.0
      %3002 = vmatprep.subr.mxu0 0.0
      %3003 = vmatpush1.msra.mxu0 0.0
      %3004 = vmatprep.subr.mxu0 0.0
      %3005 = vmatpush1.msra.mxu0 0.0
      %3006 = vmatprep.subr.mxu0 0.0
      %3007 = vmatpush1.msra.mxu0 %v2978
      %3008 = vmatprep.subr.mxu0 0.0
      %3009 = vmatpush1.msra.mxu0 %v1685
      %3010 = vmatprep.subr.mxu0 0.0
      %3011 = vmatpush1.msra.mxu0 %v1684
      %3012 = vmatprep.subr.mxu0 0.0
      %3013 = vmatpush2.msra.mxu0 0.0
      %3014 = vmatprep.subr.mxu0 0.0
      %3015 = vmatpush2.msra.mxu0 0.0
      %3016 = vmatprep.subr.mxu0 0.0
      %3017 = vmatpush2.msra.mxu0 0.0
      %3018 = vmatprep.subr.mxu0 0.0
      %3019 = vmatpush2.msra.mxu0 0.0
      %3020 = vmatprep.subr.mxu0 0.0
      %3021 = vmatpush2.msra.mxu0 0.0
      %3022 = vmatprep.subr.mxu0 0.0
      %3023 = vmatpush2.msra.mxu0 0.0
      %3024 = vmatprep.subr.mxu0 0.0
      %3025 = vmatpush2.msra.mxu0 0.0
      %3026 = vmatprep.subr.mxu0 0.0
      %3027 = vmatpush2.msra.mxu0 0.0
      %3028 = vmatprep.subr.mxu0 0.0
      %3029 = vmatpush2.msra.mxu0 0.0
      %3030 = vmatprep.subr.mxu0 0.0
      %3031 = vmatpush2.msra.mxu0 0.0
      %3032 = vmatprep.subr.mxu0 0.0
      %3033 = vmatpush2.msra.mxu0 0.0
      %3034 = vmatprep.subr.mxu0 0.0
      %3035 = vmatpush2.msra.mxu0 0.0
      %3036 = vmatprep.subr.mxu0 0.0
      %3037 = vmatpush2.msra.mxu0 0.0
      %3038 = vmatprep.subr.mxu0 0.0
      %3039 = vmatpush2.msra.mxu0 0.0
      %3040 = vmatprep.subr.mxu0 0.0
      %3041 = vmatpush2.msra.mxu0 0.0
      %3042 = vmatprep.subr.mxu0 0.0
      %3043 = vmatpush2.msra.mxu0 0.0
      %3044 = vmatprep.mubr.f32.mxu0 0.0
      %3045 = vmatmul.mubr.f32.gmra.mxu0 %v2969
      %v3046 = vpop.f32.mrf.mxu0
      %v3047 = vadd.f32 0.0, %v3046
      %v3048 = vpop.f32.mrf.mxu0
      %3049 = vmatprep.mubr.f32.mxu0 0.0
      %3050 = vmatmul.mubr.f32.gmra.mxu0 %v2972
      %v3051 = vpop.f32.mrf.mxu0
      %v3052 = vadd.f32 0.0, %v3051
      %v3053 = vpop.f32.mrf.mxu0
      %3054 = vmatprep.mubr.f32.mxu0 0.0
      %3055 = vmatmul.mubr.f32.gmra.mxu0 %v2975
      %v3056 = vpop.f32.mrf.mxu0
      %v3057 = vadd.f32 0.0, %v3056
      %v3058 = vpop.f32.mrf.mxu0
      %3059 = vdwg.mxu0
      %v3061 = vsel %vm1705, %v2857, 0
      %v3064 = vsel %vm1705, %v2858, 0
      %v3067 = vsel %vm1705, %v2859, 0
      %v3070 = vsel %vm2884, %v1689, 0
      %3072 = vmatprep.subr.mxu0 0.0
      %3073 = vmatpush1.msra.mxu0 0.0
      %3074 = vmatprep.subr.mxu0 0.0
      %3075 = vmatpush1.msra.mxu0 0.0
      %3076 = vmatprep.subr.mxu0 0.0
      %3077 = vmatpush1.msra.mxu0 0.0
      %3078 = vmatprep.subr.mxu0 0.0
      %3079 = vmatpush1.msra.mxu0 0.0
      %3080 = vmatprep.subr.mxu0 0.0
      %3081 = vmatpush1.msra.mxu0 0.0
      %3082 = vmatprep.subr.mxu0 0.0
      %3083 = vmatpush1.msra.mxu0 0.0
      %3084 = vmatprep.subr.mxu0 0.0
      %3085 = vmatpush1.msra.mxu0 0.0
      %3086 = vmatprep.subr.mxu0 0.0
      %3087 = vmatpush1.msra.mxu0 0.0
      %3088 = vmatprep.subr.mxu0 0.0
      %3089 = vmatpush1.msra.mxu0 0.0
      %3090 = vmatprep.subr.mxu0 0.0
      %3091 = vmatpush1.msra.mxu0 0.0
      %3092 = vmatprep.subr.mxu0 0.0
      %3093 = vmatpush1.msra.mxu0 0.0
      %3094 = vmatprep.subr.mxu0 0.0
      %3095 = vmatpush1.msra.mxu0 0.0
      %3096 = vmatprep.subr.mxu0 0.0
      %3097 = vmatpush1.msra.mxu0 0.0
      %3098 = vmatprep.subr.mxu0 0.0
      %3099 = vmatpush1.msra.mxu0 %v3070
      %3100 = vmatprep.subr.mxu0 0.0
      %3101 = vmatpush1.msra.mxu0 %v1688
      %3102 = vmatprep.subr.mxu0 0.0
      %3103 = vmatpush1.msra.mxu0 %v1687
      %3104 = vmatprep.subr.mxu0 0.0
      %3105 = vmatpush2.msra.mxu0 0.0
      %3106 = vmatprep.subr.mxu0 0.0
      %3107 = vmatpush2.msra.mxu0 0.0
      %3108 = vmatprep.subr.mxu0 0.0
      %3109 = vmatpush2.msra.mxu0 0.0
      %3110 = vmatprep.subr.mxu0 0.0
      %3111 = vmatpush2.msra.mxu0 0.0
      %3112 = vmatprep.subr.mxu0 0.0
      %3113 = vmatpush2.msra.mxu0 0.0
      %3114 = vmatprep.subr.mxu0 0.0
      %3115 = vmatpush2.msra.mxu0 0.0
      %3116 = vmatprep.subr.mxu0 0.0
      %3117 = vmatpush2.msra.mxu0 0.0
      %3118 = vmatprep.subr.mxu0 0.0
      %3119 = vmatpush2.msra.mxu0 0.0
      %3120 = vmatprep.subr.mxu0 0.0
      %3121 = vmatpush2.msra.mxu0 0.0
      %3122 = vmatprep.subr.mxu0 0.0
      %3123 = vmatpush2.msra.mxu0 0.0
      %3124 = vmatprep.subr.mxu0 0.0
      %3125 = vmatpush2.msra.mxu0 0.0
      %3126 = vmatprep.subr.mxu0 0.0
      %3127 = vmatpush2.msra.mxu0 0.0
      %3128 = vmatprep.subr.mxu0 0.0
      %3129 = vmatpush2.msra.mxu0 0.0
      %3130 = vmatprep.subr.mxu0 0.0
      %3131 = vmatpush2.msra.mxu0 0.0
      %3132 = vmatprep.subr.mxu0 0.0
      %3133 = vmatpush2.msra.mxu0 0.0
      %3134 = vmatprep.subr.mxu0 0.0
      %3135 = vmatpush2.msra.mxu0 0.0
      %3136 = vmatprep.mubr.f32.mxu0 0.0
      %3137 = vmatmul.mubr.f32.gmra.mxu0 %v3061
      %v3138 = vpop.f32.mrf.mxu0
      %v3139 = vadd.f32 0.0, %v3138
      %v3140 = vpop.f32.mrf.mxu0
      %3141 = vmatprep.mubr.f32.mxu0 0.0
      %3142 = vmatmul.mubr.f32.gmra.mxu0 %v3064
      %v3143 = vpop.f32.mrf.mxu0
      %v3144 = vadd.f32 0.0, %v3143
      %v3145 = vpop.f32.mrf.mxu0
      %3146 = vmatprep.mubr.f32.mxu0 0.0
      %3147 = vmatmul.mubr.f32.gmra.mxu0 %v3067
      %v3148 = vpop.f32.mrf.mxu0
      %v3149 = vadd.f32 0.0, %v3148
      %v3150 = vpop.f32.mrf.mxu0
      %3151 = vdwg.mxu0
      %v3153 = vsel %vm1705, %v2860, 0
      %v3156 = vsel %vm1705, %v2861, 0
      %v3159 = vsel %vm1705, %v2862, 0
      %v3162 = vsel %vm2884, %v1692, 0
      %3164 = vmatprep.subr.mxu0 0.0
      %3165 = vmatpush1.msra.mxu0 0.0
      %3166 = vmatprep.subr.mxu0 0.0
      %3167 = vmatpush1.msra.mxu0 0.0
      %3168 = vmatprep.subr.mxu0 0.0
      %3169 = vmatpush1.msra.mxu0 0.0
      %3170 = vmatprep.subr.mxu0 0.0
      %3171 = vmatpush1.msra.mxu0 0.0
      %3172 = vmatprep.subr.mxu0 0.0
      %3173 = vmatpush1.msra.mxu0 0.0
      %3174 = vmatprep.subr.mxu0 0.0
      %3175 = vmatpush1.msra.mxu0 0.0
      %3176 = vmatprep.subr.mxu0 0.0
      %3177 = vmatpush1.msra.mxu0 0.0
      %3178 = vmatprep.subr.mxu0 0.0
      %3179 = vmatpush1.msra.mxu0 0.0
      %3180 = vmatprep.subr.mxu0 0.0
      %3181 = vmatpush1.msra.mxu0 0.0
      %3182 = vmatprep.subr.mxu0 0.0
      %3183 = vmatpush1.msra.mxu0 0.0
      %3184 = vmatprep.subr.mxu0 0.0
      %3185 = vmatpush1.msra.mxu0 0.0
      %3186 = vmatprep.subr.mxu0 0.0
      %3187 = vmatpush1.msra.mxu0 0.0
      %3188 = vmatprep.subr.mxu0 0.0
      %3189 = vmatpush1.msra.mxu0 0.0
      %3190 = vmatprep.subr.mxu0 0.0
      %3191 = vmatpush1.msra.mxu0 %v3162
      %3192 = vmatprep.subr.mxu0 0.0
      %3193 = vmatpush1.msra.mxu0 %v1691
      %3194 = vmatprep.subr.mxu0 0.0
      %3195 = vmatpush1.msra.mxu0 %v1690
      %3196 = vmatprep.subr.mxu0 0.0
      %3197 = vmatpush2.msra.mxu0 0.0
      %3198 = vmatprep.subr.mxu0 0.0
      %3199 = vmatpush2.msra.mxu0 0.0
      %3200 = vmatprep.subr.mxu0 0.0
      %3201 = vmatpush2.msra.mxu0 0.0
      %3202 = vmatprep.subr.mxu0 0.0
      %3203 = vmatpush2.msra.mxu0 0.0
      %3204 = vmatprep.subr.mxu0 0.0
      %3205 = vmatpush2.msra.mxu0 0.0
      %3206 = vmatprep.subr.mxu0 0.0
      %3207 = vmatpush2.msra.mxu0 0.0
      %3208 = vmatprep.subr.mxu0 0.0
      %3209 = vmatpush2.msra.mxu0 0.0
      %3210 = vmatprep.subr.mxu0 0.0
      %3211 = vmatpush2.msra.mxu0 0.0
      %3212 = vmatprep.subr.mxu0 0.0
      %3213 = vmatpush2.msra.mxu0 0.0
      %3214 = vmatprep.subr.mxu0 0.0
      %3215 = vmatpush2.msra.mxu0 0.0
      %3216 = vmatprep.subr.mxu0 0.0
      %3217 = vmatpush2.msra.mxu0 0.0
      %3218 = vmatprep.subr.mxu0 0.0
      %3219 = vmatpush2.msra.mxu0 0.0
      %3220 = vmatprep.subr.mxu0 0.0
      %3221 = vmatpush2.msra.mxu0 0.0
      %3222 = vmatprep.subr.mxu0 0.0
      %3223 = vmatpush2.msra.mxu0 0.0
      %3224 = vmatprep.subr.mxu0 0.0
      %3225 = vmatpush2.msra.mxu0 0.0
      %3226 = vmatprep.subr.mxu0 0.0
      %3227 = vmatpush2.msra.mxu0 0.0
      %3228 = vmatprep.mubr.f32.mxu0 0.0
      %3229 = vmatmul.mubr.f32.gmra.mxu0 %v3153
      %v3230 = vpop.f32.mrf.mxu0
      %v3231 = vadd.f32 0.0, %v3230
      %v3232 = vpop.f32.mrf.mxu0
      %3233 = vmatprep.mubr.f32.mxu0 0.0
      %3234 = vmatmul.mubr.f32.gmra.mxu0 %v3156
      %v3235 = vpop.f32.mrf.mxu0
      %v3236 = vadd.f32 0.0, %v3235
      %v3237 = vpop.f32.mrf.mxu0
      %3238 = vmatprep.mubr.f32.mxu0 0.0
      %3239 = vmatmul.mubr.f32.gmra.mxu0 %v3159
      %v3240 = vpop.f32.mrf.mxu0
      %v3241 = vadd.f32 0.0, %v3240
      %v3242 = vpop.f32.mrf.mxu0
      %3243 = vdwg.mxu0
      %v3245 = vsel %vm1705, %v2863, 0
      %v3248 = vsel %vm1705, %v2864, 0
      %v3251 = vsel %vm1705, %v2865, 0
      %v3254 = vsel %vm2884, %v1695, 0
      %3256 = vmatprep.subr.mxu0 0.0
      %3257 = vmatpush1.msra.mxu0 0.0
      %3258 = vmatprep.subr.mxu0 0.0
      %3259 = vmatpush1.msra.mxu0 0.0
      %3260 = vmatprep.subr.mxu0 0.0
      %3261 = vmatpush1.msra.mxu0 0.0
      %3262 = vmatprep.subr.mxu0 0.0
      %3263 = vmatpush1.msra.mxu0 0.0
      %3264 = vmatprep.subr.mxu0 0.0
      %3265 = vmatpush1.msra.mxu0 0.0
      %3266 = vmatprep.subr.mxu0 0.0
      %3267 = vmatpush1.msra.mxu0 0.0
      %3268 = vmatprep.subr.mxu0 0.0
      %3269 = vmatpush1.msra.mxu0 0.0
      %3270 = vmatprep.subr.mxu0 0.0
      %3271 = vmatpush1.msra.mxu0 0.0
      %3272 = vmatprep.subr.mxu0 0.0
      %3273 = vmatpush1.msra.mxu0 0.0
      %3274 = vmatprep.subr.mxu0 0.0
      %3275 = vmatpush1.msra.mxu0 0.0
      %3276 = vmatprep.subr.mxu0 0.0
      %3277 = vmatpush1.msra.mxu0 0.0
      %3278 = vmatprep.subr.mxu0 0.0
      %3279 = vmatpush1.msra.mxu0 0.0
      %3280 = vmatprep.subr.mxu0 0.0
      %3281 = vmatpush1.msra.mxu0 0.0
      %3282 = vmatprep.subr.mxu0 0.0
      %3283 = vmatpush1.msra.mxu0 %v3254
      %3284 = vmatprep.subr.mxu0 0.0
      %3285 = vmatpush1.msra.mxu0 %v1694
      %3286 = vmatprep.subr.mxu0 0.0
      %3287 = vmatpush1.msra.mxu0 %v1693
      %3288 = vmatprep.subr.mxu0 0.0
      %3289 = vmatpush2.msra.mxu0 0.0
      %3290 = vmatprep.subr.mxu0 0.0
      %3291 = vmatpush2.msra.mxu0 0.0
      %3292 = vmatprep.subr.mxu0 0.0
      %3293 = vmatpush2.msra.mxu0 0.0
      %3294 = vmatprep.subr.mxu0 0.0
      %3295 = vmatpush2.msra.mxu0 0.0
      %3296 = vmatprep.subr.mxu0 0.0
      %3297 = vmatpush2.msra.mxu0 0.0
      %3298 = vmatprep.subr.mxu0 0.0
      %3299 = vmatpush2.msra.mxu0 0.0
      %3300 = vmatprep.subr.mxu0 0.0
      %3301 = vmatpush2.msra.mxu0 0.0
      %3302 = vmatprep.subr.mxu0 0.0
      %3303 = vmatpush2.msra.mxu0 0.0
      %3304 = vmatprep.subr.mxu0 0.0
      %3305 = vmatpush2.msra.mxu0 0.0
      %3306 = vmatprep.subr.mxu0 0.0
      %3307 = vmatpush2.msra.mxu0 0.0
      %3308 = vmatprep.subr.mxu0 0.0
      %3309 = vmatpush2.msra.mxu0 0.0
      %3310 = vmatprep.subr.mxu0 0.0
      %3311 = vmatpush2.msra.mxu0 0.0
      %3312 = vmatprep.subr.mxu0 0.0
      %3313 = vmatpush2.msra.mxu0 0.0
      %3314 = vmatprep.subr.mxu0 0.0
      %3315 = vmatpush2.msra.mxu0 0.0
      %3316 = vmatprep.subr.mxu0 0.0
      %3317 = vmatpush2.msra.mxu0 0.0
      %3318 = vmatprep.subr.mxu0 0.0
      %3319 = vmatpush2.msra.mxu0 0.0
      %3320 = vmatprep.mubr.f32.mxu0 0.0
      %3321 = vmatmul.mubr.f32.gmra.mxu0 %v3245
      %v3322 = vpop.f32.mrf.mxu0
      %v3323 = vadd.f32 0.0, %v3322
      %v3324 = vpop.f32.mrf.mxu0
      %3325 = vmatprep.mubr.f32.mxu0 0.0
      %3326 = vmatmul.mubr.f32.gmra.mxu0 %v3248
      %v3327 = vpop.f32.mrf.mxu0
      %v3328 = vadd.f32 0.0, %v3327
      %v3329 = vpop.f32.mrf.mxu0
      %3330 = vmatprep.mubr.f32.mxu0 0.0
      %3331 = vmatmul.mubr.f32.gmra.mxu0 %v3251
      %v3332 = vpop.f32.mrf.mxu0
      %v3333 = vadd.f32 0.0, %v3332
      %v3334 = vpop.f32.mrf.mxu0
      %3335 = vdwg.mxu0
      %v3337 = vsel %vm1705, %v2866, 0
      %v3340 = vsel %vm1705, %v2867, 0
      %v3343 = vsel %vm1705, %v2868, 0
      %v3346 = vsel %vm2884, %v1698, 0
      %3348 = vmatprep.subr.mxu0 0.0
      %3349 = vmatpush1.msra.mxu0 0.0
      %3350 = vmatprep.subr.mxu0 0.0
      %3351 = vmatpush1.msra.mxu0 0.0
      %3352 = vmatprep.subr.mxu0 0.0
      %3353 = vmatpush1.msra.mxu0 0.0
      %3354 = vmatprep.subr.mxu0 0.0
      %3355 = vmatpush1.msra.mxu0 0.0
      %3356 = vmatprep.subr.mxu0 0.0
      %3357 = vmatpush1.msra.mxu0 0.0
      %3358 = vmatprep.subr.mxu0 0.0
      %3359 = vmatpush1.msra.mxu0 0.0
      %3360 = vmatprep.subr.mxu0 0.0
      %3361 = vmatpush1.msra.mxu0 0.0
      %3362 = vmatprep.subr.mxu0 0.0
      %3363 = vmatpush1.msra.mxu0 0.0
      %3364 = vmatprep.subr.mxu0 0.0
      %3365 = vmatpush1.msra.mxu0 0.0
      %3366 = vmatprep.subr.mxu0 0.0
      %3367 = vmatpush1.msra.mxu0 0.0
      %3368 = vmatprep.subr.mxu0 0.0
      %3369 = vmatpush1.msra.mxu0 0.0
      %3370 = vmatprep.subr.mxu0 0.0
      %3371 = vmatpush1.msra.mxu0 0.0
      %3372 = vmatprep.subr.mxu0 0.0
      %3373 = vmatpush1.msra.mxu0 0.0
      %3374 = vmatprep.subr.mxu0 0.0
      %3375 = vmatpush1.msra.mxu0 %v3346
      %3376 = vmatprep.subr.mxu0 0.0
      %3377 = vmatpush1.msra.mxu0 %v1697
      %3378 = vmatprep.subr.mxu0 0.0
      %3379 = vmatpush1.msra.mxu0 %v1696
      %3380 = vmatprep.subr.mxu0 0.0
      %3381 = vmatpush2.msra.mxu0 0.0
      %3382 = vmatprep.subr.mxu0 0.0
      %3383 = vmatpush2.msra.mxu0 0.0
      %3384 = vmatprep.subr.mxu0 0.0
      %3385 = vmatpush2.msra.mxu0 0.0
      %3386 = vmatprep.subr.mxu0 0.0
      %3387 = vmatpush2.msra.mxu0 0.0
      %3388 = vmatprep.subr.mxu0 0.0
      %3389 = vmatpush2.msra.mxu0 0.0
      %3390 = vmatprep.subr.mxu0 0.0
      %3391 = vmatpush2.msra.mxu0 0.0
      %3392 = vmatprep.subr.mxu0 0.0
      %3393 = vmatpush2.msra.mxu0 0.0
      %3394 = vmatprep.subr.mxu0 0.0
      %3395 = vmatpush2.msra.mxu0 0.0
      %3396 = vmatprep.subr.mxu0 0.0
      %3397 = vmatpush2.msra.mxu0 0.0
      %3398 = vmatprep.subr.mxu0 0.0
      %3399 = vmatpush2.msra.mxu0 0.0
      %3400 = vmatprep.subr.mxu0 0.0
      %3401 = vmatpush2.msra.mxu0 0.0
      %3402 = vmatprep.subr.mxu0 0.0
      %3403 = vmatpush2.msra.mxu0 0.0
      %3404 = vmatprep.subr.mxu0 0.0
      %3405 = vmatpush2.msra.mxu0 0.0
      %3406 = vmatprep.subr.mxu0 0.0
      %3407 = vmatpush2.msra.mxu0 0.0
      %3408 = vmatprep.subr.mxu0 0.0
      %3409 = vmatpush2.msra.mxu0 0.0
      %3410 = vmatprep.subr.mxu0 0.0
      %3411 = vmatpush2.msra.mxu0 0.0
      %3412 = vmatprep.mubr.f32.mxu0 0.0
      %3413 = vmatmul.mubr.f32.gmra.mxu0 %v3337
      %v3414 = vpop.f32.mrf.mxu0
      %v3415 = vadd.f32 0.0, %v3414
      %v3416 = vpop.f32.mrf.mxu0
      %3417 = vmatprep.mubr.f32.mxu0 0.0
      %3418 = vmatmul.mubr.f32.gmra.mxu0 %v3340
      %v3419 = vpop.f32.mrf.mxu0
      %v3420 = vadd.f32 0.0, %v3419
      %v3421 = vpop.f32.mrf.mxu0
      %3422 = vmatprep.mubr.f32.mxu0 0.0
      %3423 = vmatmul.mubr.f32.gmra.mxu0 %v3343
      %v3424 = vpop.f32.mrf.mxu0
      %v3425 = vadd.f32 0.0, %v3424
      %v3426 = vpop.f32.mrf.mxu0
      %3427 = vdwg.mxu0
      %v3429 = vsel %vm1705, %v2869, 0
      %v3432 = vsel %vm1705, %v2870, 0
      %v3435 = vsel %vm1705, %v2871, 0
      %v3438 = vsel %vm2884, %v1701, 0
      %3440 = vmatprep.subr.mxu0 0.0
      %3441 = vmatpush1.msra.mxu0 0.0
      %3442 = vmatprep.subr.mxu0 0.0
      %3443 = vmatpush1.msra.mxu0 0.0
      %3444 = vmatprep.subr.mxu0 0.0
      %3445 = vmatpush1.msra.mxu0 0.0
      %3446 = vmatprep.subr.mxu0 0.0
      %3447 = vmatpush1.msra.mxu0 0.0
      %3448 = vmatprep.subr.mxu0 0.0
      %3449 = vmatpush1.msra.mxu0 0.0
      %3450 = vmatprep.subr.mxu0 0.0
      %3451 = vmatpush1.msra.mxu0 0.0
      %3452 = vmatprep.subr.mxu0 0.0
      %3453 = vmatpush1.msra.mxu0 0.0
      %3454 = vmatprep.subr.mxu0 0.0
      %3455 = vmatpush1.msra.mxu0 0.0
      %3456 = vmatprep.subr.mxu0 0.0
      %3457 = vmatpush1.msra.mxu0 0.0
      %3458 = vmatprep.subr.mxu0 0.0
      %3459 = vmatpush1.msra.mxu0 0.0
      %3460 = vmatprep.subr.mxu0 0.0
      %3461 = vmatpush1.msra.mxu0 0.0
      %3462 = vmatprep.subr.mxu0 0.0
      %3463 = vmatpush1.msra.mxu0 0.0
      %3464 = vmatprep.subr.mxu0 0.0
      %3465 = vmatpush1.msra.mxu0 0.0
      %3466 = vmatprep.subr.mxu0 0.0
      %3467 = vmatpush1.msra.mxu0 %v3438
      %3468 = vmatprep.subr.mxu0 0.0
      %3469 = vmatpush1.msra.mxu0 %v1700
      %3470 = vmatprep.subr.mxu0 0.0
      %3471 = vmatpush1.msra.mxu0 %v1699
      %3472 = vmatprep.subr.mxu0 0.0
      %3473 = vmatpush2.msra.mxu0 0.0
      %3474 = vmatprep.subr.mxu0 0.0
      %3475 = vmatpush2.msra.mxu0 0.0
      %3476 = vmatprep.subr.mxu0 0.0
      %3477 = vmatpush2.msra.mxu0 0.0
      %3478 = vmatprep.subr.mxu0 0.0
      %3479 = vmatpush2.msra.mxu0 0.0
      %3480 = vmatprep.subr.mxu0 0.0
      %3481 = vmatpush2.msra.mxu0 0.0
      %3482 = vmatprep.subr.mxu0 0.0
      %3483 = vmatpush2.msra.mxu0 0.0
      %3484 = vmatprep.subr.mxu0 0.0
      %3485 = vmatpush2.msra.mxu0 0.0
      %3486 = vmatprep.subr.mxu0 0.0
      %3487 = vmatpush2.msra.mxu0 0.0
      %3488 = vmatprep.subr.mxu0 0.0
      %3489 = vmatpush2.msra.mxu0 0.0
      %3490 = vmatprep.subr.mxu0 0.0
      %3491 = vmatpush2.msra.mxu0 0.0
      %3492 = vmatprep.subr.mxu0 0.0
      %3493 = vmatpush2.msra.mxu0 0.0
      %3494 = vmatprep.subr.mxu0 0.0
      %3495 = vmatpush2.msra.mxu0 0.0
      %3496 = vmatprep.subr.mxu0 0.0
      %3497 = vmatpush2.msra.mxu0 0.0
      %3498 = vmatprep.subr.mxu0 0.0
      %3499 = vmatpush2.msra.mxu0 0.0
      %3500 = vmatprep.subr.mxu0 0.0
      %3501 = vmatpush2.msra.mxu0 0.0
      %3502 = vmatprep.subr.mxu0 0.0
      %3503 = vmatpush2.msra.mxu0 0.0
      %3504 = vmatprep.mubr.f32.mxu0 0.0
      %3505 = vmatmul.mubr.f32.gmra.mxu0 %v3429
      %v3506 = vpop.f32.mrf.mxu0
      %v3507 = vadd.f32 0.0, %v3506
      %v3508 = vpop.f32.mrf.mxu0
      %3509 = vmatprep.mubr.f32.mxu0 0.0
      %3510 = vmatmul.mubr.f32.gmra.mxu0 %v3432
      %v3511 = vpop.f32.mrf.mxu0
      %v3512 = vadd.f32 0.0, %v3511
      %v3513 = vpop.f32.mrf.mxu0
      %3514 = vmatprep.mubr.f32.mxu0 0.0
      %3515 = vmatmul.mubr.f32.gmra.mxu0 %v3435
      %v3516 = vpop.f32.mrf.mxu0
      %v3517 = vadd.f32 0.0, %v3516
      %v3518 = vpop.f32.mrf.mxu0
      %3519 = vdwg.mxu0
      %v3521 = vsel %vm1705, %v2872, 0
      %v3524 = vsel %vm1705, %v2873, 0
      %v3527 = vsel %vm1705, %v2874, 0
      %v3530 = vsel %vm2884, %v1704, 0
      %3532 = vmatprep.subr.mxu0 0.0
      %3533 = vmatpush1.msra.mxu0 0.0
      %3534 = vmatprep.subr.mxu0 0.0
      %3535 = vmatpush1.msra.mxu0 0.0
      %3536 = vmatprep.subr.mxu0 0.0
      %3537 = vmatpush1.msra.mxu0 0.0
      %3538 = vmatprep.subr.mxu0 0.0
      %3539 = vmatpush1.msra.mxu0 0.0
      %3540 = vmatprep.subr.mxu0 0.0
      %3541 = vmatpush1.msra.mxu0 0.0
      %3542 = vmatprep.subr.mxu0 0.0
      %3543 = vmatpush1.msra.mxu0 0.0
      %3544 = vmatprep.subr.mxu0 0.0
      %3545 = vmatpush1.msra.mxu0 0.0
      %3546 = vmatprep.subr.mxu0 0.0
      %3547 = vmatpush1.msra.mxu0 0.0
      %3548 = vmatprep.subr.mxu0 0.0
      %3549 = vmatpush1.msra.mxu0 0.0
      %3550 = vmatprep.subr.mxu0 0.0
      %3551 = vmatpush1.msra.mxu0 0.0
      %3552 = vmatprep.subr.mxu0 0.0
      %3553 = vmatpush1.msra.mxu0 0.0
      %3554 = vmatprep.subr.mxu0 0.0
      %3555 = vmatpush1.msra.mxu0 0.0
      %3556 = vmatprep.subr.mxu0 0.0
      %3557 = vmatpush1.msra.mxu0 0.0
      %3558 = vmatprep.subr.mxu0 0.0
      %3559 = vmatpush1.msra.mxu0 %v3530
      %3560 = vmatprep.subr.mxu0 0.0
      %3561 = vmatpush1.msra.mxu0 %v1703
      %3562 = vmatprep.subr.mxu0 0.0
      %3563 = vmatpush1.msra.mxu0 %v1702
      %3564 = vmatprep.subr.mxu0 0.0
      %3565 = vmatpush2.msra.mxu0 0.0
      %3566 = vmatprep.subr.mxu0 0.0
      %3567 = vmatpush2.msra.mxu0 0.0
      %3568 = vmatprep.subr.mxu0 0.0
      %3569 = vmatpush2.msra.mxu0 0.0
      %3570 = vmatprep.subr.mxu0 0.0
      %3571 = vmatpush2.msra.mxu0 0.0
      %3572 = vmatprep.subr.mxu0 0.0
      %3573 = vmatpush2.msra.mxu0 0.0
      %3574 = vmatprep.subr.mxu0 0.0
      %3575 = vmatpush2.msra.mxu0 0.0
      %3576 = vmatprep.subr.mxu0 0.0
      %3577 = vmatpush2.msra.mxu0 0.0
      %3578 = vmatprep.subr.mxu0 0.0
      %3579 = vmatpush2.msra.mxu0 0.0
      %3580 = vmatprep.subr.mxu0 0.0
      %3581 = vmatpush2.msra.mxu0 0.0
      %3582 = vmatprep.subr.mxu0 0.0
      %3583 = vmatpush2.msra.mxu0 0.0
      %3584 = vmatprep.subr.mxu0 0.0
      %3585 = vmatpush2.msra.mxu0 0.0
      %3586 = vmatprep.subr.mxu0 0.0
      %3587 = vmatpush2.msra.mxu0 0.0
      %3588 = vmatprep.subr.mxu0 0.0
      %3589 = vmatpush2.msra.mxu0 0.0
      %3590 = vmatprep.subr.mxu0 0.0
      %3591 = vmatpush2.msra.mxu0 0.0
      %3592 = vmatprep.subr.mxu0 0.0
      %3593 = vmatpush2.msra.mxu0 0.0
      %3594 = vmatprep.subr.mxu0 0.0
      %3595 = vmatpush2.msra.mxu0 0.0
      %3596 = vmatprep.mubr.f32.mxu0 0.0
      %3597 = vmatmul.mubr.f32.gmra.mxu0 %v3521
      %v3598 = vpop.f32.mrf.mxu0
      %v3599 = vadd.f32 0.0, %v3598
      %v3600 = vpop.f32.mrf.mxu0
      %3601 = vmatprep.mubr.f32.mxu0 0.0
      %3602 = vmatmul.mubr.f32.gmra.mxu0 %v3524
      %v3603 = vpop.f32.mrf.mxu0
      %v3604 = vadd.f32 0.0, %v3603
      %v3605 = vpop.f32.mrf.mxu0
      %3606 = vmatprep.mubr.f32.mxu0 0.0
      %3607 = vmatmul.mubr.f32.gmra.mxu0 %v3527
      %v3608 = vpop.f32.mrf.mxu0
      %v3609 = vadd.f32 0.0, %v3608
      %v3610 = vpop.f32.mrf.mxu0
      %3611 = vdwg.mxu0
      %3612 = vst.msk [vmem:[%s372] sm:$0xff] %vm1705, %v2955
      %3613 = vst.msk [vmem:[%s372 + $0x8] sm:$0xff] %vm1705, %v2960
      %3614 = vst.msk [vmem:[%s372 + $0x10] sm:$0x3] %vm2520, %v2965
      %3615 = vst.msk [vmem:[%s372 + $0x18] sm:$0xff] %vm1705, %v3047
      %3616 = vst.msk [vmem:[%s372 + $0x20] sm:$0xff] %vm1705, %v3052
      %3617 = vst.msk [vmem:[%s372 + $0x28] sm:$0x3] %vm2520, %v3057
      %3618 = vst.msk [vmem:[%s372 + $0x30] sm:$0xff] %vm1705, %v3139
      %3619 = vst.msk [vmem:[%s372 + $0x38] sm:$0xff] %vm1705, %v3144
      %3620 = vst.msk [vmem:[%s372 + $0x40] sm:$0x3] %vm2520, %v3149
      %3621 = vst.msk [vmem:[%s372 + $0x48] sm:$0xff] %vm1705, %v3231
      %3622 = vst.msk [vmem:[%s372 + $0x50] sm:$0xff] %vm1705, %v3236
      %3623 = vst.msk [vmem:[%s372 + $0x58] sm:$0x3] %vm2520, %v3241
      %3624 = vst.msk [vmem:[%s372 + $0x60] sm:$0xff] %vm1705, %v3323
      %3625 = vst.msk [vmem:[%s372 + $0x68] sm:$0xff] %vm1705, %v3328
      %3626 = vst.msk [vmem:[%s372 + $0x70] sm:$0x3] %vm2520, %v3333
      %3627 = vst.msk [vmem:[%s372 + $0x78] sm:$0xff] %vm1705, %v3415
      %3628 = vst.msk [vmem:[%s372 + $0x80] sm:$0xff] %vm1705, %v3420
      %3629 = vst.msk [vmem:[%s372 + $0x88] sm:$0x3] %vm2520, %v3425
      %3630 = vst.msk [vmem:[%s372 + $0x90] sm:$0xff] %vm1705, %v3507
      %3631 = vst.msk [vmem:[%s372 + $0x98] sm:$0xff] %vm1705, %v3512
      %3632 = vst.msk [vmem:[%s372 + $0xa0] sm:$0x3] %vm2520, %v3517
      %3633 = vst.msk [vmem:[%s372 + $0xa8] sm:$0xff] %vm1705, %v3599
      %3634 = vst.msk [vmem:[%s372 + $0xb0] sm:$0xff] %vm1705, %v3604
      %3635 = vst.msk [vmem:[%s372 + $0xb8] sm:$0x3] %vm2520, %v3609
      %p3636 = scmp.lt.s32.totalorder %s20, 1
      %s3637 = scalar_select %p3636, %s20, 1
      %s3638 = smul.addr %s3637, 24
      %s3639 = smul.addr %s3638, 8
      %s3640 = scalar_lea.vmem %s9, %s3639
      // Predicated region
      $region57: #{model_forward.1} parent=55 // pred_check
        %p3641 = pneg %p242
      $region58: #{model_forward.1} parent=55 // pred_check_branch
        %3643 = sbr.rel (%p3641) target = $region60
      $region59: #{model_forward.1} parent=55 // pred_region
        _
      $region60: #{model_forward.1} parent=55 // pred_fallthru
        _
    $region56: #{model_forward.1} parent=5 // pred_fallthru
      _
    %p3644 = scmp.le.s32.totalorder 2, %s15
    // Predicated region
    $region61: #{model_forward.1} parent=5 // pred_check
      %p3645 = pneg %p3644
    $region62: #{model_forward.1} parent=5 // pred_check_branch
      %3647 = sbr.rel (%p3645) target = $region64
    $region63: #{model_forward.1} parent=5 // pred_region
      %s3648 = ssub.s32 %s15, 2
      // Predicated region
      $region65: #{model_forward.1} parent=63 // pred_check
        %p3649 = pneg %p248
      $region66: #{model_forward.1} parent=63 // pred_check_branch
        %3651 = sbr.rel (%p3649) target = $region68
      $region67: #{model_forward.1} parent=63 // pred_region
        %p3652 = scmp.lt.s32.totalorder %s21, 1
        %s3653 = scalar_select %p3652, %s21, 1
        %s3654 = smul.addr %s3653, 24
        %s3655 = smul.addr %s3654, 8
        %s3656 = scalar_lea.vmem %s9, %s3655
      $region68: #{model_forward.1} parent=63 // pred_fallthru
        _
    $region64: #{model_forward.1} parent=5 // pred_fallthru
      _
  $region6: #{model_forward.1} parent=0 // loop_footer
    %s19 = sadd.s32 1, %s15
  $region7: #{model_forward.1} parent=0 // loop_footer_branch
    %14 = sbr.rel target = $region3
  $region8: #{model_forward.1} parent=0 // loop_exit
    _

</llo_original>
